<compile_context>
chip_gen: v6e
topology: v6e:2x2x1
jax: 0.10.0
libtpu: 0.0.40
codegen_flags: <defaults>
</compile_context>

<pallas_src>
import functools
import math

import jax
import jax.numpy as jnp
from jax.experimental import pallas as pl
from jax.experimental.pallas import tpu as pltpu

# Scaled-down config (same structure as the PyTorch `config` dict).
CONFIG = {
    "n_embd": 128,
    "n_head": 4,
    "n_layer": 2,
    "dropout": 0.0,
    "vocab_size": 512,
    "ctx_len": 64,
    "bias": True,
}

_MASK_NEG = -1e30  # plain Python float: never captured as a JAX constant


# ----------------------------------------------------------------------------
# In-kernel helpers
# ----------------------------------------------------------------------------
def _ln_rows(x, w, b):
    """LayerNorm over the last dim; x:(R,C) f32, w/b:(1,C) f32."""
    mean = jnp.mean(x, axis=-1, keepdims=True)
    xc = x - mean
    var = jnp.mean(xc * xc, axis=-1, keepdims=True)
    return xc * jax.lax.rsqrt(var + 1e-5) * w + b


def _gelu_tanh(x):
    # Matches torch.nn.GELU(approximate='tanh').
    c = math.sqrt(2.0 / math.pi)
    return 0.5 * x * (1.0 + jnp.tanh(c * (x + 0.044715 * x * x * x)))


# ----------------------------------------------------------------------------
# Fused transformer-block kernel: one grid step handles one batch element.
# ----------------------------------------------------------------------------
def _block_kernel(
    x_ref,
    ln1w_ref, ln1b_ref,
    attnw_ref, attnb_ref,
    projw_ref, projb_ref,
    ln2w_ref, ln2b_ref,
    fcw_ref, fcb_ref,
    mprojw_ref, mprojb_ref,
    o_ref,
    *, n_head, scale,
):
    x = x_ref[0]                      # (T, C) f32 residual stream
    T, C = x.shape
    D = C // n_head

    # ---------------- attention branch ----------------
    h = _ln_rows(x, ln1w_ref[...], ln1b_ref[...])
    qkv = jnp.dot(h.astype(jnp.bfloat16), attnw_ref[...],
                  preferred_element_type=jnp.float32) + attnb_ref[...]  # (T, 3C)

    row = jax.lax.broadcasted_iota(jnp.int32, (T, T), 0)
    col = jax.lax.broadcasted_iota(jnp.int32, (T, T), 1)
    causal = col <= row

    # Per-head attention; fold the output projection in per head so every
    # matmul output is lane-dense (last dim = C).
    attn_out = jnp.zeros((T, C), jnp.float32)
    for hd in range(n_head):
        q = qkv[:, hd * D:(hd + 1) * D].astype(jnp.bfloat16)             # (T, D)
        k = qkv[:, C + hd * D:C + (hd + 1) * D].astype(jnp.bfloat16)     # (T, D)
        v = qkv[:, 2 * C + hd * D:2 * C + (hd + 1) * D].astype(jnp.bfloat16)

        s = jnp.einsum("qd,kd->qk", q, k,
                       preferred_element_type=jnp.float32) * scale       # (T, T)
        s = jnp.where(causal, s, _MASK_NEG)
        m = jnp.max(s, axis=-1, keepdims=True)
        p = jnp.exp(s - m)
        l = jnp.sum(p, axis=-1, keepdims=True)
        att = p * pl.reciprocal(l, approx=True)                          # (T, T)

        y_h = jnp.dot(att.astype(jnp.bfloat16), v,
                      preferred_element_type=jnp.float32)                # (T, D)
        # Partial output projection: concat(y_h) @ W  ==  sum_h y_h @ W[hD:(h+1)D]
        w_h = projw_ref[hd * D:(hd + 1) * D, :]                          # (D, C) bf16
        attn_out = attn_out + jnp.dot(y_h.astype(jnp.bfloat16), w_h,
                                      preferred_element_type=jnp.float32)

    x = x + attn_out + projb_ref[...]                                    # residual

    # ---------------- MLP branch ----------------
    h = _ln_rows(x, ln2w_ref[...], ln2b_ref[...])
    h = jnp.dot(h.astype(jnp.bfloat16), fcw_ref[...],
                preferred_element_type=jnp.float32) + fcb_ref[...]       # (T, 4C)
    h = _gelu_tanh(h)
    x = x + jnp.dot(h.astype(jnp.bfloat16), mprojw_ref[...],
                    preferred_element_type=jnp.float32) + mprojb_ref[...]

    o_ref[0] = x.astype(o_ref.dtype)


def block_forward(p, x, cfg):
    B, T, C = x.shape
    H = cfg["n_head"]
    kernel = functools.partial(_block_kernel, n_head=H,
                               scale=1.0 / math.sqrt(C // H))

    def wspec(shape):
        return pl.BlockSpec(shape, lambda b: (0, 0))

    xspec = pl.BlockSpec((1, T, C), lambda b: (b, 0, 0))

    return pl.pallas_call(
        kernel,
        out_shape=jax.ShapeDtypeStruct((B, T, C), jnp.float32),
        grid_spec=pltpu.PrefetchScalarGridSpec(
            num_scalar_prefetch=0,
            grid=(B,),
            in_specs=[
                xspec,
                wspec((1, C)), wspec((1, C)),            # ln1
                wspec((C, 3 * C)), wspec((1, 3 * C)),    # c_attn
                wspec((C, C)), wspec((1, C)),            # attn c_proj
                wspec((1, C)), wspec((1, C)),            # ln2
                wspec((C, 4 * C)), wspec((1, 4 * C)),    # c_fc
                wspec((4 * C, C)), wspec((1, C)),        # mlp c_proj
            ],
            out_specs=xspec,
        ),
        compiler_params=pltpu.CompilerParams(
            dimension_semantics=("parallel",),
        ),
    )(
        x,
        p["ln1_w"], p["ln1_b"],
        p["attn_w"], p["attn_b"],
        p["proj_w"], p["proj_b"],
        p["ln2_w"], p["ln2_b"],
        p["fc_w"], p["fc_b"],
        p["mproj_w"], p["mproj_b"],
    )


# ----------------------------------------------------------------------------
# Fused final-LayerNorm + weight-tied lm_head (last position only, no bias).
# ----------------------------------------------------------------------------
def _lnf_head_kernel(x_ref, w_ref, b_ref, wt_ref, o_ref):
    h = _ln_rows(x_ref[...], w_ref[...], b_ref[...])          # (B, C) f32
    o_ref[...] = jnp.dot(h.astype(wt_ref.dtype), wt_ref[...],
                         preferred_element_type=jnp.float32).astype(o_ref.dtype)


def _pick_n_tile(n):
    if n <= 512:
        return n
    for t in (512, 256, 128):
        if n % t == 0:
            return t
    return n


def lnf_lm_head(x_last, lnf_w, lnf_b, wte_t):
    B, C = x_last.shape
    _, V = wte_t.shape
    tv = _pick_n_tile(V)
    return pl.pallas_call(
        _lnf_head_kernel,
        out_shape=jax.ShapeDtypeStruct((B, V), jnp.float32),
        grid_spec=pltpu.PrefetchScalarGridSpec(
            num_scalar_prefetch=0,
            grid=(V // tv,),
            in_specs=[
                pl.BlockSpec((B, C), lambda j: (0, 0)),
                pl.BlockSpec((1, C), lambda j: (0, 0)),
                pl.BlockSpec((1, C), lambda j: (0, 0)),
                pl.BlockSpec((C, tv), lambda j: (0, j)),
            ],
            out_specs=pl.BlockSpec((B, tv), lambda j: (0, j)),
        ),
        compiler_params=pltpu.CompilerParams(
            dimension_semantics=("parallel",),
        ),
    )(x_last, lnf_w, lnf_b, wte_t)


# ----------------------------------------------------------------------------
# Parameter init (matches _init_weights: N(0, 0.02), zero bias, LN ones/zeros,
# c_proj std = 0.02/sqrt(2*n_layer), weight tying wte == lm_head).
# Matmul weights stored bf16 (MXU inputs); LN params / biases / embeddings f32.
# ----------------------------------------------------------------------------
def init_params(key, cfg):
    C = cfg["n_embd"]
    L = cfg["n_layer"]
    V = cfg["vocab_size"]
    ctx = cfg["ctx_len"]
    std = 0.02
    proj_std = 0.02 / math.sqrt(2 * L)
    wdt = jnp.bfloat16

    keys = jax.random.split(key, 2 + L)
    wte = (jax.random.normal(keys[0], (V, C)) * std).astype(jnp.float32)
    params = {
        "wte": wte,                                   # (V, C) f32 for embedding gather
        "wte_T": wte.T.astype(wdt),                   # (C, V) pre-transposed tied head
        "wpe": (jax.random.normal(keys[1], (ctx, C)) * std).astype(jnp.float32),
        "ln_f_w": jnp.ones((1, C), jnp.float32),
        "ln_f_b": jnp.zeros((1, C), jnp.float32),
        "blocks": [],
    }
    for l in range(L):
        bk = jax.random.split(keys[2 + l], 4)
        params["blocks"].append(
            {
                "ln1_w": jnp.ones((1, C), jnp.float32),
                "ln1_b": jnp.zeros((1, C), jnp.float32),
                "attn_w": (jax.random.normal(bk[0], (C, 3 * C)) * std).astype(wdt),
                "attn_b": jnp.zeros((1, 3 * C), jnp.float32),
                "proj_w": (jax.random.normal(bk[1], (C, C)) * proj_std).astype(wdt),
                "proj_b": jnp.zeros((1, C), jnp.float32),
                "ln2_w": jnp.ones((1, C), jnp.float32),
                "ln2_b": jnp.zeros((1, C), jnp.float32),
                "fc_w": (jax.random.normal(bk[2], (C, 4 * C)) * std).astype(wdt),
                "fc_b": jnp.zeros((1, 4 * C), jnp.float32),
                "mproj_w": (jax.random.normal(bk[3], (4 * C, C)) * proj_std).astype(wdt),
                "mproj_b": jnp.zeros((1, C), jnp.float32),
            }
        )
    return params


# ----------------------------------------------------------------------------
# Forward pass (mirrors Transformer.forward with targets=None)
# ----------------------------------------------------------------------------
def transformer_forward(params, idx, cfg):
    B, T = idx.shape
    assert T <= cfg["ctx_len"]

    # Embedding gather + positional add kept as plain-JAX glue.
    tok_emb = jnp.take(params["wte"], idx, axis=0)            # (B, T, C)
    pos_emb = params["wpe"][:T]                               # (T, C)
    x = tok_emb + pos_emb[None, :, :]                         # dropout p=0 -> identity

    for blk in params["blocks"]:
        x = block_forward(blk, x, cfg)

    # targets is None -> only the last position is normalized and projected.
    x_last = x[:, -1, :]                                      # (B, C)
    logits = lnf_lm_head(x_last, params["ln_f_w"], params["ln_f_b"],
                         params["wte_T"])                     # (B, V)
    logits = logits[:, None, :]                               # (B, 1, V)
    loss = None
    return logits, loss


# ----------------------------------------------------------------------------
# Demo
# ----------------------------------------------------------------------------
if __name__ == "__main__":
    cfg = CONFIG
    key = jax.random.PRNGKey(0)
    pkey, ikey = jax.random.split(key)

    params = init_params(pkey, cfg)

    B, T = 2, 32
    idx = jax.random.randint(ikey, (B, T), 0, cfg["vocab_size"], dtype=jnp.int32)

    fwd = jax.jit(lambda p, i: transformer_forward(p, i, cfg))
    logits, loss = fwd(params, idx)
    logits = jax.block_until_ready(logits)

    assert logits.shape == (B, 1, cfg["vocab_size"])
    assert logits.dtype == jnp.float32
    assert bool(jnp.all(jnp.isfinite(logits)))
    assert loss is None
    print("KERNEL_OK")
</pallas_src>

<mosaic_0001>
module attributes {stable_mosaic.version = 11 : i64} {
  func.func @_lnf_head_kernel(%arg0: i32, %arg1: memref<2x128xf32, #tpu.memory_space<vmem>>, %arg2: memref<1x128xf32, #tpu.memory_space<vmem>>, %arg3: memref<1x128xf32, #tpu.memory_space<vmem>>, %arg4: memref<128x512xbf16, #tpu.memory_space<vmem>>, %arg5: memref<2x512xf32, #tpu.memory_space<vmem>>) attributes {dimension_semantics = [#tpu.dimension_semantics<parallel>], iteration_bounds = array<i64: 1>, scalar_prefetch = 0 : i64, scratch_operands = 0 : i64, tpu.core_type = #tpu.core_type<tc>, window_params = [{pipeline_mode = #tpu.pipeline_mode<synchronous>, transform_indices = @transform_0, window_bounds = array<i64: 2, 128>}, {pipeline_mode = #tpu.pipeline_mode<synchronous>, transform_indices = @transform_1, window_bounds = array<i64: 1, 128>}, {pipeline_mode = #tpu.pipeline_mode<synchronous>, transform_indices = @transform_2, window_bounds = array<i64: 1, 128>}, {transform_indices = @transform_3, window_bounds = array<i64: 128, 512>}, {transform_indices = @transform_4, window_bounds = array<i64: 2, 512>}]} {
    %c0 = arith.constant 0 : index
    %c0_0 = arith.constant 0 : index
    %0 = vector.load %arg1[%c0, %c0_0] : memref<2x128xf32, #tpu.memory_space<vmem>>, vector<2x128xf32>
    %c0_1 = arith.constant 0 : index
    %c0_2 = arith.constant 0 : index
    %1 = vector.load %arg2[%c0_1, %c0_2] : memref<1x128xf32, #tpu.memory_space<vmem>>, vector<1x128xf32>
    %c0_3 = arith.constant 0 : index
    %c0_4 = arith.constant 0 : index
    %2 = vector.load %arg3[%c0_3, %c0_4] : memref<1x128xf32, #tpu.memory_space<vmem>>, vector<1x128xf32>
    %cst = arith.constant dense<0.000000e+00> : vector<2xf32>
    %3 = vector.multi_reduction <add>, %0, %cst [1] : vector<2x128xf32> to vector<2xf32>
    %4 = vector.shape_cast %3 : vector<2xf32> to vector<2x1xf32>
    %cst_5 = arith.constant 1.280000e+02 : f32
    %5 = vector.broadcast %cst_5 : f32 to vector<2x1xf32>
    %6 = arith.divf %4, %5 : vector<2x1xf32>
    %7 = vector.broadcast %6 : vector<2x1xf32> to vector<2x128xf32>
    %8 = arith.subf %0, %7 : vector<2x128xf32>
    %9 = arith.mulf %8, %8 : vector<2x128xf32>
    %cst_6 = arith.constant dense<0.000000e+00> : vector<2xf32>
    %10 = vector.multi_reduction <add>, %9, %cst_6 [1] : vector<2x128xf32> to vector<2xf32>
    %11 = vector.shape_cast %10 : vector<2xf32> to vector<2x1xf32>
    %cst_7 = arith.constant 1.280000e+02 : f32
    %12 = vector.broadcast %cst_7 : f32 to vector<2x1xf32>
    %13 = arith.divf %11, %12 : vector<2x1xf32>
    %cst_8 = arith.constant 9.99999974E-6 : f32
    %14 = vector.broadcast %cst_8 : f32 to vector<2x1xf32>
    %15 = arith.addf %13, %14 : vector<2x1xf32>
    %16 = math.rsqrt %15 : vector<2x1xf32>
    %17 = vector.broadcast %16 : vector<2x1xf32> to vector<2x128xf32>
    %18 = arith.mulf %8, %17 : vector<2x128xf32>
    %19 = vector.broadcast %1 : vector<1x128xf32> to vector<2x128xf32>
    %20 = arith.mulf %18, %19 : vector<2x128xf32>
    %21 = vector.broadcast %2 : vector<1x128xf32> to vector<2x128xf32>
    %22 = arith.addf %20, %21 : vector<2x128xf32>
    %23 = arith.truncf %22 : vector<2x128xf32> to vector<2x128xbf16>
    %c0_9 = arith.constant 0 : index
    %c0_10 = arith.constant 0 : index
    %24 = vector.load %arg4[%c0_9, %c0_10] : memref<128x512xbf16, #tpu.memory_space<vmem>>, vector<128x512xbf16>
    %cst_11 = arith.constant dense<0.000000e+00> : vector<2x512xf32>
    %25 = tpu.matmul %23, %24, %cst_11 {dimension_numbers = #tpu.dot_dimension_numbers<[1], [0], [0], [1], [0, 0, 1, 1], [], []>} : vector<2x128xbf16>, vector<128x512xbf16>, vector<2x512xf32> -> vector<2x512xf32>
    %c0_12 = arith.constant 0 : index
    %c0_13 = arith.constant 0 : index
    %26 = vector.load %arg5[%c0_12, %c0_13] : memref<2x512xf32, #tpu.memory_space<vmem>>, vector<2x512xf32>
    tpu.vector_store %arg5[%c0_12, %c0_13], %25 {strides = array<i32>} : memref<2x512xf32, #tpu.memory_space<vmem>>, vector<2x512xf32>,
    return
  }
  func.func @transform_0(%arg0: i32) -> (i32, i32) {
    %c0_i32 = arith.constant 0 : i32
    %c0_i32_0 = arith.constant 0 : i32
    %c0_i32_1 = arith.constant 0 : i32
    return %c0_i32, %c0_i32_0 : i32, i32
  }
  func.func @transform_1(%arg0: i32) -> (i32, i32) {
    %c0_i32 = arith.constant 0 : i32
    %c0_i32_0 = arith.constant 0 : i32
    %c0_i32_1 = arith.constant 0 : i32
    return %c0_i32, %c0_i32_0 : i32, i32
  }
  func.func @transform_2(%arg0: i32) -> (i32, i32) {
    %c0_i32 = arith.constant 0 : i32
    %c0_i32_0 = arith.constant 0 : i32
    %c0_i32_1 = arith.constant 0 : i32
    return %c0_i32, %c0_i32_0 : i32, i32
  }
  func.func @transform_3(%arg0: i32) -> (i32, i32) {
    %c0_i32 = arith.constant 0 : i32
    %c0_i32_0 = arith.constant 0 : i32
    return %c0_i32, %arg0 : i32, i32
  }
  func.func @transform_4(%arg0: i32) -> (i32, i32) {
    %c0_i32 = arith.constant 0 : i32
    %c0_i32_0 = arith.constant 0 : i32
    return %c0_i32, %arg0 : i32, i32
  }
}

module attributes {stable_mosaic.version = 11 : i64} {
  func.func @_block_kernel(%arg0: i32, %arg1: memref<1x32x128xf32, #tpu.memory_space<vmem>>, %arg2: memref<1x128xf32, #tpu.memory_space<vmem>>, %arg3: memref<1x128xf32, #tpu.memory_space<vmem>>, %arg4: memref<128x384xbf16, #tpu.memory_space<vmem>>, %arg5: memref<1x384xf32, #tpu.memory_space<vmem>>, %arg6: memref<128x128xbf16, #tpu.memory_space<vmem>>, %arg7: memref<1x128xf32, #tpu.memory_space<vmem>>, %arg8: memref<1x128xf32, #tpu.memory_space<vmem>>, %arg9: memref<1x128xf32, #tpu.memory_space<vmem>>, %arg10: memref<128x512xbf16, #tpu.memory_space<vmem>>, %arg11: memref<1x512xf32, #tpu.memory_space<vmem>>, %arg12: memref<512x128xbf16, #tpu.memory_space<vmem>>, %arg13: memref<1x128xf32, #tpu.memory_space<vmem>>, %arg14: memref<1x32x128xf32, #tpu.memory_space<vmem>>) attributes {dimension_semantics = [#tpu.dimension_semantics<parallel>], iteration_bounds = array<i64: 2>, scalar_prefetch = 0 : i64, scratch_operands = 0 : i64, tpu.core_type = #tpu.core_type<tc>, window_params = [{transform_indices = @transform_0, window_bounds = array<i64: 1, 32, 128>}, {pipeline_mode = #tpu.pipeline_mode<synchronous>, transform_indices = @transform_1, window_bounds = array<i64: 1, 128>}, {pipeline_mode = #tpu.pipeline_mode<synchronous>, transform_indices = @transform_2, window_bounds = array<i64: 1, 128>}, {pipeline_mode = #tpu.pipeline_mode<synchronous>, transform_indices = @transform_3, window_bounds = array<i64: 128, 384>}, {pipeline_mode = #tpu.pipeline_mode<synchronous>, transform_indices = @transform_4, window_bounds = array<i64: 1, 384>}, {pipeline_mode = #tpu.pipeline_mode<synchronous>, transform_indices = @transform_5, window_bounds = array<i64: 128, 128>}, {pipeline_mode = #tpu.pipeline_mode<synchronous>, transform_indices = @transform_6, window_bounds = array<i64: 1, 128>}, {pipeline_mode = #tpu.pipeline_mode<synchronous>, transform_indices = @transform_7, window_bounds = array<i64: 1, 128>}, {pipeline_mode = #tpu.pipeline_mode<synchronous>, transform_indices = @transform_8, window_bounds = array<i64: 1, 128>}, {pipeline_mode = #tpu.pipeline_mode<synchronous>, transform_indices = @transform_9, window_bounds = array<i64: 128, 512>}, {pipeline_mode = #tpu.pipeline_mode<synchronous>, transform_indices = @transform_10, window_bounds = array<i64: 1, 512>}, {pipeline_mode = #tpu.pipeline_mode<synchronous>, transform_indices = @transform_11, window_bounds = array<i64: 512, 128>}, {pipeline_mode = #tpu.pipeline_mode<synchronous>, transform_indices = @transform_12, window_bounds = array<i64: 1, 128>}, {transform_indices = @transform_13, window_bounds = array<i64: 1, 32, 128>}]} {
    %c0 = arith.constant 0 : index
    %c0_0 = arith.constant 0 : index
    %c0_1 = arith.constant 0 : index
    %0 = vector.load %arg1[%c0, %c0_0, %c0_1] : memref<1x32x128xf32, #tpu.memory_space<vmem>>, vector<1x32x128xf32>
    %1 = vector.shape_cast %0 : vector<1x32x128xf32> to vector<32x128xf32>
    %c0_2 = arith.constant 0 : index
    %c0_3 = arith.constant 0 : index
    %2 = vector.load %arg2[%c0_2, %c0_3] : memref<1x128xf32, #tpu.memory_space<vmem>>, vector<1x128xf32>
    %c0_4 = arith.constant 0 : index
    %c0_5 = arith.constant 0 : index
    %3 = vector.load %arg3[%c0_4, %c0_5] : memref<1x128xf32, #tpu.memory_space<vmem>>, vector<1x128xf32>
    %cst = arith.constant dense<0.000000e+00> : vector<32xf32>
    %4 = vector.multi_reduction <add>, %1, %cst [1] : vector<32x128xf32> to vector<32xf32>
    %5 = vector.shape_cast %4 : vector<32xf32> to vector<32x1xf32>
    %cst_6 = arith.constant 1.280000e+02 : f32
    %6 = vector.broadcast %cst_6 : f32 to vector<32x1xf32>
    %7 = arith.divf %5, %6 : vector<32x1xf32>
    %8 = vector.broadcast %7 : vector<32x1xf32> to vector<32x128xf32>
    %9 = arith.subf %1, %8 : vector<32x128xf32>
    %10 = arith.mulf %9, %9 : vector<32x128xf32>
    %cst_7 = arith.constant dense<0.000000e+00> : vector<32xf32>
    %11 = vector.multi_reduction <add>, %10, %cst_7 [1] : vector<32x128xf32> to vector<32xf32>
    %12 = vector.shape_cast %11 : vector<32xf32> to vector<32x1xf32>
    %cst_8 = arith.constant 1.280000e+02 : f32
    %13 = vector.broadcast %cst_8 : f32 to vector<32x1xf32>
    %14 = arith.divf %12, %13 : vector<32x1xf32>
    %cst_9 = arith.constant 9.99999974E-6 : f32
    %15 = vector.broadcast %cst_9 : f32 to vector<32x1xf32>
    %16 = arith.addf %14, %15 : vector<32x1xf32>
    %17 = math.rsqrt %16 : vector<32x1xf32>
    %18 = vector.broadcast %17 : vector<32x1xf32> to vector<32x128xf32>
    %19 = arith.mulf %9, %18 : vector<32x128xf32>
    %20 = vector.broadcast %2 : vector<1x128xf32> to vector<32x128xf32>
    %21 = arith.mulf %19, %20 : vector<32x128xf32>
    %22 = vector.broadcast %3 : vector<1x128xf32> to vector<32x128xf32>
    %23 = arith.addf %21, %22 : vector<32x128xf32>
    %24 = arith.truncf %23 : vector<32x128xf32> to vector<32x128xbf16>
    %c0_10 = arith.constant 0 : index
    %c0_11 = arith.constant 0 : index
    %25 = vector.load %arg4[%c0_10, %c0_11] : memref<128x384xbf16, #tpu.memory_space<vmem>>, vector<128x384xbf16>
    %cst_12 = arith.constant dense<0.000000e+00> : vector<32x384xf32>
    %26 = tpu.matmul %24, %25, %cst_12 {dimension_numbers = #tpu.dot_dimension_numbers<[1], [0], [0], [1], [0, 0, 1, 1], [], []>} : vector<32x128xbf16>, vector<128x384xbf16>, vector<32x384xf32> -> vector<32x384xf32>
    %c0_13 = arith.constant 0 : index
    %c0_14 = arith.constant 0 : index
    %27 = vector.load %arg5[%c0_13, %c0_14] : memref<1x384xf32, #tpu.memory_space<vmem>>, vector<1x384xf32>
    %28 = vector.broadcast %27 : vector<1x384xf32> to vector<32x384xf32>
    %29 = arith.addf %26, %28 : vector<32x384xf32>
    %30 = tpu.iota {dimensions = array<i32: 0>} : vector<32x32xi32>
    %31 = tpu.iota {dimensions = array<i32: 1>} : vector<32x32xi32>
    %32 = arith.cmpi sle, %31, %30 : vector<32x32xi32>
    %cst_15 = arith.constant 0.000000e+00 : f32
    %33 = vector.broadcast %cst_15 : f32 to vector<32x128xf32>
    %34 = vector.extract_strided_slice %29 {offsets = [0, 0], sizes = [32, 32], strides = [1, 1]} : vector<32x384xf32> to vector<32x32xf32>
    %35 = arith.truncf %34 : vector<32x32xf32> to vector<32x32xbf16>
    %36 = vector.extract_strided_slice %29 {offsets = [0, 128], sizes = [32, 32], strides = [1, 1]} : vector<32x384xf32> to vector<32x32xf32>
    %37 = arith.truncf %36 : vector<32x32xf32> to vector<32x32xbf16>
    %38 = vector.extract_strided_slice %29 {offsets = [0, 256], sizes = [32, 32], strides = [1, 1]} : vector<32x384xf32> to vector<32x32xf32>
    %39 = arith.truncf %38 : vector<32x32xf32> to vector<32x32xbf16>
    "tpu.trace_start"() <{level = 10 : i32, message = "qd,kd->qk"}> : () -> ()
    %cst_16 = arith.constant dense<0.000000e+00> : vector<32x32xf32>
    %40 = tpu.matmul %35, %37, %cst_16 {dimension_numbers = #tpu.dot_dimension_numbers<[1], [1], [0], [0], [0, 0, 1, 0], [], []>} : vector<32x32xbf16>, vector<32x32xbf16>, vector<32x32xf32> -> vector<32x32xf32>
    "tpu.trace_stop"() : () -> ()
    %cst_17 = arith.constant 0.176776692 : f32
    %41 = vector.broadcast %cst_17 : f32 to vector<32x32xf32>
    %42 = arith.mulf %40, %41 : vector<32x32xf32>
    %cst_18 = arith.constant -1.000000e+30 : f32
    %43 = vector.broadcast %cst_18 : f32 to vector<32x32xf32>
    %44 = arith.select %32, %42, %43 : vector<32x32xi1>, vector<32x32xf32>
    %cst_19 = arith.constant dense<0xFF800000> : vector<32xf32>
    %45 = vector.multi_reduction <maximumf>, %44, %cst_19 [1] : vector<32x32xf32> to vector<32xf32>
    %46 = vector.shape_cast %45 : vector<32xf32> to vector<32x1xf32>
    %47 = vector.broadcast %46 : vector<32x1xf32> to vector<32x32xf32>
    %48 = arith.subf %44, %47 : vector<32x32xf32>
    %49 = math.exp %48 : vector<32x32xf32>
    %cst_20 = arith.constant dense<0.000000e+00> : vector<32xf32>
    %50 = vector.multi_reduction <add>, %49, %cst_20 [1] : vector<32x32xf32> to vector<32xf32>
    %51 = vector.shape_cast %50 : vector<32xf32> to vector<32x1xf32>
    %52 = tpu.reciprocal %51 {approx = true} : vector<32x1xf32> -> vector<32x1xf32>
    %53 = vector.broadcast %52 : vector<32x1xf32> to vector<32x32xf32>
    %54 = arith.mulf %49, %53 : vector<32x32xf32>
    %55 = arith.truncf %54 : vector<32x32xf32> to vector<32x32xbf16>
    %cst_21 = arith.constant dense<0.000000e+00> : vector<32x32xf32>
    %56 = tpu.matmul %55, %39, %cst_21 {dimension_numbers = #tpu.dot_dimension_numbers<[1], [0], [0], [1], [0, 0, 1, 1], [], []>} : vector<32x32xbf16>, vector<32x32xbf16>, vector<32x32xf32> -> vector<32x32xf32>
    %c0_22 = arith.constant 0 : index
    %c0_23 = arith.constant 0 : index
    %57 = vector.load %arg6[%c0_22, %c0_23] : memref<128x128xbf16, #tpu.memory_space<vmem>>, vector<32x128xbf16>
    %58 = arith.truncf %56 : vector<32x32xf32> to vector<32x32xbf16>
    %cst_24 = arith.constant dense<0.000000e+00> : vector<32x128xf32>
    %59 = tpu.matmul %58, %57, %cst_24 {dimension_numbers = #tpu.dot_dimension_numbers<[1], [0], [0], [1], [0, 0, 1, 1], [], []>} : vector<32x32xbf16>, vector<32x128xbf16>, vector<32x128xf32> -> vector<32x128xf32>
    %60 = arith.addf %33, %59 : vector<32x128xf32>
    %61 = vector.extract_strided_slice %29 {offsets = [0, 32], sizes = [32, 32], strides = [1, 1]} : vector<32x384xf32> to vector<32x32xf32>
    %62 = arith.truncf %61 : vector<32x32xf32> to vector<32x32xbf16>
    %63 = vector.extract_strided_slice %29 {offsets = [0, 160], sizes = [32, 32], strides = [1, 1]} : vector<32x384xf32> to vector<32x32xf32>
    %64 = arith.truncf %63 : vector<32x32xf32> to vector<32x32xbf16>
    %65 = vector.extract_strided_slice %29 {offsets = [0, 288], sizes = [32, 32], strides = [1, 1]} : vector<32x384xf32> to vector<32x32xf32>
    %66 = arith.truncf %65 : vector<32x32xf32> to vector<32x32xbf16>
    "tpu.trace_start"() <{level = 10 : i32, message = "qd,kd->qk"}> : () -> ()
    %cst_25 = arith.constant dense<0.000000e+00> : vector<32x32xf32>
    %67 = tpu.matmul %62, %64, %cst_25 {dimension_numbers = #tpu.dot_dimension_numbers<[1], [1], [0], [0], [0, 0, 1, 0], [], []>} : vector<32x32xbf16>, vector<32x32xbf16>, vector<32x32xf32> -> vector<32x32xf32>
    "tpu.trace_stop"() : () -> ()
    %cst_26 = arith.constant 0.176776692 : f32
    %68 = vector.broadcast %cst_26 : f32 to vector<32x32xf32>
    %69 = arith.mulf %67, %68 : vector<32x32xf32>
    %cst_27 = arith.constant -1.000000e+30 : f32
    %70 = vector.broadcast %cst_27 : f32 to vector<32x32xf32>
    %71 = arith.select %32, %69, %70 : vector<32x32xi1>, vector<32x32xf32>
    %cst_28 = arith.constant dense<0xFF800000> : vector<32xf32>
    %72 = vector.multi_reduction <maximumf>, %71, %cst_28 [1] : vector<32x32xf32> to vector<32xf32>
    %73 = vector.shape_cast %72 : vector<32xf32> to vector<32x1xf32>
    %74 = vector.broadcast %73 : vector<32x1xf32> to vector<32x32xf32>
    %75 = arith.subf %71, %74 : vector<32x32xf32>
    %76 = math.exp %75 : vector<32x32xf32>
    %cst_29 = arith.constant dense<0.000000e+00> : vector<32xf32>
    %77 = vector.multi_reduction <add>, %76, %cst_29 [1] : vector<32x32xf32> to vector<32xf32>
    %78 = vector.shape_cast %77 : vector<32xf32> to vector<32x1xf32>
    %79 = tpu.reciprocal %78 {approx = true} : vector<32x1xf32> -> vector<32x1xf32>
    %80 = vector.broadcast %79 : vector<32x1xf32> to vector<32x32xf32>
    %81 = arith.mulf %76, %80 : vector<32x32xf32>
    %82 = arith.truncf %81 : vector<32x32xf32> to vector<32x32xbf16>
    %cst_30 = arith.constant dense<0.000000e+00> : vector<32x32xf32>
    %83 = tpu.matmul %82, %66, %cst_30 {dimension_numbers = #tpu.dot_dimension_numbers<[1], [0], [0], [1], [0, 0, 1, 1], [], []>} : vector<32x32xbf16>, vector<32x32xbf16>, vector<32x32xf32> -> vector<32x32xf32>
    %c32 = arith.constant 32 : index
    %c0_31 = arith.constant 0 : index
    %84 = vector.load %arg6[%c32, %c0_31] : memref<128x128xbf16, #tpu.memory_space<vmem>>, vector<32x128xbf16>
    %85 = arith.truncf %83 : vector<32x32xf32> to vector<32x32xbf16>
    %cst_32 = arith.constant dense<0.000000e+00> : vector<32x128xf32>
    %86 = tpu.matmul %85, %84, %cst_32 {dimension_numbers = #tpu.dot_dimension_numbers<[1], [0], [0], [1], [0, 0, 1, 1], [], []>} : vector<32x32xbf16>, vector<32x128xbf16>, vector<32x128xf32> -> vector<32x128xf32>
    %87 = arith.addf %60, %86 : vector<32x128xf32>
    %88 = vector.extract_strided_slice %29 {offsets = [0, 64], sizes = [32, 32], strides = [1, 1]} : vector<32x384xf32> to vector<32x32xf32>
    %89 = arith.truncf %88 : vector<32x32xf32> to vector<32x32xbf16>
    %90 = vector.extract_strided_slice %29 {offsets = [0, 192], sizes = [32, 32], strides = [1, 1]} : vector<32x384xf32> to vector<32x32xf32>
    %91 = arith.truncf %90 : vector<32x32xf32> to vector<32x32xbf16>
    %92 = vector.extract_strided_slice %29 {offsets = [0, 320], sizes = [32, 32], strides = [1, 1]} : vector<32x384xf32> to vector<32x32xf32>
    %93 = arith.truncf %92 : vector<32x32xf32> to vector<32x32xbf16>
    "tpu.trace_start"() <{level = 10 : i32, message = "qd,kd->qk"}> : () -> ()
    %cst_33 = arith.constant dense<0.000000e+00> : vector<32x32xf32>
    %94 = tpu.matmul %89, %91, %cst_33 {dimension_numbers = #tpu.dot_dimension_numbers<[1], [1], [0], [0], [0, 0, 1, 0], [], []>} : vector<32x32xbf16>, vector<32x32xbf16>, vector<32x32xf32> -> vector<32x32xf32>
    "tpu.trace_stop"() : () -> ()
    %cst_34 = arith.constant 0.176776692 : f32
    %95 = vector.broadcast %cst_34 : f32 to vector<32x32xf32>
    %96 = arith.mulf %94, %95 : vector<32x32xf32>
    %cst_35 = arith.constant -1.000000e+30 : f32
    %97 = vector.broadcast %cst_35 : f32 to vector<32x32xf32>
    %98 = arith.select %32, %96, %97 : vector<32x32xi1>, vector<32x32xf32>
    %cst_36 = arith.constant dense<0xFF800000> : vector<32xf32>
    %99 = vector.multi_reduction <maximumf>, %98, %cst_36 [1] : vector<32x32xf32> to vector<32xf32>
    %100 = vector.shape_cast %99 : vector<32xf32> to vector<32x1xf32>
    %101 = vector.broadcast %100 : vector<32x1xf32> to vector<32x32xf32>
    %102 = arith.subf %98, %101 : vector<32x32xf32>
    %103 = math.exp %102 : vector<32x32xf32>
    %cst_37 = arith.constant dense<0.000000e+00> : vector<32xf32>
    %104 = vector.multi_reduction <add>, %103, %cst_37 [1] : vector<32x32xf32> to vector<32xf32>
    %105 = vector.shape_cast %104 : vector<32xf32> to vector<32x1xf32>
    %106 = tpu.reciprocal %105 {approx = true} : vector<32x1xf32> -> vector<32x1xf32>
    %107 = vector.broadcast %106 : vector<32x1xf32> to vector<32x32xf32>
    %108 = arith.mulf %103, %107 : vector<32x32xf32>
    %109 = arith.truncf %108 : vector<32x32xf32> to vector<32x32xbf16>
    %cst_38 = arith.constant dense<0.000000e+00> : vector<32x32xf32>
    %110 = tpu.matmul %109, %93, %cst_38 {dimension_numbers = #tpu.dot_dimension_numbers<[1], [0], [0], [1], [0, 0, 1, 1], [], []>} : vector<32x32xbf16>, vector<32x32xbf16>, vector<32x32xf32> -> vector<32x32xf32>
    %c64 = arith.constant 64 : index
    %c0_39 = arith.constant 0 : index
    %111 = vector.load %arg6[%c64, %c0_39] : memref<128x128xbf16, #tpu.memory_space<vmem>>, vector<32x128xbf16>
    %112 = arith.truncf %110 : vector<32x32xf32> to vector<32x32xbf16>
    %cst_40 = arith.constant dense<0.000000e+00> : vector<32x128xf32>
    %113 = tpu.matmul %112, %111, %cst_40 {dimension_numbers = #tpu.dot_dimension_numbers<[1], [0], [0], [1], [0, 0, 1, 1], [], []>} : vector<32x32xbf16>, vector<32x128xbf16>, vector<32x128xf32> -> vector<32x128xf32>
    %114 = arith.addf %87, %113 : vector<32x128xf32>
    %115 = vector.extract_strided_slice %29 {offsets = [0, 96], sizes = [32, 32], strides = [1, 1]} : vector<32x384xf32> to vector<32x32xf32>
    %116 = arith.truncf %115 : vector<32x32xf32> to vector<32x32xbf16>
    %117 = vector.extract_strided_slice %29 {offsets = [0, 224], sizes = [32, 32], strides = [1, 1]} : vector<32x384xf32> to vector<32x32xf32>
    %118 = arith.truncf %117 : vector<32x32xf32> to vector<32x32xbf16>
    %119 = vector.extract_strided_slice %29 {offsets = [0, 352], sizes = [32, 32], strides = [1, 1]} : vector<32x384xf32> to vector<32x32xf32>
    %120 = arith.truncf %119 : vector<32x32xf32> to vector<32x32xbf16>
    "tpu.trace_start"() <{level = 10 : i32, message = "qd,kd->qk"}> : () -> ()
    %cst_41 = arith.constant dense<0.000000e+00> : vector<32x32xf32>
    %121 = tpu.matmul %116, %118, %cst_41 {dimension_numbers = #tpu.dot_dimension_numbers<[1], [1], [0], [0], [0, 0, 1, 0], [], []>} : vector<32x32xbf16>, vector<32x32xbf16>, vector<32x32xf32> -> vector<32x32xf32>
    "tpu.trace_stop"() : () -> ()
    %cst_42 = arith.constant 0.176776692 : f32
    %122 = vector.broadcast %cst_42 : f32 to vector<32x32xf32>
    %123 = arith.mulf %121, %122 : vector<32x32xf32>
    %cst_43 = arith.constant -1.000000e+30 : f32
    %124 = vector.broadcast %cst_43 : f32 to vector<32x32xf32>
    %125 = arith.select %32, %123, %124 : vector<32x32xi1>, vector<32x32xf32>
    %cst_44 = arith.constant dense<0xFF800000> : vector<32xf32>
    %126 = vector.multi_reduction <maximumf>, %125, %cst_44 [1] : vector<32x32xf32> to vector<32xf32>
    %127 = vector.shape_cast %126 : vector<32xf32> to vector<32x1xf32>
    %128 = vector.broadcast %127 : vector<32x1xf32> to vector<32x32xf32>
    %129 = arith.subf %125, %128 : vector<32x32xf32>
    %130 = math.exp %129 : vector<32x32xf32>
    %cst_45 = arith.constant dense<0.000000e+00> : vector<32xf32>
    %131 = vector.multi_reduction <add>, %130, %cst_45 [1] : vector<32x32xf32> to vector<32xf32>
    %132 = vector.shape_cast %131 : vector<32xf32> to vector<32x1xf32>
    %133 = tpu.reciprocal %132 {approx = true} : vector<32x1xf32> -> vector<32x1xf32>
    %134 = vector.broadcast %133 : vector<32x1xf32> to vector<32x32xf32>
    %135 = arith.mulf %130, %134 : vector<32x32xf32>
    %136 = arith.truncf %135 : vector<32x32xf32> to vector<32x32xbf16>
    %cst_46 = arith.constant dense<0.000000e+00> : vector<32x32xf32>
    %137 = tpu.matmul %136, %120, %cst_46 {dimension_numbers = #tpu.dot_dimension_numbers<[1], [0], [0], [1], [0, 0, 1, 1], [], []>} : vector<32x32xbf16>, vector<32x32xbf16>, vector<32x32xf32> -> vector<32x32xf32>
    %c96 = arith.constant 96 : index
    %c0_47 = arith.constant 0 : index
    %138 = vector.load %arg6[%c96, %c0_47] : memref<128x128xbf16, #tpu.memory_space<vmem>>, vector<32x128xbf16>
    %139 = arith.truncf %137 : vector<32x32xf32> to vector<32x32xbf16>
    %cst_48 = arith.constant dense<0.000000e+00> : vector<32x128xf32>
    %140 = tpu.matmul %139, %138, %cst_48 {dimension_numbers = #tpu.dot_dimension_numbers<[1], [0], [0], [1], [0, 0, 1, 1], [], []>} : vector<32x32xbf16>, vector<32x128xbf16>, vector<32x128xf32> -> vector<32x128xf32>
    %141 = arith.addf %114, %140 : vector<32x128xf32>
    %142 = arith.addf %1, %141 : vector<32x128xf32>
    %c0_49 = arith.constant 0 : index
    %c0_50 = arith.constant 0 : index
    %143 = vector.load %arg7[%c0_49, %c0_50] : memref<1x128xf32, #tpu.memory_space<vmem>>, vector<1x128xf32>
    %144 = vector.broadcast %143 : vector<1x128xf32> to vector<32x128xf32>
    %145 = arith.addf %142, %144 : vector<32x128xf32>
    %c0_51 = arith.constant 0 : index
    %c0_52 = arith.constant 0 : index
    %146 = vector.load %arg8[%c0_51, %c0_52] : memref<1x128xf32, #tpu.memory_space<vmem>>, vector<1x128xf32>
    %c0_53 = arith.constant 0 : index
    %c0_54 = arith.constant 0 : index
    %147 = vector.load %arg9[%c0_53, %c0_54] : memref<1x128xf32, #tpu.memory_space<vmem>>, vector<1x128xf32>
    %cst_55 = arith.constant dense<0.000000e+00> : vector<32xf32>
    %148 = vector.multi_reduction <add>, %145, %cst_55 [1] : vector<32x128xf32> to vector<32xf32>
    %149 = vector.shape_cast %148 : vector<32xf32> to vector<32x1xf32>
    %cst_56 = arith.constant 1.280000e+02 : f32
    %150 = vector.broadcast %cst_56 : f32 to vector<32x1xf32>
    %151 = arith.divf %149, %150 : vector<32x1xf32>
    %152 = vector.broadcast %151 : vector<32x1xf32> to vector<32x128xf32>
    %153 = arith.subf %145, %152 : vector<32x128xf32>
    %154 = arith.mulf %153, %153 : vector<32x128xf32>
    %cst_57 = arith.constant dense<0.000000e+00> : vector<32xf32>
    %155 = vector.multi_reduction <add>, %154, %cst_57 [1] : vector<32x128xf32> to vector<32xf32>
    %156 = vector.shape_cast %155 : vector<32xf32> to vector<32x1xf32>
    %cst_58 = arith.constant 1.280000e+02 : f32
    %157 = vector.broadcast %cst_58 : f32 to vector<32x1xf32>
    %158 = arith.divf %156, %157 : vector<32x1xf32>
    %cst_59 = arith.constant 9.99999974E-6 : f32
    %159 = vector.broadcast %cst_59 : f32 to vector<32x1xf32>
    %160 = arith.addf %158, %159 : vector<32x1xf32>
    %161 = math.rsqrt %160 : vector<32x1xf32>
    %162 = vector.broadcast %161 : vector<32x1xf32> to vector<32x128xf32>
    %163 = arith.mulf %153, %162 : vector<32x128xf32>
    %164 = vector.broadcast %146 : vector<1x128xf32> to vector<32x128xf32>
    %165 = arith.mulf %163, %164 : vector<32x128xf32>
    %166 = vector.broadcast %147 : vector<1x128xf32> to vector<32x128xf32>
    %167 = arith.addf %165, %166 : vector<32x128xf32>
    %168 = arith.truncf %167 : vector<32x128xf32> to vector<32x128xbf16>
    %c0_60 = arith.constant 0 : index
    %c0_61 = arith.constant 0 : index
    %169 = vector.load %arg10[%c0_60, %c0_61] : memref<128x512xbf16, #tpu.memory_space<vmem>>, vector<128x512xbf16>
    %cst_62 = arith.constant dense<0.000000e+00> : vector<32x512xf32>
    %170 = tpu.matmul %168, %169, %cst_62 {dimension_numbers = #tpu.dot_dimension_numbers<[1], [0], [0], [1], [0, 0, 1, 1], [], []>} : vector<32x128xbf16>, vector<128x512xbf16>, vector<32x512xf32> -> vector<32x512xf32>
    %c0_63 = arith.constant 0 : index
    %c0_64 = arith.constant 0 : index
    %171 = vector.load %arg11[%c0_63, %c0_64] : memref<1x512xf32, #tpu.memory_space<vmem>>, vector<1x512xf32>
    %172 = vector.broadcast %171 : vector<1x512xf32> to vector<32x512xf32>
    %173 = arith.addf %170, %172 : vector<32x512xf32>
    %cst_65 = arith.constant 5.000000e-01 : f32
    %174 = vector.broadcast %cst_65 : f32 to vector<32x512xf32>
    %175 = arith.mulf %174, %173 : vector<32x512xf32>
    %cst_66 = arith.constant 4.471500e-02 : f32
    %176 = vector.broadcast %cst_66 : f32 to vector<32x512xf32>
    %177 = arith.mulf %176, %173 : vector<32x512xf32>
    %178 = arith.mulf %177, %173 : vector<32x512xf32>
    %179 = arith.mulf %178, %173 : vector<32x512xf32>
    %180 = arith.addf %173, %179 : vector<32x512xf32>
    %cst_67 = arith.constant 0.797884583 : f32
    %181 = vector.broadcast %cst_67 : f32 to vector<32x512xf32>
    %182 = arith.mulf %181, %180 : vector<32x512xf32>
    %183 = math.tanh %182 : vector<32x512xf32>
    %cst_68 = arith.constant 1.000000e+00 : f32
    %184 = vector.broadcast %cst_68 : f32 to vector<32x512xf32>
    %185 = arith.addf %184, %183 : vector<32x512xf32>
    %186 = arith.mulf %175, %185 : vector<32x512xf32>
    %187 = arith.truncf %186 : vector<32x512xf32> to vector<32x512xbf16>
    %c0_69 = arith.constant 0 : index
    %c0_70 = arith.constant 0 : index
    %188 = vector.load %arg12[%c0_69, %c0_70] : memref<512x128xbf16, #tpu.memory_space<vmem>>, vector<512x128xbf16>
    %cst_71 = arith.constant dense<0.000000e+00> : vector<32x128xf32>
    %189 = tpu.matmul %187, %188, %cst_71 {dimension_numbers = #tpu.dot_dimension_numbers<[1], [0], [0], [1], [0, 0, 1, 1], [], []>} : vector<32x512xbf16>, vector<512x128xbf16>, vector<32x128xf32> -> vector<32x128xf32>
    %190 = arith.addf %145, %189 : vector<32x128xf32>
    %c0_72 = arith.constant 0 : index
    %c0_73 = arith.constant 0 : index
    %191 = vector.load %arg13[%c0_72, %c0_73] : memref<1x128xf32, #tpu.memory_space<vmem>>, vector<1x128xf32>
    %192 = vector.broadcast %191 : vector<1x128xf32> to vector<32x128xf32>
    %193 = arith.addf %190, %192 : vector<32x128xf32>
    %c0_74 = arith.constant 0 : index
    %c0_75 = arith.constant 0 : index
    %c0_76 = arith.constant 0 : index
    %194 = vector.load %arg14[%c0_74, %c0_75, %c0_76] : memref<1x32x128xf32, #tpu.memory_space<vmem>>, vector<1x32x128xf32>
    %195 = vector.shape_cast %194 : vector<1x32x128xf32> to vector<32x128xf32>
    %196 = vector.shape_cast %193 : vector<32x128xf32> to vector<1x32x128xf32>
    tpu.vector_store %arg14[%c0_74, %c0_75, %c0_76], %196 {strides = array<i32>} : memref<1x32x128xf32, #tpu.memory_space<vmem>>, vector<1x32x128xf32>,
    return
  }
  func.func @transform_0(%arg0: i32) -> (i32, i32, i32) {
    %c0_i32 = arith.constant 0 : i32
    %c0_i32_0 = arith.constant 0 : i32
    %c0_i32_1 = arith.constant 0 : i32
    return %arg0, %c0_i32, %c0_i32_0 : i32, i32, i32
  }
  func.func @transform_1(%arg0: i32) -> (i32, i32) {
    %c0_i32 = arith.constant 0 : i32
    %c0_i32_0 = arith.constant 0 : i32
    %c0_i32_1 = arith.constant 0 : i32
    return %c0_i32, %c0_i32_0 : i32, i32
  }
  func.func @transform_2(%arg0: i32) -> (i32, i32) {
    %c0_i32 = arith.constant 0 : i32
    %c0_i32_0 = arith.constant 0 : i32
    %c0_i32_1 = arith.constant 0 : i32
    return %c0_i32, %c0_i32_0 : i32, i32
  }
  func.func @transform_3(%arg0: i32) -> (i32, i32) {
    %c0_i32 = arith.constant 0 : i32
    %c0_i32_0 = arith.constant 0 : i32
    %c0_i32_1 = arith.constant 0 : i32
    return %c0_i32, %c0_i32_0 : i32, i32
  }
  func.func @transform_4(%arg0: i32) -> (i32, i32) {
    %c0_i32 = arith.constant 0 : i32
    %c0_i32_0 = arith.constant 0 : i32
    %c0_i32_1 = arith.constant 0 : i32
    return %c0_i32, %c0_i32_0 : i32, i32
  }
  func.func @transform_5(%arg0: i32) -> (i32, i32) {
    %c0_i32 = arith.constant 0 : i32
    %c0_i32_0 = arith.constant 0 : i32
    %c0_i32_1 = arith.constant 0 : i32
    return %c0_i32, %c0_i32_0 : i32, i32
  }
  func.func @transform_6(%arg0: i32) -> (i32, i32) {
    %c0_i32 = arith.constant 0 : i32
    %c0_i32_0 = arith.constant 0 : i32
    %c0_i32_1 = arith.constant 0 : i32
    return %c0_i32, %c0_i32_0 : i32, i32
  }
  func.func @transform_7(%arg0: i32) -> (i32, i32) {
    %c0_i32 = arith.constant 0 : i32
    %c0_i32_0 = arith.constant 0 : i32
    %c0_i32_1 = arith.constant 0 : i32
    return %c0_i32, %c0_i32_0 : i32, i32
  }
  func.func @transform_8(%arg0: i32) -> (i32, i32) {
    %c0_i32 = arith.constant 0 : i32
    %c0_i32_0 = arith.constant 0 : i32
    %c0_i32_1 = arith.constant 0 : i32
    return %c0_i32, %c0_i32_0 : i32, i32
  }
  func.func @transform_9(%arg0: i32) -> (i32, i32) {
    %c0_i32 = arith.constant 0 : i32
    %c0_i32_0 = arith.constant 0 : i32
    %c0_i32_1 = arith.constant 0 : i32
    return %c0_i32, %c0_i32_0 : i32, i32
  }
  func.func @transform_10(%arg0: i32) -> (i32, i32) {
    %c0_i32 = arith.constant 0 : i32
    %c0_i32_0 = arith.constant 0 : i32
    %c0_i32_1 = arith.constant 0 : i32
    return %c0_i32, %c0_i32_0 : i32, i32
  }
  func.func @transform_11(%arg0: i32) -> (i32, i32) {
    %c0_i32 = arith.constant 0 : i32
    %c0_i32_0 = arith.constant 0 : i32
    %c0_i32_1 = arith.constant 0 : i32
    return %c0_i32, %c0_i32_0 : i32, i32
  }
  func.func @transform_12(%arg0: i32) -> (i32, i32) {
    %c0_i32 = arith.constant 0 : i32
    %c0_i32_0 = arith.constant 0 : i32
    %c0_i32_1 = arith.constant 0 : i32
    return %c0_i32, %c0_i32_0 : i32, i32
  }
  func.func @transform_13(%arg0: i32) -> (i32, i32, i32) {
    %c0_i32 = arith.constant 0 : i32
    %c0_i32_0 = arith.constant 0 : i32
    %c0_i32_1 = arith.constant 0 : i32
    return %arg0, %c0_i32, %c0_i32_0 : i32, i32, i32
  }
}

</mosaic_0001>

<llo_original>
// kernel: _lambda_.5
$region0: #{_lambda_.5}
  #allocation0 [shape = 'u32[]', space=smem, size = 0x4, offset = 0x4, fixed_abs, tag = 'smem constant byte address 0x4 - core index']
  #allocation1 [shape = 'u32[144,128]{1,0:T(1,128)}', space=vmem, size = 0x12000, scoped, tag = 'internal scratch']
  %s0 = inlined_call_operand.vmem [shape: f32[2,128], index: 0, kind: input, shape index: {}]
  %s1 = inlined_call_operand.vmem [shape: f32[1,128], index: 1, kind: input, shape index: {}]
  %s2 = inlined_call_operand.vmem [shape: f32[1,128], index: 2, kind: input, shape index: {}]
  %s3 = inlined_call_operand.vmem [shape: bf16[128,512], index: 3, kind: input, shape index: {}]
  %s4 = inlined_call_operand.vmem [shape: f32[2,512], index: 4, kind: output, shape index: {}]
  %s5 = sld [smem:[#allocation0]]
  $region26: #{_lambda_.5} parent=0
    _
  %s7 = ssub.s32 1, %s5
  %s8 = scalar_select 0, %s7, %s5
  // Predicated region
  $region2: #{_lambda_.5} parent=0 // pred_check
    _
  $region3: #{_lambda_.5} parent=0 // pred_check_branch
    %10 = sbr.rel (0) target = $region5
  $region4: #{_lambda_.5} parent=0 // pred_region
    _
  $region5: #{_lambda_.5} parent=0 // pred_fallthru
    _
  // Predicated region
  $region6: #{_lambda_.5} parent=0 // pred_check
    _
  $region7: #{_lambda_.5} parent=0 // pred_check_branch
    %12 = sbr.rel (0) target = $region9
  $region8: #{_lambda_.5} parent=0 // pred_region
    _
  $region9: #{_lambda_.5} parent=0 // pred_fallthru
    _
  // Predicated region
  $region10: #{_lambda_.5} parent=0 // pred_check
    _
  $region11: #{_lambda_.5} parent=0 // pred_check_branch
    %14 = sbr.rel (0) target = $region13
  $region12: #{_lambda_.5} parent=0 // pred_region
    _
  $region13: #{_lambda_.5} parent=0 // pred_fallthru
    _
  // Predicated region
  $region14: #{_lambda_.5} parent=0 // pred_check
    _
  $region15: #{_lambda_.5} parent=0 // pred_check_branch
    %16 = sbr.rel (0) target = $region17
  $region16: #{_lambda_.5} parent=0 // pred_region
    _
  $region17: #{_lambda_.5} parent=0 // pred_fallthru
    _
  %v18 = vld [vmem:[%s0] sm:$0x3]
  %v19 = vld [vmem:[%s1] sm:$0x1]
  %v20 = vld [vmem:[%s2] sm:$0x1]
  %vm21 = vcmask 1041408
  %v22 = vsel %vm21, %v18, 0.0
  %23 = vadd.xlane.f32.xlu0 %v22
  %v24 = vpop.xlane.xlu0 %23
  %v25 = vrcp.pop 128.0
  %v26 = vmul.f32 %v24, %v25
  %v27 = vsub.f32 %v18, %v26
  %v28 = vmul.f32 %v27, %v27
  %v29 = vsel %vm21, %v28, 0.0
  %30 = vadd.xlane.f32.xlu0 %v29
  %v31 = vpop.xlane.xlu0 %30
  %v32 = vmul.f32 %v31, %v25
  %v33 = vadd.f32 %v32, 1e-05
  %v34 = vrsqrt.pop %v33
  %v35 = vmul.f32 %v27, %v34
  %v37 = vlaneseq
  %v38 = vshrl.u32 %v37, 7
  %v39 = vsub.s32 0, %v38
  %v40 = vrot.slane %v19, %v39
  %v42 = vmul.f32 %v35, %v40
  %v44 = vlaneseq
  %v45 = vshrl.u32 %v44, 7
  %v46 = vsub.s32 0, %v45
  %v47 = vrot.slane %v20, %v46
  %v49 = vadd.f32 %v42, %v47
  %v50 = vpack.c.bf16 %v49, %v49
  %v51 = vld [vmem:[%s3] sm:$0xff]
  %v52 = vld [vmem:[%s3 + $0x8] sm:$0xff]
  %v53 = vld [vmem:[%s3 + $0x10] sm:$0xff]
  %v54 = vld [vmem:[%s3 + $0x18] sm:$0xff]
  %v55 = vld [vmem:[%s3 + $0x20] sm:$0xff]
  %v56 = vld [vmem:[%s3 + $0x28] sm:$0xff]
  %v57 = vld [vmem:[%s3 + $0x30] sm:$0xff]
  %v58 = vld [vmem:[%s3 + $0x38] sm:$0xff]
  %v59 = vld [vmem:[%s3 + $0x40] sm:$0xff]
  %v60 = vld [vmem:[%s3 + $0x48] sm:$0xff]
  %v61 = vld [vmem:[%s3 + $0x50] sm:$0xff]
  %v62 = vld [vmem:[%s3 + $0x58] sm:$0xff]
  %v63 = vld [vmem:[%s3 + $0x60] sm:$0xff]
  %v64 = vld [vmem:[%s3 + $0x68] sm:$0xff]
  %v65 = vld [vmem:[%s3 + $0x70] sm:$0xff]
  %v66 = vld [vmem:[%s3 + $0x78] sm:$0xff]
  %v67 = vld [vmem:[%s3 + $0x80] sm:$0xff]
  %v68 = vld [vmem:[%s3 + $0x88] sm:$0xff]
  %v69 = vld [vmem:[%s3 + $0x90] sm:$0xff]
  %v70 = vld [vmem:[%s3 + $0x98] sm:$0xff]
  %v71 = vld [vmem:[%s3 + $0xa0] sm:$0xff]
  %v72 = vld [vmem:[%s3 + $0xa8] sm:$0xff]
  %v73 = vld [vmem:[%s3 + $0xb0] sm:$0xff]
  %v74 = vld [vmem:[%s3 + $0xb8] sm:$0xff]
  %v75 = vld [vmem:[%s3 + $0xc0] sm:$0xff]
  %v76 = vld [vmem:[%s3 + $0xc8] sm:$0xff]
  %v77 = vld [vmem:[%s3 + $0xd0] sm:$0xff]
  %v78 = vld [vmem:[%s3 + $0xd8] sm:$0xff]
  %v79 = vld [vmem:[%s3 + $0xe0] sm:$0xff]
  %v80 = vld [vmem:[%s3 + $0xe8] sm:$0xff]
  %v81 = vld [vmem:[%s3 + $0xf0] sm:$0xff]
  %v82 = vld [vmem:[%s3 + $0xf8] sm:$0xff]
  %v115 = vunpack.c.l.b16 %v51
  %v116 = vunpack.c.h.b16 %v51
  %v117 = vunpack.c.l.b16 %v52
  %v118 = vunpack.c.h.b16 %v52
  %v119 = vunpack.c.l.b16 %v53
  %v120 = vunpack.c.h.b16 %v53
  %v121 = vunpack.c.l.b16 %v54
  %v122 = vunpack.c.h.b16 %v54
  %v123 = vunpack.c.l.b16 %v55
  %v124 = vunpack.c.h.b16 %v55
  %v125 = vunpack.c.l.b16 %v56
  %v126 = vunpack.c.h.b16 %v56
  %v127 = vunpack.c.l.b16 %v57
  %v128 = vunpack.c.h.b16 %v57
  %v129 = vunpack.c.l.b16 %v58
  %v130 = vunpack.c.h.b16 %v58
  %v131 = vunpack.c.l.b16 %v59
  %v132 = vunpack.c.h.b16 %v59
  %v133 = vunpack.c.l.b16 %v60
  %v134 = vunpack.c.h.b16 %v60
  %v135 = vunpack.c.l.b16 %v61
  %v136 = vunpack.c.h.b16 %v61
  %v137 = vunpack.c.l.b16 %v62
  %v138 = vunpack.c.h.b16 %v62
  %v139 = vunpack.c.l.b16 %v63
  %v140 = vunpack.c.h.b16 %v63
  %v141 = vunpack.c.l.b16 %v64
  %v142 = vunpack.c.h.b16 %v64
  %v143 = vunpack.c.l.b16 %v65
  %v144 = vunpack.c.h.b16 %v65
  %v145 = vunpack.c.l.b16 %v66
  %v146 = vunpack.c.h.b16 %v66
  %v147 = vunpack.c.l.b16 %v67
  %v148 = vunpack.c.h.b16 %v67
  %v149 = vunpack.c.l.b16 %v68
  %v150 = vunpack.c.h.b16 %v68
  %v151 = vunpack.c.l.b16 %v69
  %v152 = vunpack.c.h.b16 %v69
  %v153 = vunpack.c.l.b16 %v70
  %v154 = vunpack.c.h.b16 %v70
  %v155 = vunpack.c.l.b16 %v71
  %v156 = vunpack.c.h.b16 %v71
  %v157 = vunpack.c.l.b16 %v72
  %v158 = vunpack.c.h.b16 %v72
  %v159 = vunpack.c.l.b16 %v73
  %v160 = vunpack.c.h.b16 %v73
  %v161 = vunpack.c.l.b16 %v74
  %v162 = vunpack.c.h.b16 %v74
  %v163 = vunpack.c.l.b16 %v75
  %v164 = vunpack.c.h.b16 %v75
  %v165 = vunpack.c.l.b16 %v76
  %v166 = vunpack.c.h.b16 %v76
  %v167 = vunpack.c.l.b16 %v77
  %v168 = vunpack.c.h.b16 %v77
  %v169 = vunpack.c.l.b16 %v78
  %v170 = vunpack.c.h.b16 %v78
  %v171 = vunpack.c.l.b16 %v79
  %v172 = vunpack.c.h.b16 %v79
  %v173 = vunpack.c.l.b16 %v80
  %v174 = vunpack.c.h.b16 %v80
  %v175 = vunpack.c.l.b16 %v81
  %v176 = vunpack.c.h.b16 %v81
  %v177 = vunpack.c.l.b16 %v82
  %v178 = vunpack.c.h.b16 %v82
  %v179 = vpack.c.b16 %v119, %v115
  %v180 = vpack.c.b16 %v120, %v116
  %v181 = vpack.c.b16 %v121, %v117
  %v182 = vpack.c.b16 %v122, %v118
  %v183 = vpack.c.b16 %v127, %v123
  %v184 = vpack.c.b16 %v128, %v124
  %v185 = vpack.c.b16 %v129, %v125
  %v186 = vpack.c.b16 %v130, %v126
  %v187 = vpack.c.b16 %v135, %v131
  %v188 = vpack.c.b16 %v136, %v132
  %v189 = vpack.c.b16 %v137, %v133
  %v190 = vpack.c.b16 %v138, %v134
  %v191 = vpack.c.b16 %v143, %v139
  %v192 = vpack.c.b16 %v144, %v140
  %v193 = vpack.c.b16 %v145, %v141
  %v194 = vpack.c.b16 %v146, %v142
  %v195 = vpack.c.b16 %v151, %v147
  %v196 = vpack.c.b16 %v152, %v148
  %v197 = vpack.c.b16 %v153, %v149
  %v198 = vpack.c.b16 %v154, %v150
  %v199 = vpack.c.b16 %v159, %v155
  %v200 = vpack.c.b16 %v160, %v156
  %v201 = vpack.c.b16 %v161, %v157
  %v202 = vpack.c.b16 %v162, %v158
  %v203 = vpack.c.b16 %v167, %v163
  %v204 = vpack.c.b16 %v168, %v164
  %v205 = vpack.c.b16 %v169, %v165
  %v206 = vpack.c.b16 %v170, %v166
  %v207 = vpack.c.b16 %v175, %v171
  %v208 = vpack.c.b16 %v176, %v172
  %v209 = vpack.c.b16 %v177, %v173
  %v210 = vpack.c.b16 %v178, %v174
  %243 = vmatprep.subr.bf16.mxu0 %v208
  %244 = vmatpush1.bf16.msra.mxu0 %v207
  %245 = vmatprep.subr.bf16.mxu0 %v204
  %246 = vmatpush1.bf16.msra.mxu0 %v203
  %247 = vmatprep.subr.bf16.mxu0 %v200
  %248 = vmatpush1.bf16.msra.mxu0 %v199
  %249 = vmatprep.subr.bf16.mxu0 %v196
  %250 = vmatpush1.bf16.msra.mxu0 %v195
  %251 = vmatprep.subr.bf16.mxu0 %v192
  %252 = vmatpush1.bf16.msra.mxu0 %v191
  %253 = vmatprep.subr.bf16.mxu0 %v188
  %254 = vmatpush1.bf16.msra.mxu0 %v187
  %255 = vmatprep.subr.bf16.mxu0 %v184
  %256 = vmatpush1.bf16.msra.mxu0 %v183
  %257 = vmatprep.subr.bf16.mxu0 %v180
  %258 = vmatpush1.bf16.msra.mxu0 %v179
  %259 = vmatprep.subr.bf16.mxu0 0
  %260 = vmatpush2.bf16.msra.mxu0 0
  %261 = vmatprep.subr.bf16.mxu0 0
  %262 = vmatpush2.bf16.msra.mxu0 0
  %263 = vmatprep.subr.bf16.mxu0 0
  %264 = vmatpush2.bf16.msra.mxu0 0
  %265 = vmatprep.subr.bf16.mxu0 0
  %266 = vmatpush2.bf16.msra.mxu0 0
  %267 = vmatprep.subr.bf16.mxu0 0
  %268 = vmatpush2.bf16.msra.mxu0 0
  %269 = vmatprep.subr.bf16.mxu0 0
  %270 = vmatpush2.bf16.msra.mxu0 0
  %271 = vmatprep.subr.bf16.mxu0 0
  %272 = vmatpush2.bf16.msra.mxu0 0
  %273 = vmatprep.subr.bf16.mxu0 0
  %274 = vmatpush2.bf16.msra.mxu0 0
  %275 = vmatprep.mubr.bf16.mxu0 0
  %276 = vmatmul.mubr.bf16.gmra.mxu0 %v50
  %v277 = vpop.f32.mrf.mxu0
  %v278 = vadd.f32 0.0, %v277
  %v279 = vpop.f32.mrf.mxu0
  %v280 = vadd.f32 0.0, %v279
  %v281 = vpop.f32.mrf.mxu0
  %v282 = vpop.f32.mrf.mxu0
  %283 = vdwg.mxu0
  %284 = vmatprep.subr.bf16.mxu0 %v210
  %285 = vmatpush1.bf16.msra.mxu0 %v209
  %286 = vmatprep.subr.bf16.mxu0 %v206
  %287 = vmatpush1.bf16.msra.mxu0 %v205
  %288 = vmatprep.subr.bf16.mxu0 %v202
  %289 = vmatpush1.bf16.msra.mxu0 %v201
  %290 = vmatprep.subr.bf16.mxu0 %v198
  %291 = vmatpush1.bf16.msra.mxu0 %v197
  %292 = vmatprep.subr.bf16.mxu0 %v194
  %293 = vmatpush1.bf16.msra.mxu0 %v193
  %294 = vmatprep.subr.bf16.mxu0 %v190
  %295 = vmatpush1.bf16.msra.mxu0 %v189
  %296 = vmatprep.subr.bf16.mxu0 %v186
  %297 = vmatpush1.bf16.msra.mxu0 %v185
  %298 = vmatprep.subr.bf16.mxu0 %v182
  %299 = vmatpush1.bf16.msra.mxu0 %v181
  %300 = vmatprep.subr.bf16.mxu0 0
  %301 = vmatpush2.bf16.msra.mxu0 0
  %302 = vmatprep.subr.bf16.mxu0 0
  %303 = vmatpush2.bf16.msra.mxu0 0
  %304 = vmatprep.subr.bf16.mxu0 0
  %305 = vmatpush2.bf16.msra.mxu0 0
  %306 = vmatprep.subr.bf16.mxu0 0
  %307 = vmatpush2.bf16.msra.mxu0 0
  %308 = vmatprep.subr.bf16.mxu0 0
  %309 = vmatpush2.bf16.msra.mxu0 0
  %310 = vmatprep.subr.bf16.mxu0 0
  %311 = vmatpush2.bf16.msra.mxu0 0
  %312 = vmatprep.subr.bf16.mxu0 0
  %313 = vmatpush2.bf16.msra.mxu0 0
  %314 = vmatprep.subr.bf16.mxu0 0
  %315 = vmatpush2.bf16.msra.mxu0 0
  %316 = vmatprep.mubr.bf16.mxu0 0
  %317 = vmatmul.mubr.bf16.gmra.mxu0 %v50
  %v318 = vpop.f32.mrf.mxu0
  %v319 = vadd.f32 0.0, %v318
  %v320 = vpop.f32.mrf.mxu0
  %v321 = vadd.f32 0.0, %v320
  %v322 = vpop.f32.mrf.mxu0
  %v323 = vpop.f32.mrf.mxu0
  %324 = vdwg.mxu0
  %v329 = vcombine.low %v278, %v280
  %v330 = vcombine.low %v319, %v321
  %v332 = vunpack.c.l.s4 1983009808
  %v333 = vunpack.c.0.s8 %v332
  %v334 = vlaneseq
  %v335 = vshrl.u32 %v334, 7
  %v336 = vsub.s32 %v333, %v335
  %v337 = vrot.slane %v329, %v336
  %v339 = vunpack.c.l.s4 1983009808
  %v340 = vunpack.c.0.s8 %v339
  %v341 = vlaneseq
  %v342 = vshrl.u32 %v341, 7
  %v343 = vsub.s32 %v340, %v342
  %v344 = vrot.slane %v330, %v343
  %v345 = vcombine.low %v337, %v344
  %347 = vst [vmem:[%s4] sm:$0xff] %v345
  // Predicated region
  $region18: #{_lambda_.5} parent=0 // pred_check
    _
  $region19: #{_lambda_.5} parent=0 // pred_check_branch
    %349 = sbr.rel (0) target = $region21
  $region20: #{_lambda_.5} parent=0 // pred_region
    _
  $region21: #{_lambda_.5} parent=0 // pred_fallthru
    _
  // Predicated region
  $region22: #{_lambda_.5} parent=0 // pred_check
    _
  $region23: #{_lambda_.5} parent=0 // pred_check_branch
    %351 = sbr.rel (0) target = $region25
  $region24: #{_lambda_.5} parent=0 // pred_region
    _
  $region25: #{_lambda_.5} parent=0 // pred_fallthru
    _

// kernel: _lambda_.3
$region0: #{_lambda_.3}
  #allocation0 [shape = 'u32[]', space=smem, size = 0x4, offset = 0x4, fixed_abs, tag = 'smem constant byte address 0x4 - core index']
  #allocation1 [shape = 'u32[144,128]{1,0:T(1,128)}', space=vmem, size = 0x12000, scoped, tag = 'internal scratch']
  %s0 = inlined_call_operand.vmem [shape: f32[2,32,128], index: 0, kind: input, shape index: {}]
  %s1 = inlined_call_operand.vmem [shape: f32[1,128], index: 1, kind: input, shape index: {}]
  %s2 = inlined_call_operand.vmem [shape: f32[1,128], index: 2, kind: input, shape index: {}]
  %s3 = inlined_call_operand.vmem [shape: bf16[128,384], index: 3, kind: input, shape index: {}]
  %s4 = inlined_call_operand.vmem [shape: f32[1,384], index: 4, kind: input, shape index: {}]
  %s5 = inlined_call_operand.vmem [shape: bf16[128,128], index: 5, kind: input, shape index: {}]
  %s6 = inlined_call_operand.vmem [shape: f32[1,128], index: 6, kind: input, shape index: {}]
  %s7 = inlined_call_operand.vmem [shape: f32[1,128], index: 7, kind: input, shape index: {}]
  %s8 = inlined_call_operand.vmem [shape: f32[1,128], index: 8, kind: input, shape index: {}]
  %s9 = inlined_call_operand.vmem [shape: bf16[128,512], index: 9, kind: input, shape index: {}]
  %s10 = inlined_call_operand.vmem [shape: f32[1,512], index: 10, kind: input, shape index: {}]
  %s11 = inlined_call_operand.vmem [shape: bf16[512,128], index: 11, kind: input, shape index: {}]
  %s12 = inlined_call_operand.vmem [shape: f32[1,128], index: 12, kind: input, shape index: {}]
  %s13 = inlined_call_operand.vmem [shape: f32[2,32,128], index: 13, kind: output, shape index: {}]
  %s14 = sld [smem:[#allocation0]]
  $region85: #{_lambda_.3} parent=0
    _
  %s16 = ssub.s32 1, %s14
  %s17 = scalar_select 0, %s16, %s14
  loop: start=0, step=1, limit=4
  $region2: #{_lambda_.3} parent=0 // loop_pre_header
    _
  $region3: #{_lambda_.3} parent=0 // loop_header
    %s19 = sphi 0, %s23
    %p20 = scmp.ge.s32.totalorder %s19, 4
    %s29 = sphi 0, %s31
    %s32 = sphi 0, %s29
    %s33 = sphi 0, %s32
    %s49 = sphi 0, %s33
    %s53 = sphi 0, %s53
    %s55 = sphi 0, %s53
    %s56 = sphi 0, %s55
    %s70 = sphi 0, %s56
    %s74 = sphi 0, %s74
    %s76 = sphi 0, %s74
    %s77 = sphi 0, %s76
    %s91 = sphi 0, %s77
    %s95 = sphi 0, %s95
    %s97 = sphi 0, %s95
    %s98 = sphi 0, %s97
    %s112 = sphi 0, %s98
    %s116 = sphi 0, %s116
    %s118 = sphi 0, %s116
    %s119 = sphi 0, %s118
    %s133 = sphi 0, %s119
    %s137 = sphi 0, %s137
    %s139 = sphi 0, %s137
    %s140 = sphi 0, %s139
    %s154 = sphi 0, %s140
    %s158 = sphi 0, %s158
    %s160 = sphi 0, %s158
    %s161 = sphi 0, %s160
    %s175 = sphi 0, %s161
    %s179 = sphi 0, %s179
    %s181 = sphi 0, %s179
    %s182 = sphi 0, %s181
    %s196 = sphi 0, %s182
    %s200 = sphi 0, %s200
    %s202 = sphi 0, %s200
    %s203 = sphi 0, %s202
    %s217 = sphi 0, %s203
    %s221 = sphi 0, %s221
    %s223 = sphi 0, %s221
    %s224 = sphi 0, %s223
    %s238 = sphi 0, %s224
    %s242 = sphi 0, %s242
    %s244 = sphi 0, %s242
    %s245 = sphi 0, %s244
    %s259 = sphi 0, %s245
    %s263 = sphi 0, %s263
    %s265 = sphi 0, %s263
    %s266 = sphi 0, %s265
    %s280 = sphi 0, %s266
    %s284 = sphi 0, %s284
    %s286 = sphi 0, %s284
    %s287 = sphi 0, %s286
    %s301 = sphi 0, %s287
    %s307 = sphi 0, %s309
    %s310 = sphi 0, %s307
    %s311 = sphi 0, %s310
    %s327 = sphi 0, %s311
  $region4: #{_lambda_.3} parent=0 // loop_header_branch
    %22 = sbr.rel (%p20) target = $region8
  $region5: #{_lambda_.3} parent=0 // loop_body
    %s24 = ssub.s32 %s19, 1
    %s25 = ssub.s32 %s19, 2
    %s26 = sadd.s32 %s19, 1
    %s27 = ssub.s32 %s19, %s26
    %p28 = scmp.eq.s32.totalorder %s27, 0
    %s30 = sadd.s32 %s29, 1
    %s31 = scalar_select %p28, %s29, %s30
    %p34 = pneg %p28
    %p35 = scmp.eq.s32.totalorder %s19, 1
    %p36 = por %p34, %p35
    %p37 = scmp.ne.s32.totalorder %s29, %s32
    %p38 = scmp.eq.s32.totalorder %s19, 0
    %p39 = por %p37, %p38
    %p40 = scmp.ne.s32.totalorder %s29, %s32
    %p41 = scmp.eq.s32.totalorder %s24, 1
    %p42 = por %p40, %p41
    %p43 = scmp.ne.s32.totalorder %s32, %s33
    %p44 = scmp.eq.s32.totalorder %s24, 0
    %p45 = por %p43, %p44
    %p46 = scmp.ne.s32.totalorder %s32, %s33
    %p47 = scmp.eq.s32.totalorder %s25, 1
    %p48 = por %p46, %p47
    %p50 = scmp.ne.s32.totalorder %s33, %s49
    %p51 = scmp.eq.s32.totalorder %s25, 0
    %p52 = por %p50, %p51
    %s54 = sadd.s32 %s53, 1
    %p57 = scmp.eq.s32.totalorder %s19, 1
    %p58 = scmp.ne.s32.totalorder %s53, %s55
    %p59 = scmp.eq.s32.totalorder %s19, 0
    %p60 = por %p58, %p59
    %p61 = scmp.ne.s32.totalorder %s53, %s55
    %p62 = scmp.eq.s32.totalorder %s24, 1
    %p63 = por %p61, %p62
    %p64 = scmp.ne.s32.totalorder %s55, %s56
    %p65 = scmp.eq.s32.totalorder %s24, 0
    %p66 = por %p64, %p65
    %p67 = scmp.ne.s32.totalorder %s55, %s56
    %p68 = scmp.eq.s32.totalorder %s25, 1
    %p69 = por %p67, %p68
    %p71 = scmp.ne.s32.totalorder %s56, %s70
    %p72 = scmp.eq.s32.totalorder %s25, 0
    %p73 = por %p71, %p72
    %s75 = sadd.s32 %s74, 1
    %p78 = scmp.eq.s32.totalorder %s19, 1
    %p79 = scmp.ne.s32.totalorder %s74, %s76
    %p80 = scmp.eq.s32.totalorder %s19, 0
    %p81 = por %p79, %p80
    %p82 = scmp.ne.s32.totalorder %s74, %s76
    %p83 = scmp.eq.s32.totalorder %s24, 1
    %p84 = por %p82, %p83
    %p85 = scmp.ne.s32.totalorder %s76, %s77
    %p86 = scmp.eq.s32.totalorder %s24, 0
    %p87 = por %p85, %p86
    %p88 = scmp.ne.s32.totalorder %s76, %s77
    %p89 = scmp.eq.s32.totalorder %s25, 1
    %p90 = por %p88, %p89
    %p92 = scmp.ne.s32.totalorder %s77, %s91
    %p93 = scmp.eq.s32.totalorder %s25, 0
    %p94 = por %p92, %p93
    %s96 = sadd.s32 %s95, 1
    %p99 = scmp.eq.s32.totalorder %s19, 1
    %p100 = scmp.ne.s32.totalorder %s95, %s97
    %p101 = scmp.eq.s32.totalorder %s19, 0
    %p102 = por %p100, %p101
    %p103 = scmp.ne.s32.totalorder %s95, %s97
    %p104 = scmp.eq.s32.totalorder %s24, 1
    %p105 = por %p103, %p104
    %p106 = scmp.ne.s32.totalorder %s97, %s98
    %p107 = scmp.eq.s32.totalorder %s24, 0
    %p108 = por %p106, %p107
    %p109 = scmp.ne.s32.totalorder %s97, %s98
    %p110 = scmp.eq.s32.totalorder %s25, 1
    %p111 = por %p109, %p110
    %p113 = scmp.ne.s32.totalorder %s98, %s112
    %p114 = scmp.eq.s32.totalorder %s25, 0
    %p115 = por %p113, %p114
    %s117 = sadd.s32 %s116, 1
    %p120 = scmp.eq.s32.totalorder %s19, 1
    %p121 = scmp.ne.s32.totalorder %s116, %s118
    %p122 = scmp.eq.s32.totalorder %s19, 0
    %p123 = por %p121, %p122
    %p124 = scmp.ne.s32.totalorder %s116, %s118
    %p125 = scmp.eq.s32.totalorder %s24, 1
    %p126 = por %p124, %p125
    %p127 = scmp.ne.s32.totalorder %s118, %s119
    %p128 = scmp.eq.s32.totalorder %s24, 0
    %p129 = por %p127, %p128
    %p130 = scmp.ne.s32.totalorder %s118, %s119
    %p131 = scmp.eq.s32.totalorder %s25, 1
    %p132 = por %p130, %p131
    %p134 = scmp.ne.s32.totalorder %s119, %s133
    %p135 = scmp.eq.s32.totalorder %s25, 0
    %p136 = por %p134, %p135
    %s138 = sadd.s32 %s137, 1
    %p141 = scmp.eq.s32.totalorder %s19, 1
    %p142 = scmp.ne.s32.totalorder %s137, %s139
    %p143 = scmp.eq.s32.totalorder %s19, 0
    %p144 = por %p142, %p143
    %p145 = scmp.ne.s32.totalorder %s137, %s139
    %p146 = scmp.eq.s32.totalorder %s24, 1
    %p147 = por %p145, %p146
    %p148 = scmp.ne.s32.totalorder %s139, %s140
    %p149 = scmp.eq.s32.totalorder %s24, 0
    %p150 = por %p148, %p149
    %p151 = scmp.ne.s32.totalorder %s139, %s140
    %p152 = scmp.eq.s32.totalorder %s25, 1
    %p153 = por %p151, %p152
    %p155 = scmp.ne.s32.totalorder %s140, %s154
    %p156 = scmp.eq.s32.totalorder %s25, 0
    %p157 = por %p155, %p156
    %s159 = sadd.s32 %s158, 1
    %p162 = scmp.eq.s32.totalorder %s19, 1
    %p163 = scmp.ne.s32.totalorder %s158, %s160
    %p164 = scmp.eq.s32.totalorder %s19, 0
    %p165 = por %p163, %p164
    %p166 = scmp.ne.s32.totalorder %s158, %s160
    %p167 = scmp.eq.s32.totalorder %s24, 1
    %p168 = por %p166, %p167
    %p169 = scmp.ne.s32.totalorder %s160, %s161
    %p170 = scmp.eq.s32.totalorder %s24, 0
    %p171 = por %p169, %p170
    %p172 = scmp.ne.s32.totalorder %s160, %s161
    %p173 = scmp.eq.s32.totalorder %s25, 1
    %p174 = por %p172, %p173
    %p176 = scmp.ne.s32.totalorder %s161, %s175
    %p177 = scmp.eq.s32.totalorder %s25, 0
    %p178 = por %p176, %p177
    %s180 = sadd.s32 %s179, 1
    %p183 = scmp.eq.s32.totalorder %s19, 1
    %p184 = scmp.ne.s32.totalorder %s179, %s181
    %p185 = scmp.eq.s32.totalorder %s19, 0
    %p186 = por %p184, %p185
    %p187 = scmp.ne.s32.totalorder %s179, %s181
    %p188 = scmp.eq.s32.totalorder %s24, 1
    %p189 = por %p187, %p188
    %p190 = scmp.ne.s32.totalorder %s181, %s182
    %p191 = scmp.eq.s32.totalorder %s24, 0
    %p192 = por %p190, %p191
    %p193 = scmp.ne.s32.totalorder %s181, %s182
    %p194 = scmp.eq.s32.totalorder %s25, 1
    %p195 = por %p193, %p194
    %p197 = scmp.ne.s32.totalorder %s182, %s196
    %p198 = scmp.eq.s32.totalorder %s25, 0
    %p199 = por %p197, %p198
    %s201 = sadd.s32 %s200, 1
    %p204 = scmp.eq.s32.totalorder %s19, 1
    %p205 = scmp.ne.s32.totalorder %s200, %s202
    %p206 = scmp.eq.s32.totalorder %s19, 0
    %p207 = por %p205, %p206
    %p208 = scmp.ne.s32.totalorder %s200, %s202
    %p209 = scmp.eq.s32.totalorder %s24, 1
    %p210 = por %p208, %p209
    %p211 = scmp.ne.s32.totalorder %s202, %s203
    %p212 = scmp.eq.s32.totalorder %s24, 0
    %p213 = por %p211, %p212
    %p214 = scmp.ne.s32.totalorder %s202, %s203
    %p215 = scmp.eq.s32.totalorder %s25, 1
    %p216 = por %p214, %p215
    %p218 = scmp.ne.s32.totalorder %s203, %s217
    %p219 = scmp.eq.s32.totalorder %s25, 0
    %p220 = por %p218, %p219
    %s222 = sadd.s32 %s221, 1
    %p225 = scmp.eq.s32.totalorder %s19, 1
    %p226 = scmp.ne.s32.totalorder %s221, %s223
    %p227 = scmp.eq.s32.totalorder %s19, 0
    %p228 = por %p226, %p227
    %p229 = scmp.ne.s32.totalorder %s221, %s223
    %p230 = scmp.eq.s32.totalorder %s24, 1
    %p231 = por %p229, %p230
    %p232 = scmp.ne.s32.totalorder %s223, %s224
    %p233 = scmp.eq.s32.totalorder %s24, 0
    %p234 = por %p232, %p233
    %p235 = scmp.ne.s32.totalorder %s223, %s224
    %p236 = scmp.eq.s32.totalorder %s25, 1
    %p237 = por %p235, %p236
    %p239 = scmp.ne.s32.totalorder %s224, %s238
    %p240 = scmp.eq.s32.totalorder %s25, 0
    %p241 = por %p239, %p240
    %s243 = sadd.s32 %s242, 1
    %p246 = scmp.eq.s32.totalorder %s19, 1
    %p247 = scmp.ne.s32.totalorder %s242, %s244
    %p248 = scmp.eq.s32.totalorder %s19, 0
    %p249 = por %p247, %p248
    %p250 = scmp.ne.s32.totalorder %s242, %s244
    %p251 = scmp.eq.s32.totalorder %s24, 1
    %p252 = por %p250, %p251
    %p253 = scmp.ne.s32.totalorder %s244, %s245
    %p254 = scmp.eq.s32.totalorder %s24, 0
    %p255 = por %p253, %p254
    %p256 = scmp.ne.s32.totalorder %s244, %s245
    %p257 = scmp.eq.s32.totalorder %s25, 1
    %p258 = por %p256, %p257
    %p260 = scmp.ne.s32.totalorder %s245, %s259
    %p261 = scmp.eq.s32.totalorder %s25, 0
    %p262 = por %p260, %p261
    %s264 = sadd.s32 %s263, 1
    %p267 = scmp.eq.s32.totalorder %s19, 1
    %p268 = scmp.ne.s32.totalorder %s263, %s265
    %p269 = scmp.eq.s32.totalorder %s19, 0
    %p270 = por %p268, %p269
    %p271 = scmp.ne.s32.totalorder %s263, %s265
    %p272 = scmp.eq.s32.totalorder %s24, 1
    %p273 = por %p271, %p272
    %p274 = scmp.ne.s32.totalorder %s265, %s266
    %p275 = scmp.eq.s32.totalorder %s24, 0
    %p276 = por %p274, %p275
    %p277 = scmp.ne.s32.totalorder %s265, %s266
    %p278 = scmp.eq.s32.totalorder %s25, 1
    %p279 = por %p277, %p278
    %p281 = scmp.ne.s32.totalorder %s266, %s280
    %p282 = scmp.eq.s32.totalorder %s25, 0
    %p283 = por %p281, %p282
    %s285 = sadd.s32 %s284, 1
    %p288 = scmp.eq.s32.totalorder %s19, 1
    %p289 = scmp.ne.s32.totalorder %s284, %s286
    %p290 = scmp.eq.s32.totalorder %s19, 0
    %p291 = por %p289, %p290
    %p292 = scmp.ne.s32.totalorder %s284, %s286
    %p293 = scmp.eq.s32.totalorder %s24, 1
    %p294 = por %p292, %p293
    %p295 = scmp.ne.s32.totalorder %s286, %s287
    %p296 = scmp.eq.s32.totalorder %s24, 0
    %p297 = por %p295, %p296
    %p298 = scmp.ne.s32.totalorder %s286, %s287
    %p299 = scmp.eq.s32.totalorder %s25, 1
    %p300 = por %p298, %p299
    %p302 = scmp.ne.s32.totalorder %s287, %s301
    %p303 = scmp.eq.s32.totalorder %s25, 0
    %p304 = por %p302, %p303
    %s305 = ssub.s32 %s19, %s26
    %p306 = scmp.eq.s32.totalorder %s305, 0
    %s308 = sadd.s32 %s307, 1
    %s309 = scalar_select %p306, %s307, %s308
    %p312 = pneg %p306
    %p313 = scmp.eq.s32.totalorder %s19, 1
    %p314 = por %p312, %p313
    %p315 = scmp.ne.s32.totalorder %s307, %s310
    %p316 = scmp.eq.s32.totalorder %s19, 0
    %p317 = por %p315, %p316
    %p318 = scmp.ne.s32.totalorder %s307, %s310
    %p319 = scmp.eq.s32.totalorder %s24, 1
    %p320 = por %p318, %p319
    %p321 = scmp.ne.s32.totalorder %s310, %s311
    %p322 = scmp.eq.s32.totalorder %s24, 0
    %p323 = por %p321, %p322
    %p324 = scmp.ne.s32.totalorder %s310, %s311
    %p325 = scmp.eq.s32.totalorder %s25, 1
    %p326 = por %p324, %p325
    %p328 = scmp.ne.s32.totalorder %s311, %s327
    %p329 = scmp.eq.s32.totalorder %s25, 0
    %p330 = por %p328, %p329
    %p331 = scmp.le.s32.totalorder 1, %s19
    %p332 = scmp.lt.s32.totalorder %s19, 3
    %p333 = pnand %p331, %p332
    %p334 = pneg %p333
    // Predicated region
    $region9: #{_lambda_.3} parent=5 // pred_check
      _
    $region10: #{_lambda_.3} parent=5 // pred_check_branch
      %336 = sbr.rel (%p333) target = $region12
    $region11: #{_lambda_.3} parent=5 // pred_region
      %s337 = ssub.s32 %s19, 1
      // Predicated region
      $region13: #{_lambda_.3} parent=11 // pred_check
        %p338 = pneg %p66
      $region14: #{_lambda_.3} parent=11 // pred_check_branch
        %340 = sbr.rel (%p338) target = $region16
      $region15: #{_lambda_.3} parent=11 // pred_region
        _
      $region16: #{_lambda_.3} parent=11 // pred_fallthru
        _
      // Predicated region
      $region17: #{_lambda_.3} parent=11 // pred_check
        %p341 = pneg %p87
      $region18: #{_lambda_.3} parent=11 // pred_check_branch
        %343 = sbr.rel (%p341) target = $region20
      $region19: #{_lambda_.3} parent=11 // pred_region
        _
      $region20: #{_lambda_.3} parent=11 // pred_fallthru
        _
      // Predicated region
      $region21: #{_lambda_.3} parent=11 // pred_check
        %p344 = pneg %p108
      $region22: #{_lambda_.3} parent=11 // pred_check_branch
        %346 = sbr.rel (%p344) target = $region24
      $region23: #{_lambda_.3} parent=11 // pred_region
        _
      $region24: #{_lambda_.3} parent=11 // pred_fallthru
        _
      // Predicated region
      $region25: #{_lambda_.3} parent=11 // pred_check
        %p347 = pneg %p129
      $region26: #{_lambda_.3} parent=11 // pred_check_branch
        %349 = sbr.rel (%p347) target = $region28
      $region27: #{_lambda_.3} parent=11 // pred_region
        _
      $region28: #{_lambda_.3} parent=11 // pred_fallthru
        _
      // Predicated region
      $region29: #{_lambda_.3} parent=11 // pred_check
        %p350 = pneg %p150
      $region30: #{_lambda_.3} parent=11 // pred_check_branch
        %352 = sbr.rel (%p350) target = $region32
      $region31: #{_lambda_.3} parent=11 // pred_region
        _
      $region32: #{_lambda_.3} parent=11 // pred_fallthru
        _
      // Predicated region
      $region33: #{_lambda_.3} parent=11 // pred_check
        %p353 = pneg %p171
      $region34: #{_lambda_.3} parent=11 // pred_check_branch
        %355 = sbr.rel (%p353) target = $region36
      $region35: #{_lambda_.3} parent=11 // pred_region
        _
      $region36: #{_lambda_.3} parent=11 // pred_fallthru
        _
      // Predicated region
      $region37: #{_lambda_.3} parent=11 // pred_check
        %p356 = pneg %p192
      $region38: #{_lambda_.3} parent=11 // pred_check_branch
        %358 = sbr.rel (%p356) target = $region40
      $region39: #{_lambda_.3} parent=11 // pred_region
        _
      $region40: #{_lambda_.3} parent=11 // pred_fallthru
        _
      // Predicated region
      $region41: #{_lambda_.3} parent=11 // pred_check
        %p359 = pneg %p213
      $region42: #{_lambda_.3} parent=11 // pred_check_branch
        %361 = sbr.rel (%p359) target = $region44
      $region43: #{_lambda_.3} parent=11 // pred_region
        _
      $region44: #{_lambda_.3} parent=11 // pred_fallthru
        _
      // Predicated region
      $region45: #{_lambda_.3} parent=11 // pred_check
        %p362 = pneg %p234
      $region46: #{_lambda_.3} parent=11 // pred_check_branch
        %364 = sbr.rel (%p362) target = $region48
      $region47: #{_lambda_.3} parent=11 // pred_region
        _
      $region48: #{_lambda_.3} parent=11 // pred_fallthru
        _
      // Predicated region
      $region49: #{_lambda_.3} parent=11 // pred_check
        %p365 = pneg %p255
      $region50: #{_lambda_.3} parent=11 // pred_check_branch
        %367 = sbr.rel (%p365) target = $region52
      $region51: #{_lambda_.3} parent=11 // pred_region
        _
      $region52: #{_lambda_.3} parent=11 // pred_fallthru
        _
      // Predicated region
      $region53: #{_lambda_.3} parent=11 // pred_check
        %p368 = pneg %p276
      $region54: #{_lambda_.3} parent=11 // pred_check_branch
        %370 = sbr.rel (%p368) target = $region56
      $region55: #{_lambda_.3} parent=11 // pred_region
        _
      $region56: #{_lambda_.3} parent=11 // pred_fallthru
        _
      // Predicated region
      $region57: #{_lambda_.3} parent=11 // pred_check
        %p371 = pneg %p297
      $region58: #{_lambda_.3} parent=11 // pred_check_branch
        %373 = sbr.rel (%p371) target = $region60
      $region59: #{_lambda_.3} parent=11 // pred_region
        _
      $region60: #{_lambda_.3} parent=11 // pred_fallthru
        _
    $region12: #{_lambda_.3} parent=5 // pred_fallthru
      _
    %p374 = scmp.lt.s32.totalorder %s19, 2
    // Predicated region
    $region61: #{_lambda_.3} parent=5 // pred_check
      %p375 = pneg %p374
    $region62: #{_lambda_.3} parent=5 // pred_check_branch
      %377 = sbr.rel (%p375) target = $region64
    $region63: #{_lambda_.3} parent=5 // pred_region
      // Predicated region
      $region65: #{_lambda_.3} parent=63 // pred_check
        %p378 = pneg %p39
      $region66: #{_lambda_.3} parent=63 // pred_check_branch
        %380 = sbr.rel (%p378) target = $region68
      $region67: #{_lambda_.3} parent=63 // pred_region
        %p381 = scmp.lt.s32.totalorder %s19, 1
        %s382 = scalar_select %p381, %s19, 1
        %s383 = smul.addr %s382, 4
        %s384 = smul.addr %s383, 8
        %s385 = scalar_lea.vmem %s0, %s384
      $region68: #{_lambda_.3} parent=63 // pred_fallthru
        _
    $region64: #{_lambda_.3} parent=5 // pred_fallthru
      _
    %p386 = scmp.le.s32.totalorder 1, %s19
    %p387 = scmp.lt.s32.totalorder %s19, 3
    %p388 = pnand %p386, %p387
    %p389 = pneg %p388
    // Predicated region
    $region69: #{_lambda_.3} parent=5 // pred_check
      _
    $region70: #{_lambda_.3} parent=5 // pred_check_branch
      %391 = sbr.rel (%p388) target = $region72
    $region71: #{_lambda_.3} parent=5 // pred_region
      %s392 = ssub.s32 %s19, 1
      %p393 = scmp.lt.s32.totalorder %s24, 1
      %s394 = scalar_select %p393, %s24, 1
      %s395 = smul.addr %s394, 4
      %s396 = smul.addr %s395, 8
      %s397 = scalar_lea.vmem %s0, %s396
      %p398 = pneg %p45
      %p399 = pneg %p42
      %p400 = pneg %p66
      %p401 = pneg %p63
      %p402 = pneg %p87
      %p403 = pneg %p84
      %p404 = pneg %p108
      %p405 = pneg %p105
      %p406 = pneg %p129
      %p407 = pneg %p126
      %p408 = pneg %p150
      %p409 = pneg %p147
      %p410 = pneg %p171
      %p411 = pneg %p168
      %p412 = pneg %p192
      %p413 = pneg %p189
      %p414 = pneg %p213
      %p415 = pneg %p210
      %p416 = pneg %p234
      %p417 = pneg %p231
      %p418 = pneg %p255
      %p419 = pneg %p252
      %p420 = pneg %p276
      %p421 = pneg %p273
      %p422 = pneg %p297
      %p423 = pneg %p294
      %p424 = pneg %p323
      %p425 = pneg %p320
      %p426 = scmp.lt.s32.totalorder %s24, 1
      %s427 = scalar_select %p426, %s24, 1
      %s428 = smul.addr %s427, 4
      %s429 = smul.addr %s428, 8
      %s430 = scalar_lea.vmem %s13, %s429
      %p431 = scmp.lt.s32.totalorder %s24, 1
      %s432 = scalar_select %p431, %s24, 1
      %s433 = smul.addr %s432, 4
      %s434 = smul.addr %s433, 8
      %s435 = scalar_lea.vmem %s0, %s434
      %p436 = scmp.lt.s32.totalorder %s24, 1
      %s437 = scalar_select %p436, %s24, 1
      %s438 = smul.addr %s437, 4
      %s439 = smul.addr %s438, 8
      %s440 = scalar_lea.vmem %s13, %s439
      %v442 = vld [vmem:[%s435] sm:$0xff]
      %v443 = vld [vmem:[%s435 + $0x8] sm:$0xff]
      %v444 = vld [vmem:[%s435 + $0x10] sm:$0xff]
      %v445 = vld [vmem:[%s435 + $0x18] sm:$0xff]
      %v446 = vld [vmem:[%s1] sm:$0x1]
      %v447 = vld [vmem:[%s2] sm:$0x1]
      %448 = vadd.xlane.f32.xlu0 %v442
      %v449 = vpop.xlane.xlu0 %448
      %450 = vadd.xlane.f32.xlu0 %v443
      %v451 = vpop.xlane.xlu0 %450
      %452 = vadd.xlane.f32.xlu0 %v444
      %v453 = vpop.xlane.xlu0 %452
      %454 = vadd.xlane.f32.xlu0 %v445
      %v455 = vpop.xlane.xlu0 %454
      %v456 = vrcp.pop 128.0
      %v457 = vmul.f32 %v449, %v456
      %v458 = vmul.f32 %v451, %v456
      %v459 = vmul.f32 %v453, %v456
      %v460 = vmul.f32 %v455, %v456
      %v461 = vsub.f32 %v442, %v457
      %v462 = vsub.f32 %v443, %v458
      %v463 = vsub.f32 %v444, %v459
      %v464 = vsub.f32 %v445, %v460
      %v465 = vmul.f32 %v461, %v461
      %v466 = vmul.f32 %v462, %v462
      %v467 = vmul.f32 %v463, %v463
      %v468 = vmul.f32 %v464, %v464
      %469 = vadd.xlane.f32.xlu0 %v465
      %v470 = vpop.xlane.xlu0 %469
      %471 = vadd.xlane.f32.xlu0 %v466
      %v472 = vpop.xlane.xlu0 %471
      %473 = vadd.xlane.f32.xlu0 %v467
      %v474 = vpop.xlane.xlu0 %473
      %475 = vadd.xlane.f32.xlu0 %v468
      %v476 = vpop.xlane.xlu0 %475
      %v477 = vmul.f32 %v470, %v456
      %v478 = vmul.f32 %v472, %v456
      %v479 = vmul.f32 %v474, %v456
      %v480 = vmul.f32 %v476, %v456
      %v481 = vadd.f32 %v477, 1e-05
      %v482 = vadd.f32 %v478, 1e-05
      %v483 = vadd.f32 %v479, 1e-05
      %v484 = vadd.f32 %v480, 1e-05
      %v485 = vrsqrt.pop %v481
      %v486 = vrsqrt.pop %v482
      %v487 = vrsqrt.pop %v483
      %v488 = vrsqrt.pop %v484
      %v489 = vmul.f32 %v461, %v485
      %v490 = vmul.f32 %v462, %v486
      %v491 = vmul.f32 %v463, %v487
      %v492 = vmul.f32 %v464, %v488
      %v494 = vlaneseq
      %v495 = vshrl.u32 %v494, 7
      %v496 = vsub.s32 0, %v495
      %v497 = vrot.slane %v446, %v496
      %v499 = vmul.f32 %v489, %v497
      %v500 = vmul.f32 %v490, %v497
      %v501 = vmul.f32 %v491, %v497
      %v502 = vmul.f32 %v492, %v497
      %v504 = vlaneseq
      %v505 = vshrl.u32 %v504, 7
      %v506 = vsub.s32 0, %v505
      %v507 = vrot.slane %v447, %v506
      %v509 = vadd.f32 %v499, %v507
      %v510 = vadd.f32 %v500, %v507
      %v511 = vadd.f32 %v501, %v507
      %v512 = vadd.f32 %v502, %v507
      %v513 = vpack.c.bf16 %v510, %v509
      %v514 = vpack.c.bf16 %v512, %v511
      %v515 = vld [vmem:[%s3] sm:$0xff]
      %v516 = vld [vmem:[%s3 + $0x8] sm:$0xf]
      %v517 = vld [vmem:[%s3 + $0xc] sm:$0xff]
      %v518 = vld [vmem:[%s3 + $0x14] sm:$0xf]
      %v519 = vld [vmem:[%s3 + $0x18] sm:$0xff]
      %v520 = vld [vmem:[%s3 + $0x20] sm:$0xf]
      %v521 = vld [vmem:[%s3 + $0x24] sm:$0xff]
      %v522 = vld [vmem:[%s3 + $0x2c] sm:$0xf]
      %v523 = vld [vmem:[%s3 + $0x30] sm:$0xff]
      %v524 = vld [vmem:[%s3 + $0x38] sm:$0xf]
      %v525 = vld [vmem:[%s3 + $0x3c] sm:$0xff]
      %v526 = vld [vmem:[%s3 + $0x44] sm:$0xf]
      %v527 = vld [vmem:[%s3 + $0x48] sm:$0xff]
      %v528 = vld [vmem:[%s3 + $0x50] sm:$0xf]
      %v529 = vld [vmem:[%s3 + $0x54] sm:$0xff]
      %v530 = vld [vmem:[%s3 + $0x5c] sm:$0xf]
      %v531 = vld [vmem:[%s3 + $0x60] sm:$0xff]
      %v532 = vld [vmem:[%s3 + $0x68] sm:$0xf]
      %v533 = vld [vmem:[%s3 + $0x6c] sm:$0xff]
      %v534 = vld [vmem:[%s3 + $0x74] sm:$0xf]
      %v535 = vld [vmem:[%s3 + $0x78] sm:$0xff]
      %v536 = vld [vmem:[%s3 + $0x80] sm:$0xf]
      %v537 = vld [vmem:[%s3 + $0x84] sm:$0xff]
      %v538 = vld [vmem:[%s3 + $0x8c] sm:$0xf]
      %v539 = vld [vmem:[%s3 + $0x90] sm:$0xff]
      %v540 = vld [vmem:[%s3 + $0x98] sm:$0xf]
      %v541 = vld [vmem:[%s3 + $0x9c] sm:$0xff]
      %v542 = vld [vmem:[%s3 + $0xa4] sm:$0xf]
      %v543 = vld [vmem:[%s3 + $0xa8] sm:$0xff]
      %v544 = vld [vmem:[%s3 + $0xb0] sm:$0xf]
      %v545 = vld [vmem:[%s3 + $0xb4] sm:$0xff]
      %v546 = vld [vmem:[%s3 + $0xbc] sm:$0xf]
      %v547 = vld [vmem:[%s4] sm:$0x7]
      %v549 = vlaneseq
      %v550 = vshrl.u32 %v549, 7
      %v551 = vsub.s32 0, %v550
      %v552 = vrot.slane %v547, %v551
      %v553 = vlaneseq
      %v554 = vshrl.u32 %v553, 7
      %v555 = vsub.s32 1, %v554
      %v556 = vrot.slane %v547, %v555
      %v557 = vlaneseq
      %v558 = vshrl.u32 %v557, 7
      %v559 = vsub.s32 2, %v558
      %v560 = vrot.slane %v547, %v559
      %v596 = vunpack.c.l.b16 %v515
      %v597 = vunpack.c.h.b16 %v515
      %v598 = vunpack.c.l.b16 %v516
      %v599 = vunpack.c.l.b16 %v517
      %v600 = vunpack.c.h.b16 %v517
      %v601 = vunpack.c.l.b16 %v518
      %v602 = vunpack.c.l.b16 %v519
      %v603 = vunpack.c.h.b16 %v519
      %v604 = vunpack.c.l.b16 %v520
      %v605 = vunpack.c.l.b16 %v521
      %v606 = vunpack.c.h.b16 %v521
      %v607 = vunpack.c.l.b16 %v522
      %v608 = vunpack.c.l.b16 %v523
      %v609 = vunpack.c.h.b16 %v523
      %v610 = vunpack.c.l.b16 %v524
      %v611 = vunpack.c.l.b16 %v525
      %v612 = vunpack.c.h.b16 %v525
      %v613 = vunpack.c.l.b16 %v526
      %v614 = vunpack.c.l.b16 %v527
      %v615 = vunpack.c.h.b16 %v527
      %v616 = vunpack.c.l.b16 %v528
      %v617 = vunpack.c.l.b16 %v529
      %v618 = vunpack.c.h.b16 %v529
      %v619 = vunpack.c.l.b16 %v530
      %v620 = vunpack.c.l.b16 %v531
      %v621 = vunpack.c.h.b16 %v531
      %v622 = vunpack.c.l.b16 %v532
      %v623 = vunpack.c.l.b16 %v533
      %v624 = vunpack.c.h.b16 %v533
      %v625 = vunpack.c.l.b16 %v534
      %v626 = vunpack.c.l.b16 %v535
      %v627 = vunpack.c.h.b16 %v535
      %v628 = vunpack.c.l.b16 %v536
      %v629 = vunpack.c.l.b16 %v537
      %v630 = vunpack.c.h.b16 %v537
      %v631 = vunpack.c.l.b16 %v538
      %v632 = vunpack.c.l.b16 %v539
      %v633 = vunpack.c.h.b16 %v539
      %v634 = vunpack.c.l.b16 %v540
      %v635 = vunpack.c.l.b16 %v541
      %v636 = vunpack.c.h.b16 %v541
      %v637 = vunpack.c.l.b16 %v542
      %v638 = vunpack.c.l.b16 %v543
      %v639 = vunpack.c.h.b16 %v543
      %v640 = vunpack.c.l.b16 %v544
      %v641 = vunpack.c.l.b16 %v545
      %v642 = vunpack.c.h.b16 %v545
      %v643 = vunpack.c.l.b16 %v546
      %v644 = vpack.c.b16 %v599, %v596
      %v645 = vpack.c.b16 %v600, %v597
      %v646 = vpack.c.b16 %v601, %v598
      %v647 = vpack.c.b16 %v605, %v602
      %v648 = vpack.c.b16 %v606, %v603
      %v649 = vpack.c.b16 %v607, %v604
      %v650 = vpack.c.b16 %v611, %v608
      %v651 = vpack.c.b16 %v612, %v609
      %v652 = vpack.c.b16 %v613, %v610
      %v653 = vpack.c.b16 %v617, %v614
      %v654 = vpack.c.b16 %v618, %v615
      %v655 = vpack.c.b16 %v619, %v616
      %v656 = vpack.c.b16 %v623, %v620
      %v657 = vpack.c.b16 %v624, %v621
      %v658 = vpack.c.b16 %v625, %v622
      %v659 = vpack.c.b16 %v629, %v626
      %v660 = vpack.c.b16 %v630, %v627
      %v661 = vpack.c.b16 %v631, %v628
      %v662 = vpack.c.b16 %v635, %v632
      %v663 = vpack.c.b16 %v636, %v633
      %v664 = vpack.c.b16 %v637, %v634
      %v665 = vpack.c.b16 %v641, %v638
      %v666 = vpack.c.b16 %v642, %v639
      %v667 = vpack.c.b16 %v643, %v640
      %692 = vmatprep.subr.bf16.mxu0 %v666
      %693 = vmatpush1.bf16.msra.mxu0 %v665
      %694 = vmatprep.subr.bf16.mxu0 %v663
      %695 = vmatpush1.bf16.msra.mxu0 %v662
      %696 = vmatprep.subr.bf16.mxu0 %v660
      %697 = vmatpush1.bf16.msra.mxu0 %v659
      %698 = vmatprep.subr.bf16.mxu0 %v657
      %699 = vmatpush1.bf16.msra.mxu0 %v656
      %700 = vmatprep.subr.bf16.mxu0 %v654
      %701 = vmatpush1.bf16.msra.mxu0 %v653
      %702 = vmatprep.subr.bf16.mxu0 %v651
      %703 = vmatpush1.bf16.msra.mxu0 %v650
      %704 = vmatprep.subr.bf16.mxu0 %v648
      %705 = vmatpush1.bf16.msra.mxu0 %v647
      %706 = vmatprep.subr.bf16.mxu0 %v645
      %707 = vmatpush1.bf16.msra.mxu0 %v644
      %708 = vmatprep.subr.bf16.mxu0 0
      %709 = vmatpush2.bf16.msra.mxu0 0
      %710 = vmatprep.subr.bf16.mxu0 0
      %711 = vmatpush2.bf16.msra.mxu0 0
      %712 = vmatprep.subr.bf16.mxu0 0
      %713 = vmatpush2.bf16.msra.mxu0 0
      %714 = vmatprep.subr.bf16.mxu0 0
      %715 = vmatpush2.bf16.msra.mxu0 0
      %716 = vmatprep.subr.bf16.mxu0 0
      %717 = vmatpush2.bf16.msra.mxu0 0
      %718 = vmatprep.subr.bf16.mxu0 0
      %719 = vmatpush2.bf16.msra.mxu0 0
      %720 = vmatprep.subr.bf16.mxu0 0
      %721 = vmatpush2.bf16.msra.mxu0 0
      %722 = vmatprep.subr.bf16.mxu0 0
      %723 = vmatpush2.bf16.msra.mxu0 0
      %724 = vmatprep.mubr.bf16.mxu0 0
      %725 = vmatmul.mubr.bf16.gmra.mxu0 %v513
      %v726 = vpop.f32.mrf.mxu0
      %v727 = vadd.f32 %v552, %v726
      %v728 = vpop.f32.mrf.mxu0
      %v729 = vadd.f32 %v556, %v728
      %v730 = vpop.f32.mrf.mxu0
      %v731 = vadd.f32 %v552, %v730
      %v732 = vpop.f32.mrf.mxu0
      %v733 = vadd.f32 %v556, %v732
      %734 = vmatprep.mubr.bf16.mxu0 0
      %735 = vmatmul.mubr.bf16.gmra.mxu0 %v514
      %v736 = vpop.f32.mrf.mxu0
      %v737 = vadd.f32 %v552, %v736
      %v738 = vpop.f32.mrf.mxu0
      %v739 = vadd.f32 %v556, %v738
      %v740 = vpop.f32.mrf.mxu0
      %v741 = vadd.f32 %v552, %v740
      %v742 = vpop.f32.mrf.mxu0
      %v743 = vadd.f32 %v556, %v742
      %744 = vdwg.mxu0
      %745 = vmatprep.subr.bf16.mxu0 0
      %746 = vmatpush1.bf16.msra.mxu0 %v667
      %747 = vmatprep.subr.bf16.mxu0 0
      %748 = vmatpush1.bf16.msra.mxu0 %v664
      %749 = vmatprep.subr.bf16.mxu0 0
      %750 = vmatpush1.bf16.msra.mxu0 %v661
      %751 = vmatprep.subr.bf16.mxu0 0
      %752 = vmatpush1.bf16.msra.mxu0 %v658
      %753 = vmatprep.subr.bf16.mxu0 0
      %754 = vmatpush1.bf16.msra.mxu0 %v655
      %755 = vmatprep.subr.bf16.mxu0 0
      %756 = vmatpush1.bf16.msra.mxu0 %v652
      %757 = vmatprep.subr.bf16.mxu0 0
      %758 = vmatpush1.bf16.msra.mxu0 %v649
      %759 = vmatprep.subr.bf16.mxu0 0
      %760 = vmatpush1.bf16.msra.mxu0 %v646
      %761 = vmatprep.subr.bf16.mxu0 0
      %762 = vmatpush2.bf16.msra.mxu0 0
      %763 = vmatprep.subr.bf16.mxu0 0
      %764 = vmatpush2.bf16.msra.mxu0 0
      %765 = vmatprep.subr.bf16.mxu0 0
      %766 = vmatpush2.bf16.msra.mxu0 0
      %767 = vmatprep.subr.bf16.mxu0 0
      %768 = vmatpush2.bf16.msra.mxu0 0
      %769 = vmatprep.subr.bf16.mxu0 0
      %770 = vmatpush2.bf16.msra.mxu0 0
      %771 = vmatprep.subr.bf16.mxu0 0
      %772 = vmatpush2.bf16.msra.mxu0 0
      %773 = vmatprep.subr.bf16.mxu0 0
      %774 = vmatpush2.bf16.msra.mxu0 0
      %775 = vmatprep.subr.bf16.mxu0 0
      %776 = vmatpush2.bf16.msra.mxu0 0
      %777 = vmatprep.mubr.bf16.mxu0 0
      %778 = vmatmul.mubr.bf16.gmra.mxu0 %v513
      %v779 = vpop.f32.mrf.mxu0
      %v780 = vadd.f32 %v560, %v779
      %v781 = vpop.f32.mrf.mxu0
      %v782 = vpop.f32.mrf.mxu0
      %v783 = vadd.f32 %v560, %v782
      %v784 = vpop.f32.mrf.mxu0
      %785 = vmatprep.mubr.bf16.mxu0 0
      %786 = vmatmul.mubr.bf16.gmra.mxu0 %v514
      %v787 = vpop.f32.mrf.mxu0
      %v788 = vadd.f32 %v560, %v787
      %v789 = vpop.f32.mrf.mxu0
      %v790 = vpop.f32.mrf.mxu0
      %v791 = vadd.f32 %v560, %v790
      %v792 = vpop.f32.mrf.mxu0
      %793 = vdwg.mxu0
      %v794 = vlaneseq
      %v795 = vshrl.u32 %v794, 7
      %v796 = vadd.s32 %v795, 8
      %v797 = vadd.s32 %v795, 16
      %v798 = vadd.s32 %v795, 24
      %v799 = vlaneseq
      %v800 = vand.u32 %v799, 127
      %vm801 = vcmp.le.s32.totalorder %v800, %v795
      %vm802 = vcmp.le.s32.totalorder %v800, %v796
      %vm803 = vcmp.le.s32.totalorder %v800, %v797
      %vm804 = vcmp.le.s32.totalorder %v800, %v798
      %v805 = vpack.c.bf16 %v731, %v727
      %v806 = vpack.c.bf16 %v741, %v737
      %v807 = vpack.c.bf16 %v733, %v729
      %v808 = vpack.c.bf16 %v743, %v739
      %v809 = vpack.c.bf16 %v783, %v780
      %v810 = vpack.c.bf16 %v791, %v788
      %vm811 = vcmask 261120
      %v813 = vsel %vm811, %v805, 0
      %v816 = vsel %vm811, %v806, 0
      %v819 = vsel %vm811, %v807, 0
      %v822 = vsel %vm811, %v808, 0
      %824 = vmatprep.subr.bf16.mxu0 0
      %825 = vmatpush1.bf16.xpose.msra.mxu0 0
      %826 = vmatprep.subr.bf16.mxu0 0
      %827 = vmatpush1.bf16.xpose.msra.mxu0 0
      %828 = vmatprep.subr.bf16.mxu0 0
      %829 = vmatpush1.bf16.xpose.msra.mxu0 0
      %830 = vmatprep.subr.bf16.mxu0 0
      %831 = vmatpush1.bf16.xpose.msra.mxu0 0
      %832 = vmatprep.subr.bf16.mxu0 0
      %833 = vmatpush1.bf16.xpose.msra.mxu0 0
      %834 = vmatprep.subr.bf16.mxu0 0
      %835 = vmatpush1.bf16.xpose.msra.mxu0 0
      %836 = vmatprep.subr.bf16.mxu0 0
      %837 = vmatpush1.bf16.xpose.msra.mxu0 %v822
      %838 = vmatprep.subr.bf16.mxu0 0
      %839 = vmatpush1.bf16.xpose.msra.mxu0 %v819
      %840 = vmatprep.subr.bf16.mxu0 0
      %841 = vmatpush2.bf16.xpose.msra.mxu0 0
      %842 = vmatprep.subr.bf16.mxu0 0
      %843 = vmatpush2.bf16.xpose.msra.mxu0 0
      %844 = vmatprep.subr.bf16.mxu0 0
      %845 = vmatpush2.bf16.xpose.msra.mxu0 0
      %846 = vmatprep.subr.bf16.mxu0 0
      %847 = vmatpush2.bf16.xpose.msra.mxu0 0
      %848 = vmatprep.subr.bf16.mxu0 0
      %849 = vmatpush2.bf16.xpose.msra.mxu0 0
      %850 = vmatprep.subr.bf16.mxu0 0
      %851 = vmatpush2.bf16.xpose.msra.mxu0 0
      %852 = vmatprep.subr.bf16.mxu0 0
      %853 = vmatpush2.bf16.xpose.msra.mxu0 0
      %854 = vmatprep.subr.bf16.mxu0 0
      %855 = vmatpush2.bf16.xpose.msra.mxu0 0
      %856 = vmatprep.mubr.bf16.mxu0 0
      %857 = vmatmul.mubr.bf16.gmra.mxu0 %v813
      %v858 = vpop.f32.mrf.mxu0
      %v859 = vadd.f32 0.0, %v858
      %v860 = vpop.f32.mrf.mxu0
      %v861 = vpop.f32.mrf.mxu0
      %v862 = vadd.f32 0.0, %v861
      %v863 = vpop.f32.mrf.mxu0
      %864 = vmatprep.mubr.bf16.mxu0 0
      %865 = vmatmul.mubr.bf16.gmra.mxu0 %v816
      %v866 = vpop.f32.mrf.mxu0
      %v867 = vadd.f32 0.0, %v866
      %v868 = vpop.f32.mrf.mxu0
      %v869 = vpop.f32.mrf.mxu0
      %v870 = vadd.f32 0.0, %v869
      %v871 = vpop.f32.mrf.mxu0
      %872 = vdwg.mxu0
      %v873 = vmul.f32 %v859, 0.17677669
      %v874 = vmul.f32 %v862, 0.17677669
      %v875 = vmul.f32 %v867, 0.17677669
      %v876 = vmul.f32 %v870, 0.17677669
      %v877 = vsel %vm801, %v873, -1e+30
      %v878 = vsel %vm802, %v874, -1e+30
      %v879 = vsel %vm803, %v875, -1e+30
      %v880 = vsel %vm804, %v876, -1e+30
      %v881 = vsel %vm811, %v877, -inf
      %882 = vmax.xlane.f32.xlu0 %v881
      %v883 = vpop.xlane.xlu0 %882
      %v884 = vsel %vm811, %v878, -inf
      %885 = vmax.xlane.f32.xlu0 %v884
      %v886 = vpop.xlane.xlu0 %885
      %v887 = vsel %vm811, %v879, -inf
      %888 = vmax.xlane.f32.xlu0 %v887
      %v889 = vpop.xlane.xlu0 %888
      %v890 = vsel %vm811, %v880, -inf
      %891 = vmax.xlane.f32.xlu0 %v890
      %v892 = vpop.xlane.xlu0 %891
      %v893 = vsub.f32 %v877, %v883
      %v894 = vsub.f32 %v878, %v886
      %v895 = vsub.f32 %v879, %v889
      %v896 = vsub.f32 %v880, %v892
      %v897 = vmul.f32 %v893, 1.442695
      %v898 = vpow.pop %v897
      %v899 = vmul.f32 %v894, 1.442695
      %v900 = vpow.pop %v899
      %v901 = vmul.f32 %v895, 1.442695
      %v902 = vpow.pop %v901
      %v903 = vmul.f32 %v896, 1.442695
      %v904 = vpow.pop %v903
      %v905 = vsel %vm811, %v898, 0.0
      %906 = vadd.xlane.f32.xlu0 %v905
      %v907 = vpop.xlane.xlu0 %906
      %v908 = vsel %vm811, %v900, 0.0
      %909 = vadd.xlane.f32.xlu0 %v908
      %v910 = vpop.xlane.xlu0 %909
      %v911 = vsel %vm811, %v902, 0.0
      %912 = vadd.xlane.f32.xlu0 %v911
      %v913 = vpop.xlane.xlu0 %912
      %v914 = vsel %vm811, %v904, 0.0
      %915 = vadd.xlane.f32.xlu0 %v914
      %v916 = vpop.xlane.xlu0 %915
      %v917 = vrcp.pop %v907
      %v918 = vrcp.pop %v910
      %v919 = vrcp.pop %v913
      %v920 = vrcp.pop %v916
      %v921 = vmul.f32 %v898, %v917
      %v922 = vmul.f32 %v900, %v918
      %v923 = vmul.f32 %v902, %v919
      %v924 = vmul.f32 %v904, %v920
      %v925 = vpack.c.bf16 %v922, %v921
      %v926 = vpack.c.bf16 %v924, %v923
      %v928 = vsel %vm811, %v925, 0
      %v931 = vsel %vm811, %v926, 0
      %933 = vmatprep.subr.bf16.mxu0 0
      %934 = vmatpush1.bf16.msra.mxu0 0
      %935 = vmatprep.subr.bf16.mxu0 0
      %936 = vmatpush1.bf16.msra.mxu0 0
      %937 = vmatprep.subr.bf16.mxu0 0
      %938 = vmatpush1.bf16.msra.mxu0 0
      %939 = vmatprep.subr.bf16.mxu0 0
      %940 = vmatpush1.bf16.msra.mxu0 0
      %941 = vmatprep.subr.bf16.mxu0 0
      %942 = vmatpush1.bf16.msra.mxu0 0
      %943 = vmatprep.subr.bf16.mxu0 0
      %944 = vmatpush1.bf16.msra.mxu0 0
      %945 = vmatprep.subr.bf16.mxu0 0
      %946 = vmatpush1.bf16.msra.mxu0 %v810
      %947 = vmatprep.subr.bf16.mxu0 0
      %948 = vmatpush1.bf16.msra.mxu0 %v809
      %949 = vmatprep.subr.bf16.mxu0 0
      %950 = vmatpush2.bf16.msra.mxu0 0
      %951 = vmatprep.subr.bf16.mxu0 0
      %952 = vmatpush2.bf16.msra.mxu0 0
      %953 = vmatprep.subr.bf16.mxu0 0
      %954 = vmatpush2.bf16.msra.mxu0 0
      %955 = vmatprep.subr.bf16.mxu0 0
      %956 = vmatpush2.bf16.msra.mxu0 0
      %957 = vmatprep.subr.bf16.mxu0 0
      %958 = vmatpush2.bf16.msra.mxu0 0
      %959 = vmatprep.subr.bf16.mxu0 0
      %960 = vmatpush2.bf16.msra.mxu0 0
      %961 = vmatprep.subr.bf16.mxu0 0
      %962 = vmatpush2.bf16.msra.mxu0 0
      %963 = vmatprep.subr.bf16.mxu0 0
      %964 = vmatpush2.bf16.msra.mxu0 0
      %965 = vmatprep.mubr.bf16.mxu0 0
      %966 = vmatmul.mubr.bf16.gmra.mxu0 %v928
      %v967 = vpop.f32.mrf.mxu0
      %v968 = vadd.f32 0.0, %v967
      %v969 = vpop.f32.mrf.mxu0
      %v970 = vpop.f32.mrf.mxu0
      %v971 = vadd.f32 0.0, %v970
      %v972 = vpop.f32.mrf.mxu0
      %973 = vmatprep.mubr.bf16.mxu0 0
      %974 = vmatmul.mubr.bf16.gmra.mxu0 %v931
      %v975 = vpop.f32.mrf.mxu0
      %v976 = vadd.f32 0.0, %v975
      %v977 = vpop.f32.mrf.mxu0
      %v978 = vpop.f32.mrf.mxu0
      %v979 = vadd.f32 0.0, %v978
      %v980 = vpop.f32.mrf.mxu0
      %981 = vdwg.mxu0
      %v982 = vld [vmem:[%s5] sm:$0xf]
      %v983 = vld [vmem:[%s5 + $0x4] sm:$0xf]
      %v984 = vld [vmem:[%s5 + $0x8] sm:$0xf]
      %v985 = vld [vmem:[%s5 + $0xc] sm:$0xf]
      %v986 = vpack.c.bf16 %v971, %v968
      %v987 = vpack.c.bf16 %v979, %v976
      %990 = vrot.lane.b32.xlu0 %v805, 96
      %v991 = vpop.permute.xlu0 %990
      %992 = vrot.lane.b32.xlu0 %v806, 96
      %v993 = vpop.permute.xlu0 %992
      %996 = vrot.lane.b32.xlu0 %v807, 96
      %v997 = vpop.permute.xlu0 %996
      %998 = vrot.lane.b32.xlu0 %v808, 96
      %v999 = vpop.permute.xlu0 %998
      %v1001 = vsel %vm811, %v991, 0
      %v1004 = vsel %vm811, %v993, 0
      %v1007 = vsel %vm811, %v997, 0
      %v1010 = vsel %vm811, %v999, 0
      %1012 = vmatprep.subr.bf16.mxu0 0
      %1013 = vmatpush1.bf16.xpose.msra.mxu0 0
      %1014 = vmatprep.subr.bf16.mxu0 0
      %1015 = vmatpush1.bf16.xpose.msra.mxu0 0
      %1016 = vmatprep.subr.bf16.mxu0 0
      %1017 = vmatpush1.bf16.xpose.msra.mxu0 0
      %1018 = vmatprep.subr.bf16.mxu0 0
      %1019 = vmatpush1.bf16.xpose.msra.mxu0 0
      %1020 = vmatprep.subr.bf16.mxu0 0
      %1021 = vmatpush1.bf16.xpose.msra.mxu0 0
      %1022 = vmatprep.subr.bf16.mxu0 0
      %1023 = vmatpush1.bf16.xpose.msra.mxu0 0
      %1024 = vmatprep.subr.bf16.mxu0 0
      %1025 = vmatpush1.bf16.xpose.msra.mxu0 %v1010
      %1026 = vmatprep.subr.bf16.mxu0 0
      %1027 = vmatpush1.bf16.xpose.msra.mxu0 %v1007
      %1028 = vmatprep.subr.bf16.mxu0 0
      %1029 = vmatpush2.bf16.xpose.msra.mxu0 0
      %1030 = vmatprep.subr.bf16.mxu0 0
      %1031 = vmatpush2.bf16.xpose.msra.mxu0 0
      %1032 = vmatprep.subr.bf16.mxu0 0
      %1033 = vmatpush2.bf16.xpose.msra.mxu0 0
      %1034 = vmatprep.subr.bf16.mxu0 0
      %1035 = vmatpush2.bf16.xpose.msra.mxu0 0
      %1036 = vmatprep.subr.bf16.mxu0 0
      %1037 = vmatpush2.bf16.xpose.msra.mxu0 0
      %1038 = vmatprep.subr.bf16.mxu0 0
      %1039 = vmatpush2.bf16.xpose.msra.mxu0 0
      %1040 = vmatprep.subr.bf16.mxu0 0
      %1041 = vmatpush2.bf16.xpose.msra.mxu0 0
      %1042 = vmatprep.subr.bf16.mxu0 0
      %1043 = vmatpush2.bf16.xpose.msra.mxu0 0
      %1044 = vmatprep.mubr.bf16.mxu0 0
      %1045 = vmatmul.mubr.bf16.gmra.mxu0 %v1001
      %v1046 = vpop.f32.mrf.mxu0
      %v1047 = vadd.f32 0.0, %v1046
      %v1048 = vpop.f32.mrf.mxu0
      %v1049 = vpop.f32.mrf.mxu0
      %v1050 = vadd.f32 0.0, %v1049
      %v1051 = vpop.f32.mrf.mxu0
      %1052 = vmatprep.mubr.bf16.mxu0 0
      %1053 = vmatmul.mubr.bf16.gmra.mxu0 %v1004
      %v1054 = vpop.f32.mrf.mxu0
      %v1055 = vadd.f32 0.0, %v1054
      %v1056 = vpop.f32.mrf.mxu0
      %v1057 = vpop.f32.mrf.mxu0
      %v1058 = vadd.f32 0.0, %v1057
      %v1059 = vpop.f32.mrf.mxu0
      %1060 = vdwg.mxu0
      %v1061 = vmul.f32 %v1047, 0.17677669
      %v1062 = vmul.f32 %v1050, 0.17677669
      %v1063 = vmul.f32 %v1055, 0.17677669
      %v1064 = vmul.f32 %v1058, 0.17677669
      %v1065 = vsel %vm801, %v1061, -1e+30
      %v1066 = vsel %vm802, %v1062, -1e+30
      %v1067 = vsel %vm803, %v1063, -1e+30
      %v1068 = vsel %vm804, %v1064, -1e+30
      %v1069 = vsel %vm811, %v1065, -inf
      %1070 = vmax.xlane.f32.xlu0 %v1069
      %v1071 = vpop.xlane.xlu0 %1070
      %v1072 = vsel %vm811, %v1066, -inf
      %1073 = vmax.xlane.f32.xlu0 %v1072
      %v1074 = vpop.xlane.xlu0 %1073
      %v1075 = vsel %vm811, %v1067, -inf
      %1076 = vmax.xlane.f32.xlu0 %v1075
      %v1077 = vpop.xlane.xlu0 %1076
      %v1078 = vsel %vm811, %v1068, -inf
      %1079 = vmax.xlane.f32.xlu0 %v1078
      %v1080 = vpop.xlane.xlu0 %1079
      %v1081 = vsub.f32 %v1065, %v1071
      %v1082 = vsub.f32 %v1066, %v1074
      %v1083 = vsub.f32 %v1067, %v1077
      %v1084 = vsub.f32 %v1068, %v1080
      %v1085 = vmul.f32 %v1081, 1.442695
      %v1086 = vpow.pop %v1085
      %v1087 = vmul.f32 %v1082, 1.442695
      %v1088 = vpow.pop %v1087
      %v1089 = vmul.f32 %v1083, 1.442695
      %v1090 = vpow.pop %v1089
      %v1091 = vmul.f32 %v1084, 1.442695
      %v1092 = vpow.pop %v1091
      %v1093 = vsel %vm811, %v1086, 0.0
      %1094 = vadd.xlane.f32.xlu0 %v1093
      %v1095 = vpop.xlane.xlu0 %1094
      %v1096 = vsel %vm811, %v1088, 0.0
      %1097 = vadd.xlane.f32.xlu0 %v1096
      %v1098 = vpop.xlane.xlu0 %1097
      %v1099 = vsel %vm811, %v1090, 0.0
      %1100 = vadd.xlane.f32.xlu0 %v1099
      %v1101 = vpop.xlane.xlu0 %1100
      %v1102 = vsel %vm811, %v1092, 0.0
      %1103 = vadd.xlane.f32.xlu0 %v1102
      %v1104 = vpop.xlane.xlu0 %1103
      %v1105 = vrcp.pop %v1095
      %v1106 = vrcp.pop %v1098
      %v1107 = vrcp.pop %v1101
      %v1108 = vrcp.pop %v1104
      %v1109 = vmul.f32 %v1086, %v1105
      %v1110 = vmul.f32 %v1088, %v1106
      %v1111 = vmul.f32 %v1090, %v1107
      %v1112 = vmul.f32 %v1092, %v1108
      %v1113 = vpack.c.bf16 %v1110, %v1109
      %v1114 = vpack.c.bf16 %v1112, %v1111
      %1117 = vrot.lane.b32.xlu0 %v809, 96
      %v1118 = vpop.permute.xlu0 %1117
      %1119 = vrot.lane.b32.xlu0 %v810, 96
      %v1120 = vpop.permute.xlu0 %1119
      %v1124 = vsel %vm811, %v1113, 0
      %v1127 = vsel %vm811, %v1114, 0
      %1129 = vmatprep.subr.bf16.mxu0 0
      %1130 = vmatpush1.bf16.msra.mxu0 0
      %1131 = vmatprep.subr.bf16.mxu0 0
      %1132 = vmatpush1.bf16.msra.mxu0 0
      %1133 = vmatprep.subr.bf16.mxu0 0
      %1134 = vmatpush1.bf16.msra.mxu0 0
      %1135 = vmatprep.subr.bf16.mxu0 0
      %1136 = vmatpush1.bf16.msra.mxu0 0
      %1137 = vmatprep.subr.bf16.mxu0 0
      %1138 = vmatpush1.bf16.msra.mxu0 0
      %1139 = vmatprep.subr.bf16.mxu0 0
      %1140 = vmatpush1.bf16.msra.mxu0 0
      %1141 = vmatprep.subr.bf16.mxu0 0
      %1142 = vmatpush1.bf16.msra.mxu0 %v1120
      %1143 = vmatprep.subr.bf16.mxu0 0
      %1144 = vmatpush1.bf16.msra.mxu0 %v1118
      %1145 = vmatprep.subr.bf16.mxu0 0
      %1146 = vmatpush2.bf16.msra.mxu0 0
      %1147 = vmatprep.subr.bf16.mxu0 0
      %1148 = vmatpush2.bf16.msra.mxu0 0
      %1149 = vmatprep.subr.bf16.mxu0 0
      %1150 = vmatpush2.bf16.msra.mxu0 0
      %1151 = vmatprep.subr.bf16.mxu0 0
      %1152 = vmatpush2.bf16.msra.mxu0 0
      %1153 = vmatprep.subr.bf16.mxu0 0
      %1154 = vmatpush2.bf16.msra.mxu0 0
      %1155 = vmatprep.subr.bf16.mxu0 0
      %1156 = vmatpush2.bf16.msra.mxu0 0
      %1157 = vmatprep.subr.bf16.mxu0 0
      %1158 = vmatpush2.bf16.msra.mxu0 0
      %1159 = vmatprep.subr.bf16.mxu0 0
      %1160 = vmatpush2.bf16.msra.mxu0 0
      %1161 = vmatprep.mubr.bf16.mxu0 0
      %1162 = vmatmul.mubr.bf16.gmra.mxu0 %v1124
      %v1163 = vpop.f32.mrf.mxu0
      %v1164 = vadd.f32 0.0, %v1163
      %v1165 = vpop.f32.mrf.mxu0
      %v1166 = vpop.f32.mrf.mxu0
      %v1167 = vadd.f32 0.0, %v1166
      %v1168 = vpop.f32.mrf.mxu0
      %1169 = vmatprep.mubr.bf16.mxu0 0
      %1170 = vmatmul.mubr.bf16.gmra.mxu0 %v1127
      %v1171 = vpop.f32.mrf.mxu0
      %v1172 = vadd.f32 0.0, %v1171
      %v1173 = vpop.f32.mrf.mxu0
      %v1174 = vpop.f32.mrf.mxu0
      %v1175 = vadd.f32 0.0, %v1174
      %v1176 = vpop.f32.mrf.mxu0
      %1177 = vdwg.mxu0
      %v1178 = vld [vmem:[%s5 + $0x10] sm:$0xf]
      %v1179 = vld [vmem:[%s5 + $0x14] sm:$0xf]
      %v1180 = vld [vmem:[%s5 + $0x18] sm:$0xf]
      %v1181 = vld [vmem:[%s5 + $0x1c] sm:$0xf]
      %v1182 = vpack.c.bf16 %v1167, %v1164
      %v1183 = vpack.c.bf16 %v1175, %v1172
      %v1188 = vunpack.c.l.b16 %v1178
      %v1189 = vunpack.c.l.b16 %v1179
      %v1190 = vunpack.c.l.b16 %v1180
      %v1191 = vunpack.c.l.b16 %v1181
      %v1192 = vpack.c.b16 %v1189, %v1188
      %v1193 = vpack.c.b16 %v1191, %v1190
      %v1197 = vsel %vm811, %v1182, 0
      %v1200 = vsel %vm811, %v1183, 0
      %1202 = vmatprep.subr.bf16.mxu0 0
      %1203 = vmatpush1.bf16.msra.mxu0 0
      %1204 = vmatprep.subr.bf16.mxu0 0
      %1205 = vmatpush1.bf16.msra.mxu0 0
      %1206 = vmatprep.subr.bf16.mxu0 0
      %1207 = vmatpush1.bf16.msra.mxu0 0
      %1208 = vmatprep.subr.bf16.mxu0 0
      %1209 = vmatpush1.bf16.msra.mxu0 0
      %1210 = vmatprep.subr.bf16.mxu0 0
      %1211 = vmatpush1.bf16.msra.mxu0 0
      %1212 = vmatprep.subr.bf16.mxu0 0
      %1213 = vmatpush1.bf16.msra.mxu0 0
      %1214 = vmatprep.subr.bf16.mxu0 0
      %1215 = vmatpush1.bf16.msra.mxu0 %v1193
      %1216 = vmatprep.subr.bf16.mxu0 0
      %1217 = vmatpush1.bf16.msra.mxu0 %v1192
      %1218 = vmatprep.subr.bf16.mxu0 0
      %1219 = vmatpush2.bf16.msra.mxu0 0
      %1220 = vmatprep.subr.bf16.mxu0 0
      %1221 = vmatpush2.bf16.msra.mxu0 0
      %1222 = vmatprep.subr.bf16.mxu0 0
      %1223 = vmatpush2.bf16.msra.mxu0 0
      %1224 = vmatprep.subr.bf16.mxu0 0
      %1225 = vmatpush2.bf16.msra.mxu0 0
      %1226 = vmatprep.subr.bf16.mxu0 0
      %1227 = vmatpush2.bf16.msra.mxu0 0
      %1228 = vmatprep.subr.bf16.mxu0 0
      %1229 = vmatpush2.bf16.msra.mxu0 0
      %1230 = vmatprep.subr.bf16.mxu0 0
      %1231 = vmatpush2.bf16.msra.mxu0 0
      %1232 = vmatprep.subr.bf16.mxu0 0
      %1233 = vmatpush2.bf16.msra.mxu0 0
      %1234 = vmatprep.mubr.bf16.mxu0 0
      %1235 = vmatmul.mubr.bf16.gmra.mxu0 %v1197
      %v1236 = vpop.f32.mrf.mxu0
      %v1237 = vadd.f32 0.0, %v1236
      %v1238 = vpop.f32.mrf.mxu0
      %v1239 = vpop.f32.mrf.mxu0
      %v1240 = vadd.f32 0.0, %v1239
      %v1241 = vpop.f32.mrf.mxu0
      %1242 = vmatprep.mubr.bf16.mxu0 0
      %1243 = vmatmul.mubr.bf16.gmra.mxu0 %v1200
      %v1244 = vpop.f32.mrf.mxu0
      %v1245 = vadd.f32 0.0, %v1244
      %v1246 = vpop.f32.mrf.mxu0
      %v1247 = vpop.f32.mrf.mxu0
      %v1248 = vadd.f32 0.0, %v1247
      %v1249 = vpop.f32.mrf.mxu0
      %1250 = vdwg.mxu0
      %v1255 = vunpack.c.l.b16 %v982
      %v1256 = vunpack.c.l.b16 %v983
      %v1257 = vunpack.c.l.b16 %v984
      %v1258 = vunpack.c.l.b16 %v985
      %v1259 = vpack.c.b16 %v1256, %v1255
      %v1260 = vpack.c.b16 %v1258, %v1257
      %v1264 = vsel %vm811, %v986, 0
      %v1267 = vsel %vm811, %v987, 0
      %1269 = vmatprep.subr.bf16.mxu0 0
      %1270 = vmatpush1.bf16.msra.mxu0 0
      %1271 = vmatprep.subr.bf16.mxu0 0
      %1272 = vmatpush1.bf16.msra.mxu0 0
      %1273 = vmatprep.subr.bf16.mxu0 0
      %1274 = vmatpush1.bf16.msra.mxu0 0
      %1275 = vmatprep.subr.bf16.mxu0 0
      %1276 = vmatpush1.bf16.msra.mxu0 0
      %1277 = vmatprep.subr.bf16.mxu0 0
      %1278 = vmatpush1.bf16.msra.mxu0 0
      %1279 = vmatprep.subr.bf16.mxu0 0
      %1280 = vmatpush1.bf16.msra.mxu0 0
      %1281 = vmatprep.subr.bf16.mxu0 0
      %1282 = vmatpush1.bf16.msra.mxu0 %v1260
      %1283 = vmatprep.subr.bf16.mxu0 0
      %1284 = vmatpush1.bf16.msra.mxu0 %v1259
      %1285 = vmatprep.subr.bf16.mxu0 0
      %1286 = vmatpush2.bf16.msra.mxu0 0
      %1287 = vmatprep.subr.bf16.mxu0 0
      %1288 = vmatpush2.bf16.msra.mxu0 0
      %1289 = vmatprep.subr.bf16.mxu0 0
      %1290 = vmatpush2.bf16.msra.mxu0 0
      %1291 = vmatprep.subr.bf16.mxu0 0
      %1292 = vmatpush2.bf16.msra.mxu0 0
      %1293 = vmatprep.subr.bf16.mxu0 0
      %1294 = vmatpush2.bf16.msra.mxu0 0
      %1295 = vmatprep.subr.bf16.mxu0 0
      %1296 = vmatpush2.bf16.msra.mxu0 0
      %1297 = vmatprep.subr.bf16.mxu0 0
      %1298 = vmatpush2.bf16.msra.mxu0 0
      %1299 = vmatprep.subr.bf16.mxu0 0
      %1300 = vmatpush2.bf16.msra.mxu0 0
      %1301 = vmatprep.mubr.bf16.mxu0 0
      %1302 = vmatmul.mubr.bf16.gmra.mxu0 %v1264
      %v1303 = vpop.f32.mrf.mxu0
      %v1304 = vadd.f32 %v1237, %v1303
      %v1305 = vpop.f32.mrf.mxu0
      %v1306 = vpop.f32.mrf.mxu0
      %v1307 = vadd.f32 %v1240, %v1306
      %v1308 = vpop.f32.mrf.mxu0
      %1309 = vmatprep.mubr.bf16.mxu0 0
      %1310 = vmatmul.mubr.bf16.gmra.mxu0 %v1267
      %v1311 = vpop.f32.mrf.mxu0
      %v1312 = vadd.f32 %v1245, %v1311
      %v1313 = vpop.f32.mrf.mxu0
      %v1314 = vpop.f32.mrf.mxu0
      %v1315 = vadd.f32 %v1248, %v1314
      %v1316 = vpop.f32.mrf.mxu0
      %1317 = vdwg.mxu0
      %1318 = vrot.lane.b32.xlu0 %v805, 64
      %v1319 = vpop.permute.xlu0 %1318
      %1320 = vrot.lane.b32.xlu0 %v806, 64
      %v1321 = vpop.permute.xlu0 %1320
      %1322 = vrot.lane.b32.xlu0 %v807, 64
      %v1323 = vpop.permute.xlu0 %1322
      %1324 = vrot.lane.b32.xlu0 %v808, 64
      %v1325 = vpop.permute.xlu0 %1324
      %v1327 = vsel %vm811, %v1319, 0
      %v1330 = vsel %vm811, %v1321, 0
      %v1333 = vsel %vm811, %v1323, 0
      %v1336 = vsel %vm811, %v1325, 0
      %1338 = vmatprep.subr.bf16.mxu0 0
      %1339 = vmatpush1.bf16.xpose.msra.mxu0 0
      %1340 = vmatprep.subr.bf16.mxu0 0
      %1341 = vmatpush1.bf16.xpose.msra.mxu0 0
      %1342 = vmatprep.subr.bf16.mxu0 0
      %1343 = vmatpush1.bf16.xpose.msra.mxu0 0
      %1344 = vmatprep.subr.bf16.mxu0 0
      %1345 = vmatpush1.bf16.xpose.msra.mxu0 0
      %1346 = vmatprep.subr.bf16.mxu0 0
      %1347 = vmatpush1.bf16.xpose.msra.mxu0 0
      %1348 = vmatprep.subr.bf16.mxu0 0
      %1349 = vmatpush1.bf16.xpose.msra.mxu0 0
      %1350 = vmatprep.subr.bf16.mxu0 0
      %1351 = vmatpush1.bf16.xpose.msra.mxu0 %v1336
      %1352 = vmatprep.subr.bf16.mxu0 0
      %1353 = vmatpush1.bf16.xpose.msra.mxu0 %v1333
      %1354 = vmatprep.subr.bf16.mxu0 0
      %1355 = vmatpush2.bf16.xpose.msra.mxu0 0
      %1356 = vmatprep.subr.bf16.mxu0 0
      %1357 = vmatpush2.bf16.xpose.msra.mxu0 0
      %1358 = vmatprep.subr.bf16.mxu0 0
      %1359 = vmatpush2.bf16.xpose.msra.mxu0 0
      %1360 = vmatprep.subr.bf16.mxu0 0
      %1361 = vmatpush2.bf16.xpose.msra.mxu0 0
      %1362 = vmatprep.subr.bf16.mxu0 0
      %1363 = vmatpush2.bf16.xpose.msra.mxu0 0
      %1364 = vmatprep.subr.bf16.mxu0 0
      %1365 = vmatpush2.bf16.xpose.msra.mxu0 0
      %1366 = vmatprep.subr.bf16.mxu0 0
      %1367 = vmatpush2.bf16.xpose.msra.mxu0 0
      %1368 = vmatprep.subr.bf16.mxu0 0
      %1369 = vmatpush2.bf16.xpose.msra.mxu0 0
      %1370 = vmatprep.mubr.bf16.mxu0 0
      %1371 = vmatmul.mubr.bf16.gmra.mxu0 %v1327
      %v1372 = vpop.f32.mrf.mxu0
      %v1373 = vadd.f32 0.0, %v1372
      %v1374 = vpop.f32.mrf.mxu0
      %v1375 = vpop.f32.mrf.mxu0
      %v1376 = vadd.f32 0.0, %v1375
      %v1377 = vpop.f32.mrf.mxu0
      %1378 = vmatprep.mubr.bf16.mxu0 0
      %1379 = vmatmul.mubr.bf16.gmra.mxu0 %v1330
      %v1380 = vpop.f32.mrf.mxu0
      %v1381 = vadd.f32 0.0, %v1380
      %v1382 = vpop.f32.mrf.mxu0
      %v1383 = vpop.f32.mrf.mxu0
      %v1384 = vadd.f32 0.0, %v1383
      %v1385 = vpop.f32.mrf.mxu0
      %1386 = vdwg.mxu0
      %v1387 = vmul.f32 %v1373, 0.17677669
      %v1388 = vmul.f32 %v1376, 0.17677669
      %v1389 = vmul.f32 %v1381, 0.17677669
      %v1390 = vmul.f32 %v1384, 0.17677669
      %v1391 = vsel %vm801, %v1387, -1e+30
      %v1392 = vsel %vm802, %v1388, -1e+30
      %v1393 = vsel %vm803, %v1389, -1e+30
      %v1394 = vsel %vm804, %v1390, -1e+30
      %v1395 = vsel %vm811, %v1391, -inf
      %1396 = vmax.xlane.f32.xlu0 %v1395
      %v1397 = vpop.xlane.xlu0 %1396
      %v1398 = vsel %vm811, %v1392, -inf
      %1399 = vmax.xlane.f32.xlu0 %v1398
      %v1400 = vpop.xlane.xlu0 %1399
      %v1401 = vsel %vm811, %v1393, -inf
      %1402 = vmax.xlane.f32.xlu0 %v1401
      %v1403 = vpop.xlane.xlu0 %1402
      %v1404 = vsel %vm811, %v1394, -inf
      %1405 = vmax.xlane.f32.xlu0 %v1404
      %v1406 = vpop.xlane.xlu0 %1405
      %v1407 = vsub.f32 %v1391, %v1397
      %v1408 = vsub.f32 %v1392, %v1400
      %v1409 = vsub.f32 %v1393, %v1403
      %v1410 = vsub.f32 %v1394, %v1406
      %v1411 = vmul.f32 %v1407, 1.442695
      %v1412 = vpow.pop %v1411
      %v1413 = vmul.f32 %v1408, 1.442695
      %v1414 = vpow.pop %v1413
      %v1415 = vmul.f32 %v1409, 1.442695
      %v1416 = vpow.pop %v1415
      %v1417 = vmul.f32 %v1410, 1.442695
      %v1418 = vpow.pop %v1417
      %v1419 = vsel %vm811, %v1412, 0.0
      %1420 = vadd.xlane.f32.xlu0 %v1419
      %v1421 = vpop.xlane.xlu0 %1420
      %v1422 = vsel %vm811, %v1414, 0.0
      %1423 = vadd.xlane.f32.xlu0 %v1422
      %v1424 = vpop.xlane.xlu0 %1423
      %v1425 = vsel %vm811, %v1416, 0.0
      %1426 = vadd.xlane.f32.xlu0 %v1425
      %v1427 = vpop.xlane.xlu0 %1426
      %v1428 = vsel %vm811, %v1418, 0.0
      %1429 = vadd.xlane.f32.xlu0 %v1428
      %v1430 = vpop.xlane.xlu0 %1429
      %v1431 = vrcp.pop %v1421
      %v1432 = vrcp.pop %v1424
      %v1433 = vrcp.pop %v1427
      %v1434 = vrcp.pop %v1430
      %v1435 = vmul.f32 %v1412, %v1431
      %v1436 = vmul.f32 %v1414, %v1432
      %v1437 = vmul.f32 %v1416, %v1433
      %v1438 = vmul.f32 %v1418, %v1434
      %v1439 = vpack.c.bf16 %v1436, %v1435
      %v1440 = vpack.c.bf16 %v1438, %v1437
      %1441 = vrot.lane.b32.xlu0 %v809, 64
      %v1442 = vpop.permute.xlu0 %1441
      %1443 = vrot.lane.b32.xlu0 %v810, 64
      %v1444 = vpop.permute.xlu0 %1443
      %v1448 = vsel %vm811, %v1439, 0
      %v1451 = vsel %vm811, %v1440, 0
      %1453 = vmatprep.subr.bf16.mxu0 0
      %1454 = vmatpush1.bf16.msra.mxu0 0
      %1455 = vmatprep.subr.bf16.mxu0 0
      %1456 = vmatpush1.bf16.msra.mxu0 0
      %1457 = vmatprep.subr.bf16.mxu0 0
      %1458 = vmatpush1.bf16.msra.mxu0 0
      %1459 = vmatprep.subr.bf16.mxu0 0
      %1460 = vmatpush1.bf16.msra.mxu0 0
      %1461 = vmatprep.subr.bf16.mxu0 0
      %1462 = vmatpush1.bf16.msra.mxu0 0
      %1463 = vmatprep.subr.bf16.mxu0 0
      %1464 = vmatpush1.bf16.msra.mxu0 0
      %1465 = vmatprep.subr.bf16.mxu0 0
      %1466 = vmatpush1.bf16.msra.mxu0 %v1444
      %1467 = vmatprep.subr.bf16.mxu0 0
      %1468 = vmatpush1.bf16.msra.mxu0 %v1442
      %1469 = vmatprep.subr.bf16.mxu0 0
      %1470 = vmatpush2.bf16.msra.mxu0 0
      %1471 = vmatprep.subr.bf16.mxu0 0
      %1472 = vmatpush2.bf16.msra.mxu0 0
      %1473 = vmatprep.subr.bf16.mxu0 0
      %1474 = vmatpush2.bf16.msra.mxu0 0
      %1475 = vmatprep.subr.bf16.mxu0 0
      %1476 = vmatpush2.bf16.msra.mxu0 0
      %1477 = vmatprep.subr.bf16.mxu0 0
      %1478 = vmatpush2.bf16.msra.mxu0 0
      %1479 = vmatprep.subr.bf16.mxu0 0
      %1480 = vmatpush2.bf16.msra.mxu0 0
      %1481 = vmatprep.subr.bf16.mxu0 0
      %1482 = vmatpush2.bf16.msra.mxu0 0
      %1483 = vmatprep.subr.bf16.mxu0 0
      %1484 = vmatpush2.bf16.msra.mxu0 0
      %1485 = vmatprep.mubr.bf16.mxu0 0
      %1486 = vmatmul.mubr.bf16.gmra.mxu0 %v1448
      %v1487 = vpop.f32.mrf.mxu0
      %v1488 = vadd.f32 0.0, %v1487
      %v1489 = vpop.f32.mrf.mxu0
      %v1490 = vpop.f32.mrf.mxu0
      %v1491 = vadd.f32 0.0, %v1490
      %v1492 = vpop.f32.mrf.mxu0
      %1493 = vmatprep.mubr.bf16.mxu0 0
      %1494 = vmatmul.mubr.bf16.gmra.mxu0 %v1451
      %v1495 = vpop.f32.mrf.mxu0
      %v1496 = vadd.f32 0.0, %v1495
      %v1497 = vpop.f32.mrf.mxu0
      %v1498 = vpop.f32.mrf.mxu0
      %v1499 = vadd.f32 0.0, %v1498
      %v1500 = vpop.f32.mrf.mxu0
      %1501 = vdwg.mxu0
      %v1502 = vld [vmem:[%s5 + $0x20] sm:$0xf]
      %v1503 = vld [vmem:[%s5 + $0x24] sm:$0xf]
      %v1504 = vld [vmem:[%s5 + $0x28] sm:$0xf]
      %v1505 = vld [vmem:[%s5 + $0x2c] sm:$0xf]
      %v1506 = vpack.c.bf16 %v1491, %v1488
      %v1507 = vpack.c.bf16 %v1499, %v1496
      %v1512 = vunpack.c.l.b16 %v1502
      %v1513 = vunpack.c.l.b16 %v1503
      %v1514 = vunpack.c.l.b16 %v1504
      %v1515 = vunpack.c.l.b16 %v1505
      %v1516 = vpack.c.b16 %v1513, %v1512
      %v1517 = vpack.c.b16 %v1515, %v1514
      %v1521 = vsel %vm811, %v1506, 0
      %v1524 = vsel %vm811, %v1507, 0
      %1526 = vmatprep.subr.bf16.mxu0 0
      %1527 = vmatpush1.bf16.msra.mxu0 0
      %1528 = vmatprep.subr.bf16.mxu0 0
      %1529 = vmatpush1.bf16.msra.mxu0 0
      %1530 = vmatprep.subr.bf16.mxu0 0
      %1531 = vmatpush1.bf16.msra.mxu0 0
      %1532 = vmatprep.subr.bf16.mxu0 0
      %1533 = vmatpush1.bf16.msra.mxu0 0
      %1534 = vmatprep.subr.bf16.mxu0 0
      %1535 = vmatpush1.bf16.msra.mxu0 0
      %1536 = vmatprep.subr.bf16.mxu0 0
      %1537 = vmatpush1.bf16.msra.mxu0 0
      %1538 = vmatprep.subr.bf16.mxu0 0
      %1539 = vmatpush1.bf16.msra.mxu0 %v1517
      %1540 = vmatprep.subr.bf16.mxu0 0
      %1541 = vmatpush1.bf16.msra.mxu0 %v1516
      %1542 = vmatprep.subr.bf16.mxu0 0
      %1543 = vmatpush2.bf16.msra.mxu0 0
      %1544 = vmatprep.subr.bf16.mxu0 0
      %1545 = vmatpush2.bf16.msra.mxu0 0
      %1546 = vmatprep.subr.bf16.mxu0 0
      %1547 = vmatpush2.bf16.msra.mxu0 0
      %1548 = vmatprep.subr.bf16.mxu0 0
      %1549 = vmatpush2.bf16.msra.mxu0 0
      %1550 = vmatprep.subr.bf16.mxu0 0
      %1551 = vmatpush2.bf16.msra.mxu0 0
      %1552 = vmatprep.subr.bf16.mxu0 0
      %1553 = vmatpush2.bf16.msra.mxu0 0
      %1554 = vmatprep.subr.bf16.mxu0 0
      %1555 = vmatpush2.bf16.msra.mxu0 0
      %1556 = vmatprep.subr.bf16.mxu0 0
      %1557 = vmatpush2.bf16.msra.mxu0 0
      %1558 = vmatprep.mubr.bf16.mxu0 0
      %1559 = vmatmul.mubr.bf16.gmra.mxu0 %v1521
      %v1560 = vpop.f32.mrf.mxu0
      %v1561 = vadd.f32 0.0, %v1560
      %v1562 = vpop.f32.mrf.mxu0
      %v1563 = vpop.f32.mrf.mxu0
      %v1564 = vadd.f32 0.0, %v1563
      %v1565 = vpop.f32.mrf.mxu0
      %1566 = vmatprep.mubr.bf16.mxu0 0
      %1567 = vmatmul.mubr.bf16.gmra.mxu0 %v1524
      %v1568 = vpop.f32.mrf.mxu0
      %v1569 = vadd.f32 0.0, %v1568
      %v1570 = vpop.f32.mrf.mxu0
      %v1571 = vpop.f32.mrf.mxu0
      %v1572 = vadd.f32 0.0, %v1571
      %v1573 = vpop.f32.mrf.mxu0
      %1574 = vdwg.mxu0
      %v1575 = vadd.f32 %v1304, %v1561
      %v1576 = vadd.f32 %v1307, %v1564
      %v1577 = vadd.f32 %v1312, %v1569
      %v1578 = vadd.f32 %v1315, %v1572
      %1579 = vrot.lane.b32.xlu0 %v805, 32
      %v1580 = vpop.permute.xlu0 %1579
      %1581 = vrot.lane.b32.xlu0 %v806, 32
      %v1582 = vpop.permute.xlu0 %1581
      %1583 = vrot.lane.b32.xlu0 %v807, 32
      %v1584 = vpop.permute.xlu0 %1583
      %1585 = vrot.lane.b32.xlu0 %v808, 32
      %v1586 = vpop.permute.xlu0 %1585
      %v1588 = vsel %vm811, %v1580, 0
      %v1591 = vsel %vm811, %v1582, 0
      %v1594 = vsel %vm811, %v1584, 0
      %v1597 = vsel %vm811, %v1586, 0
      %1599 = vmatprep.subr.bf16.mxu0 0
      %1600 = vmatpush1.bf16.xpose.msra.mxu0 0
      %1601 = vmatprep.subr.bf16.mxu0 0
      %1602 = vmatpush1.bf16.xpose.msra.mxu0 0
      %1603 = vmatprep.subr.bf16.mxu0 0
      %1604 = vmatpush1.bf16.xpose.msra.mxu0 0
      %1605 = vmatprep.subr.bf16.mxu0 0
      %1606 = vmatpush1.bf16.xpose.msra.mxu0 0
      %1607 = vmatprep.subr.bf16.mxu0 0
      %1608 = vmatpush1.bf16.xpose.msra.mxu0 0
      %1609 = vmatprep.subr.bf16.mxu0 0
      %1610 = vmatpush1.bf16.xpose.msra.mxu0 0
      %1611 = vmatprep.subr.bf16.mxu0 0
      %1612 = vmatpush1.bf16.xpose.msra.mxu0 %v1597
      %1613 = vmatprep.subr.bf16.mxu0 0
      %1614 = vmatpush1.bf16.xpose.msra.mxu0 %v1594
      %1615 = vmatprep.subr.bf16.mxu0 0
      %1616 = vmatpush2.bf16.xpose.msra.mxu0 0
      %1617 = vmatprep.subr.bf16.mxu0 0
      %1618 = vmatpush2.bf16.xpose.msra.mxu0 0
      %1619 = vmatprep.subr.bf16.mxu0 0
      %1620 = vmatpush2.bf16.xpose.msra.mxu0 0
      %1621 = vmatprep.subr.bf16.mxu0 0
      %1622 = vmatpush2.bf16.xpose.msra.mxu0 0
      %1623 = vmatprep.subr.bf16.mxu0 0
      %1624 = vmatpush2.bf16.xpose.msra.mxu0 0
      %1625 = vmatprep.subr.bf16.mxu0 0
      %1626 = vmatpush2.bf16.xpose.msra.mxu0 0
      %1627 = vmatprep.subr.bf16.mxu0 0
      %1628 = vmatpush2.bf16.xpose.msra.mxu0 0
      %1629 = vmatprep.subr.bf16.mxu0 0
      %1630 = vmatpush2.bf16.xpose.msra.mxu0 0
      %1631 = vmatprep.mubr.bf16.mxu0 0
      %1632 = vmatmul.mubr.bf16.gmra.mxu0 %v1588
      %v1633 = vpop.f32.mrf.mxu0
      %v1634 = vadd.f32 0.0, %v1633
      %v1635 = vpop.f32.mrf.mxu0
      %v1636 = vpop.f32.mrf.mxu0
      %v1637 = vadd.f32 0.0, %v1636
      %v1638 = vpop.f32.mrf.mxu0
      %1639 = vmatprep.mubr.bf16.mxu0 0
      %1640 = vmatmul.mubr.bf16.gmra.mxu0 %v1591
      %v1641 = vpop.f32.mrf.mxu0
      %v1642 = vadd.f32 0.0, %v1641
      %v1643 = vpop.f32.mrf.mxu0
      %v1644 = vpop.f32.mrf.mxu0
      %v1645 = vadd.f32 0.0, %v1644
      %v1646 = vpop.f32.mrf.mxu0
      %1647 = vdwg.mxu0
      %v1648 = vmul.f32 %v1634, 0.17677669
      %v1649 = vmul.f32 %v1637, 0.17677669
      %v1650 = vmul.f32 %v1642, 0.17677669
      %v1651 = vmul.f32 %v1645, 0.17677669
      %v1652 = vsel %vm801, %v1648, -1e+30
      %v1653 = vsel %vm802, %v1649, -1e+30
      %v1654 = vsel %vm803, %v1650, -1e+30
      %v1655 = vsel %vm804, %v1651, -1e+30
      %v1656 = vsel %vm811, %v1652, -inf
      %1657 = vmax.xlane.f32.xlu0 %v1656
      %v1658 = vpop.xlane.xlu0 %1657
      %v1659 = vsel %vm811, %v1653, -inf
      %1660 = vmax.xlane.f32.xlu0 %v1659
      %v1661 = vpop.xlane.xlu0 %1660
      %v1662 = vsel %vm811, %v1654, -inf
      %1663 = vmax.xlane.f32.xlu0 %v1662
      %v1664 = vpop.xlane.xlu0 %1663
      %v1665 = vsel %vm811, %v1655, -inf
      %1666 = vmax.xlane.f32.xlu0 %v1665
      %v1667 = vpop.xlane.xlu0 %1666
      %v1668 = vsub.f32 %v1652, %v1658
      %v1669 = vsub.f32 %v1653, %v1661
      %v1670 = vsub.f32 %v1654, %v1664
      %v1671 = vsub.f32 %v1655, %v1667
      %v1672 = vmul.f32 %v1668, 1.442695
      %v1673 = vpow.pop %v1672
      %v1674 = vmul.f32 %v1669, 1.442695
      %v1675 = vpow.pop %v1674
      %v1676 = vmul.f32 %v1670, 1.442695
      %v1677 = vpow.pop %v1676
      %v1678 = vmul.f32 %v1671, 1.442695
      %v1679 = vpow.pop %v1678
      %v1680 = vsel %vm811, %v1673, 0.0
      %1681 = vadd.xlane.f32.xlu0 %v1680
      %v1682 = vpop.xlane.xlu0 %1681
      %v1683 = vsel %vm811, %v1675, 0.0
      %1684 = vadd.xlane.f32.xlu0 %v1683
      %v1685 = vpop.xlane.xlu0 %1684
      %v1686 = vsel %vm811, %v1677, 0.0
      %1687 = vadd.xlane.f32.xlu0 %v1686
      %v1688 = vpop.xlane.xlu0 %1687
      %v1689 = vsel %vm811, %v1679, 0.0
      %1690 = vadd.xlane.f32.xlu0 %v1689
      %v1691 = vpop.xlane.xlu0 %1690
      %v1692 = vrcp.pop %v1682
      %v1693 = vrcp.pop %v1685
      %v1694 = vrcp.pop %v1688
      %v1695 = vrcp.pop %v1691
      %v1696 = vmul.f32 %v1673, %v1692
      %v1697 = vmul.f32 %v1675, %v1693
      %v1698 = vmul.f32 %v1677, %v1694
      %v1699 = vmul.f32 %v1679, %v1695
      %v1700 = vpack.c.bf16 %v1697, %v1696
      %v1701 = vpack.c.bf16 %v1699, %v1698
      %1702 = vrot.lane.b32.xlu0 %v809, 32
      %v1703 = vpop.permute.xlu0 %1702
      %1704 = vrot.lane.b32.xlu0 %v810, 32
      %v1705 = vpop.permute.xlu0 %1704
      %v1709 = vsel %vm811, %v1700, 0
      %v1712 = vsel %vm811, %v1701, 0
      %1714 = vmatprep.subr.bf16.mxu0 0
      %1715 = vmatpush1.bf16.msra.mxu0 0
      %1716 = vmatprep.subr.bf16.mxu0 0
      %1717 = vmatpush1.bf16.msra.mxu0 0
      %1718 = vmatprep.subr.bf16.mxu0 0
      %1719 = vmatpush1.bf16.msra.mxu0 0
      %1720 = vmatprep.subr.bf16.mxu0 0
      %1721 = vmatpush1.bf16.msra.mxu0 0
      %1722 = vmatprep.subr.bf16.mxu0 0
      %1723 = vmatpush1.bf16.msra.mxu0 0
      %1724 = vmatprep.subr.bf16.mxu0 0
      %1725 = vmatpush1.bf16.msra.mxu0 0
      %1726 = vmatprep.subr.bf16.mxu0 0
      %1727 = vmatpush1.bf16.msra.mxu0 %v1705
      %1728 = vmatprep.subr.bf16.mxu0 0
      %1729 = vmatpush1.bf16.msra.mxu0 %v1703
      %1730 = vmatprep.subr.bf16.mxu0 0
      %1731 = vmatpush2.bf16.msra.mxu0 0
      %1732 = vmatprep.subr.bf16.mxu0 0
      %1733 = vmatpush2.bf16.msra.mxu0 0
      %1734 = vmatprep.subr.bf16.mxu0 0
      %1735 = vmatpush2.bf16.msra.mxu0 0
      %1736 = vmatprep.subr.bf16.mxu0 0
      %1737 = vmatpush2.bf16.msra.mxu0 0
      %1738 = vmatprep.subr.bf16.mxu0 0
      %1739 = vmatpush2.bf16.msra.mxu0 0
      %1740 = vmatprep.subr.bf16.mxu0 0
      %1741 = vmatpush2.bf16.msra.mxu0 0
      %1742 = vmatprep.subr.bf16.mxu0 0
      %1743 = vmatpush2.bf16.msra.mxu0 0
      %1744 = vmatprep.subr.bf16.mxu0 0
      %1745 = vmatpush2.bf16.msra.mxu0 0
      %1746 = vmatprep.mubr.bf16.mxu0 0
      %1747 = vmatmul.mubr.bf16.gmra.mxu0 %v1709
      %v1748 = vpop.f32.mrf.mxu0
      %v1749 = vadd.f32 0.0, %v1748
      %v1750 = vpop.f32.mrf.mxu0
      %v1751 = vpop.f32.mrf.mxu0
      %v1752 = vadd.f32 0.0, %v1751
      %v1753 = vpop.f32.mrf.mxu0
      %1754 = vmatprep.mubr.bf16.mxu0 0
      %1755 = vmatmul.mubr.bf16.gmra.mxu0 %v1712
      %v1756 = vpop.f32.mrf.mxu0
      %v1757 = vadd.f32 0.0, %v1756
      %v1758 = vpop.f32.mrf.mxu0
      %v1759 = vpop.f32.mrf.mxu0
      %v1760 = vadd.f32 0.0, %v1759
      %v1761 = vpop.f32.mrf.mxu0
      %1762 = vdwg.mxu0
      %v1763 = vld [vmem:[%s5 + $0x30] sm:$0xf]
      %v1764 = vld [vmem:[%s5 + $0x34] sm:$0xf]
      %v1765 = vld [vmem:[%s5 + $0x38] sm:$0xf]
      %v1766 = vld [vmem:[%s5 + $0x3c] sm:$0xf]
      %v1767 = vpack.c.bf16 %v1752, %v1749
      %v1768 = vpack.c.bf16 %v1760, %v1757
      %v1773 = vunpack.c.l.b16 %v1763
      %v1774 = vunpack.c.l.b16 %v1764
      %v1775 = vunpack.c.l.b16 %v1765
      %v1776 = vunpack.c.l.b16 %v1766
      %v1777 = vpack.c.b16 %v1774, %v1773
      %v1778 = vpack.c.b16 %v1776, %v1775
      %v1782 = vsel %vm811, %v1767, 0
      %v1785 = vsel %vm811, %v1768, 0
      %1787 = vmatprep.subr.bf16.mxu0 0
      %1788 = vmatpush1.bf16.msra.mxu0 0
      %1789 = vmatprep.subr.bf16.mxu0 0
      %1790 = vmatpush1.bf16.msra.mxu0 0
      %1791 = vmatprep.subr.bf16.mxu0 0
      %1792 = vmatpush1.bf16.msra.mxu0 0
      %1793 = vmatprep.subr.bf16.mxu0 0
      %1794 = vmatpush1.bf16.msra.mxu0 0
      %1795 = vmatprep.subr.bf16.mxu0 0
      %1796 = vmatpush1.bf16.msra.mxu0 0
      %1797 = vmatprep.subr.bf16.mxu0 0
      %1798 = vmatpush1.bf16.msra.mxu0 0
      %1799 = vmatprep.subr.bf16.mxu0 0
      %1800 = vmatpush1.bf16.msra.mxu0 %v1778
      %1801 = vmatprep.subr.bf16.mxu0 0
      %1802 = vmatpush1.bf16.msra.mxu0 %v1777
      %1803 = vmatprep.subr.bf16.mxu0 0
      %1804 = vmatpush2.bf16.msra.mxu0 0
      %1805 = vmatprep.subr.bf16.mxu0 0
      %1806 = vmatpush2.bf16.msra.mxu0 0
      %1807 = vmatprep.subr.bf16.mxu0 0
      %1808 = vmatpush2.bf16.msra.mxu0 0
      %1809 = vmatprep.subr.bf16.mxu0 0
      %1810 = vmatpush2.bf16.msra.mxu0 0
      %1811 = vmatprep.subr.bf16.mxu0 0
      %1812 = vmatpush2.bf16.msra.mxu0 0
      %1813 = vmatprep.subr.bf16.mxu0 0
      %1814 = vmatpush2.bf16.msra.mxu0 0
      %1815 = vmatprep.subr.bf16.mxu0 0
      %1816 = vmatpush2.bf16.msra.mxu0 0
      %1817 = vmatprep.subr.bf16.mxu0 0
      %1818 = vmatpush2.bf16.msra.mxu0 0
      %1819 = vmatprep.mubr.bf16.mxu0 0
      %1820 = vmatmul.mubr.bf16.gmra.mxu0 %v1782
      %v1821 = vpop.f32.mrf.mxu0
      %v1822 = vadd.f32 0.0, %v1821
      %v1823 = vpop.f32.mrf.mxu0
      %v1824 = vpop.f32.mrf.mxu0
      %v1825 = vadd.f32 0.0, %v1824
      %v1826 = vpop.f32.mrf.mxu0
      %1827 = vmatprep.mubr.bf16.mxu0 0
      %1828 = vmatmul.mubr.bf16.gmra.mxu0 %v1785
      %v1829 = vpop.f32.mrf.mxu0
      %v1830 = vadd.f32 0.0, %v1829
      %v1831 = vpop.f32.mrf.mxu0
      %v1832 = vpop.f32.mrf.mxu0
      %v1833 = vadd.f32 0.0, %v1832
      %v1834 = vpop.f32.mrf.mxu0
      %1835 = vdwg.mxu0
      %v1836 = vadd.f32 %v1575, %v1822
      %v1837 = vadd.f32 %v1576, %v1825
      %v1838 = vadd.f32 %v1577, %v1830
      %v1839 = vadd.f32 %v1578, %v1833
      %v1840 = vadd.f32 %v442, %v1836
      %v1841 = vadd.f32 %v443, %v1837
      %v1842 = vadd.f32 %v444, %v1838
      %v1843 = vadd.f32 %v445, %v1839
      %v1844 = vld [vmem:[%s6] sm:$0x1]
      %v1846 = vlaneseq
      %v1847 = vshrl.u32 %v1846, 7
      %v1848 = vsub.s32 0, %v1847
      %v1849 = vrot.slane %v1844, %v1848
      %v1851 = vadd.f32 %v1840, %v1849
      %v1852 = vadd.f32 %v1841, %v1849
      %v1853 = vadd.f32 %v1842, %v1849
      %v1854 = vadd.f32 %v1843, %v1849
      %v1855 = vld [vmem:[%s7] sm:$0x1]
      %v1856 = vld [vmem:[%s8] sm:$0x1]
      %1857 = vadd.xlane.f32.xlu0 %v1851
      %v1858 = vpop.xlane.xlu0 %1857
      %1859 = vadd.xlane.f32.xlu0 %v1852
      %v1860 = vpop.xlane.xlu0 %1859
      %1861 = vadd.xlane.f32.xlu0 %v1853
      %v1862 = vpop.xlane.xlu0 %1861
      %1863 = vadd.xlane.f32.xlu0 %v1854
      %v1864 = vpop.xlane.xlu0 %1863
      %v1865 = vmul.f32 %v1858, %v456
      %v1866 = vmul.f32 %v1860, %v456
      %v1867 = vmul.f32 %v1862, %v456
      %v1868 = vmul.f32 %v1864, %v456
      %v1869 = vsub.f32 %v1851, %v1865
      %v1870 = vsub.f32 %v1852, %v1866
      %v1871 = vsub.f32 %v1853, %v1867
      %v1872 = vsub.f32 %v1854, %v1868
      %v1873 = vmul.f32 %v1869, %v1869
      %v1874 = vmul.f32 %v1870, %v1870
      %v1875 = vmul.f32 %v1871, %v1871
      %v1876 = vmul.f32 %v1872, %v1872
      %1877 = vadd.xlane.f32.xlu0 %v1873
      %v1878 = vpop.xlane.xlu0 %1877
      %1879 = vadd.xlane.f32.xlu0 %v1874
      %v1880 = vpop.xlane.xlu0 %1879
      %1881 = vadd.xlane.f32.xlu0 %v1875
      %v1882 = vpop.xlane.xlu0 %1881
      %1883 = vadd.xlane.f32.xlu0 %v1876
      %v1884 = vpop.xlane.xlu0 %1883
      %v1885 = vmul.f32 %v1878, %v456
      %v1886 = vmul.f32 %v1880, %v456
      %v1887 = vmul.f32 %v1882, %v456
      %v1888 = vmul.f32 %v1884, %v456
      %v1889 = vadd.f32 %v1885, 1e-05
      %v1890 = vadd.f32 %v1886, 1e-05
      %v1891 = vadd.f32 %v1887, 1e-05
      %v1892 = vadd.f32 %v1888, 1e-05
      %v1893 = vrsqrt.pop %v1889
      %v1894 = vrsqrt.pop %v1890
      %v1895 = vrsqrt.pop %v1891
      %v1896 = vrsqrt.pop %v1892
      %v1897 = vmul.f32 %v1869, %v1893
      %v1898 = vmul.f32 %v1870, %v1894
      %v1899 = vmul.f32 %v1871, %v1895
      %v1900 = vmul.f32 %v1872, %v1896
      %v1902 = vlaneseq
      %v1903 = vshrl.u32 %v1902, 7
      %v1904 = vsub.s32 0, %v1903
      %v1905 = vrot.slane %v1855, %v1904
      %v1907 = vmul.f32 %v1897, %v1905
      %v1908 = vmul.f32 %v1898, %v1905
      %v1909 = vmul.f32 %v1899, %v1905
      %v1910 = vmul.f32 %v1900, %v1905
      %v1912 = vlaneseq
      %v1913 = vshrl.u32 %v1912, 7
      %v1914 = vsub.s32 0, %v1913
      %v1915 = vrot.slane %v1856, %v1914
      %v1917 = vadd.f32 %v1907, %v1915
      %v1918 = vadd.f32 %v1908, %v1915
      %v1919 = vadd.f32 %v1909, %v1915
      %v1920 = vadd.f32 %v1910, %v1915
      %v1921 = vpack.c.bf16 %v1918, %v1917
      %v1922 = vpack.c.bf16 %v1920, %v1919
      %v1923 = vld [vmem:[%s9] sm:$0xff]
      %v1924 = vld [vmem:[%s9 + $0x8] sm:$0xff]
      %v1925 = vld [vmem:[%s9 + $0x10] sm:$0xff]
      %v1926 = vld [vmem:[%s9 + $0x18] sm:$0xff]
      %v1927 = vld [vmem:[%s9 + $0x20] sm:$0xff]
      %v1928 = vld [vmem:[%s9 + $0x28] sm:$0xff]
      %v1929 = vld [vmem:[%s9 + $0x30] sm:$0xff]
      %v1930 = vld [vmem:[%s9 + $0x38] sm:$0xff]
      %v1931 = vld [vmem:[%s9 + $0x40] sm:$0xff]
      %v1932 = vld [vmem:[%s9 + $0x48] sm:$0xff]
      %v1933 = vld [vmem:[%s9 + $0x50] sm:$0xff]
      %v1934 = vld [vmem:[%s9 + $0x58] sm:$0xff]
      %v1935 = vld [vmem:[%s9 + $0x60] sm:$0xff]
      %v1936 = vld [vmem:[%s9 + $0x68] sm:$0xff]
      %v1937 = vld [vmem:[%s9 + $0x70] sm:$0xff]
      %v1938 = vld [vmem:[%s9 + $0x78] sm:$0xff]
      %v1939 = vld [vmem:[%s9 + $0x80] sm:$0xff]
      %v1940 = vld [vmem:[%s9 + $0x88] sm:$0xff]
      %v1941 = vld [vmem:[%s9 + $0x90] sm:$0xff]
      %v1942 = vld [vmem:[%s9 + $0x98] sm:$0xff]
      %v1943 = vld [vmem:[%s9 + $0xa0] sm:$0xff]
      %v1944 = vld [vmem:[%s9 + $0xa8] sm:$0xff]
      %v1945 = vld [vmem:[%s9 + $0xb0] sm:$0xff]
      %v1946 = vld [vmem:[%s9 + $0xb8] sm:$0xff]
      %v1947 = vld [vmem:[%s9 + $0xc0] sm:$0xff]
      %v1948 = vld [vmem:[%s9 + $0xc8] sm:$0xff]
      %v1949 = vld [vmem:[%s9 + $0xd0] sm:$0xff]
      %v1950 = vld [vmem:[%s9 + $0xd8] sm:$0xff]
      %v1951 = vld [vmem:[%s9 + $0xe0] sm:$0xff]
      %v1952 = vld [vmem:[%s9 + $0xe8] sm:$0xff]
      %v1953 = vld [vmem:[%s9 + $0xf0] sm:$0xff]
      %v1954 = vld [vmem:[%s9 + $0xf8] sm:$0xff]
      %v1955 = vld [vmem:[%s10] sm:$0xf]
      %v1957 = vlaneseq
      %v1958 = vshrl.u32 %v1957, 7
      %v1959 = vsub.s32 0, %v1958
      %v1960 = vrot.slane %v1955, %v1959
      %v1961 = vlaneseq
      %v1962 = vshrl.u32 %v1961, 7
      %v1963 = vsub.s32 1, %v1962
      %v1964 = vrot.slane %v1955, %v1963
      %v1965 = vlaneseq
      %v1966 = vshrl.u32 %v1965, 7
      %v1967 = vsub.s32 2, %v1966
      %v1968 = vrot.slane %v1955, %v1967
      %v1969 = vlaneseq
      %v1970 = vshrl.u32 %v1969, 7
      %v1971 = vsub.s32 3, %v1970
      %v1972 = vrot.slane %v1955, %v1971
      %v2009 = vunpack.c.l.b16 %v1923
      %v2010 = vunpack.c.h.b16 %v1923
      %v2011 = vunpack.c.l.b16 %v1924
      %v2012 = vunpack.c.h.b16 %v1924
      %v2013 = vunpack.c.l.b16 %v1925
      %v2014 = vunpack.c.h.b16 %v1925
      %v2015 = vunpack.c.l.b16 %v1926
      %v2016 = vunpack.c.h.b16 %v1926
      %v2017 = vunpack.c.l.b16 %v1927
      %v2018 = vunpack.c.h.b16 %v1927
      %v2019 = vunpack.c.l.b16 %v1928
      %v2020 = vunpack.c.h.b16 %v1928
      %v2021 = vunpack.c.l.b16 %v1929
      %v2022 = vunpack.c.h.b16 %v1929
      %v2023 = vunpack.c.l.b16 %v1930
      %v2024 = vunpack.c.h.b16 %v1930
      %v2025 = vunpack.c.l.b16 %v1931
      %v2026 = vunpack.c.h.b16 %v1931
      %v2027 = vunpack.c.l.b16 %v1932
      %v2028 = vunpack.c.h.b16 %v1932
      %v2029 = vunpack.c.l.b16 %v1933
      %v2030 = vunpack.c.h.b16 %v1933
      %v2031 = vunpack.c.l.b16 %v1934
      %v2032 = vunpack.c.h.b16 %v1934
      %v2033 = vunpack.c.l.b16 %v1935
      %v2034 = vunpack.c.h.b16 %v1935
      %v2035 = vunpack.c.l.b16 %v1936
      %v2036 = vunpack.c.h.b16 %v1936
      %v2037 = vunpack.c.l.b16 %v1937
      %v2038 = vunpack.c.h.b16 %v1937
      %v2039 = vunpack.c.l.b16 %v1938
      %v2040 = vunpack.c.h.b16 %v1938
      %v2041 = vunpack.c.l.b16 %v1939
      %v2042 = vunpack.c.h.b16 %v1939
      %v2043 = vunpack.c.l.b16 %v1940
      %v2044 = vunpack.c.h.b16 %v1940
      %v2045 = vunpack.c.l.b16 %v1941
      %v2046 = vunpack.c.h.b16 %v1941
      %v2047 = vunpack.c.l.b16 %v1942
      %v2048 = vunpack.c.h.b16 %v1942
      %v2049 = vunpack.c.l.b16 %v1943
      %v2050 = vunpack.c.h.b16 %v1943
      %v2051 = vunpack.c.l.b16 %v1944
      %v2052 = vunpack.c.h.b16 %v1944
      %v2053 = vunpack.c.l.b16 %v1945
      %v2054 = vunpack.c.h.b16 %v1945
      %v2055 = vunpack.c.l.b16 %v1946
      %v2056 = vunpack.c.h.b16 %v1946
      %v2057 = vunpack.c.l.b16 %v1947
      %v2058 = vunpack.c.h.b16 %v1947
      %v2059 = vunpack.c.l.b16 %v1948
      %v2060 = vunpack.c.h.b16 %v1948
      %v2061 = vunpack.c.l.b16 %v1949
      %v2062 = vunpack.c.h.b16 %v1949
      %v2063 = vunpack.c.l.b16 %v1950
      %v2064 = vunpack.c.h.b16 %v1950
      %v2065 = vunpack.c.l.b16 %v1951
      %v2066 = vunpack.c.h.b16 %v1951
      %v2067 = vunpack.c.l.b16 %v1952
      %v2068 = vunpack.c.h.b16 %v1952
      %v2069 = vunpack.c.l.b16 %v1953
      %v2070 = vunpack.c.h.b16 %v1953
      %v2071 = vunpack.c.l.b16 %v1954
      %v2072 = vunpack.c.h.b16 %v1954
      %v2073 = vpack.c.b16 %v2013, %v2009
      %v2074 = vpack.c.b16 %v2014, %v2010
      %v2075 = vpack.c.b16 %v2015, %v2011
      %v2076 = vpack.c.b16 %v2016, %v2012
      %v2077 = vpack.c.b16 %v2021, %v2017
      %v2078 = vpack.c.b16 %v2022, %v2018
      %v2079 = vpack.c.b16 %v2023, %v2019
      %v2080 = vpack.c.b16 %v2024, %v2020
      %v2081 = vpack.c.b16 %v2029, %v2025
      %v2082 = vpack.c.b16 %v2030, %v2026
      %v2083 = vpack.c.b16 %v2031, %v2027
      %v2084 = vpack.c.b16 %v2032, %v2028
      %v2085 = vpack.c.b16 %v2037, %v2033
      %v2086 = vpack.c.b16 %v2038, %v2034
      %v2087 = vpack.c.b16 %v2039, %v2035
      %v2088 = vpack.c.b16 %v2040, %v2036
      %v2089 = vpack.c.b16 %v2045, %v2041
      %v2090 = vpack.c.b16 %v2046, %v2042
      %v2091 = vpack.c.b16 %v2047, %v2043
      %v2092 = vpack.c.b16 %v2048, %v2044
      %v2093 = vpack.c.b16 %v2053, %v2049
      %v2094 = vpack.c.b16 %v2054, %v2050
      %v2095 = vpack.c.b16 %v2055, %v2051
      %v2096 = vpack.c.b16 %v2056, %v2052
      %v2097 = vpack.c.b16 %v2061, %v2057
      %v2098 = vpack.c.b16 %v2062, %v2058
      %v2099 = vpack.c.b16 %v2063, %v2059
      %v2100 = vpack.c.b16 %v2064, %v2060
      %v2101 = vpack.c.b16 %v2069, %v2065
      %v2102 = vpack.c.b16 %v2070, %v2066
      %v2103 = vpack.c.b16 %v2071, %v2067
      %v2104 = vpack.c.b16 %v2072, %v2068
      %2137 = vmatprep.subr.bf16.mxu0 %v2102
      %2138 = vmatpush1.bf16.msra.mxu0 %v2101
      %2139 = vmatprep.subr.bf16.mxu0 %v2098
      %2140 = vmatpush1.bf16.msra.mxu0 %v2097
      %2141 = vmatprep.subr.bf16.mxu0 %v2094
      %2142 = vmatpush1.bf16.msra.mxu0 %v2093
      %2143 = vmatprep.subr.bf16.mxu0 %v2090
      %2144 = vmatpush1.bf16.msra.mxu0 %v2089
      %2145 = vmatprep.subr.bf16.mxu0 %v2086
      %2146 = vmatpush1.bf16.msra.mxu0 %v2085
      %2147 = vmatprep.subr.bf16.mxu0 %v2082
      %2148 = vmatpush1.bf16.msra.mxu0 %v2081
      %2149 = vmatprep.subr.bf16.mxu0 %v2078
      %2150 = vmatpush1.bf16.msra.mxu0 %v2077
      %2151 = vmatprep.subr.bf16.mxu0 %v2074
      %2152 = vmatpush1.bf16.msra.mxu0 %v2073
      %2153 = vmatprep.subr.bf16.mxu0 0
      %2154 = vmatpush2.bf16.msra.mxu0 0
      %2155 = vmatprep.subr.bf16.mxu0 0
      %2156 = vmatpush2.bf16.msra.mxu0 0
      %2157 = vmatprep.subr.bf16.mxu0 0
      %2158 = vmatpush2.bf16.msra.mxu0 0
      %2159 = vmatprep.subr.bf16.mxu0 0
      %2160 = vmatpush2.bf16.msra.mxu0 0
      %2161 = vmatprep.subr.bf16.mxu0 0
      %2162 = vmatpush2.bf16.msra.mxu0 0
      %2163 = vmatprep.subr.bf16.mxu0 0
      %2164 = vmatpush2.bf16.msra.mxu0 0
      %2165 = vmatprep.subr.bf16.mxu0 0
      %2166 = vmatpush2.bf16.msra.mxu0 0
      %2167 = vmatprep.subr.bf16.mxu0 0
      %2168 = vmatpush2.bf16.msra.mxu0 0
      %2169 = vmatprep.mubr.bf16.mxu0 0
      %2170 = vmatmul.mubr.bf16.gmra.mxu0 %v1921
      %v2171 = vpop.f32.mrf.mxu0
      %v2172 = vadd.f32 %v1960, %v2171
      %v2173 = vpop.f32.mrf.mxu0
      %v2174 = vadd.f32 %v1964, %v2173
      %v2175 = vpop.f32.mrf.mxu0
      %v2176 = vadd.f32 %v1960, %v2175
      %v2177 = vpop.f32.mrf.mxu0
      %v2178 = vadd.f32 %v1964, %v2177
      %2179 = vmatprep.mubr.bf16.mxu0 0
      %2180 = vmatmul.mubr.bf16.gmra.mxu0 %v1922
      %v2181 = vpop.f32.mrf.mxu0
      %v2182 = vadd.f32 %v1960, %v2181
      %v2183 = vpop.f32.mrf.mxu0
      %v2184 = vadd.f32 %v1964, %v2183
      %v2185 = vpop.f32.mrf.mxu0
      %v2186 = vadd.f32 %v1960, %v2185
      %v2187 = vpop.f32.mrf.mxu0
      %v2188 = vadd.f32 %v1964, %v2187
      %2189 = vdwg.mxu0
      %2190 = vmatprep.subr.bf16.mxu0 %v2104
      %2191 = vmatpush1.bf16.msra.mxu0 %v2103
      %2192 = vmatprep.subr.bf16.mxu0 %v2100
      %2193 = vmatpush1.bf16.msra.mxu0 %v2099
      %2194 = vmatprep.subr.bf16.mxu0 %v2096
      %2195 = vmatpush1.bf16.msra.mxu0 %v2095
      %2196 = vmatprep.subr.bf16.mxu0 %v2092
      %2197 = vmatpush1.bf16.msra.mxu0 %v2091
      %2198 = vmatprep.subr.bf16.mxu0 %v2088
      %2199 = vmatpush1.bf16.msra.mxu0 %v2087
      %2200 = vmatprep.subr.bf16.mxu0 %v2084
      %2201 = vmatpush1.bf16.msra.mxu0 %v2083
      %2202 = vmatprep.subr.bf16.mxu0 %v2080
      %2203 = vmatpush1.bf16.msra.mxu0 %v2079
      %2204 = vmatprep.subr.bf16.mxu0 %v2076
      %2205 = vmatpush1.bf16.msra.mxu0 %v2075
      %2206 = vmatprep.subr.bf16.mxu0 0
      %2207 = vmatpush2.bf16.msra.mxu0 0
      %2208 = vmatprep.subr.bf16.mxu0 0
      %2209 = vmatpush2.bf16.msra.mxu0 0
      %2210 = vmatprep.subr.bf16.mxu0 0
      %2211 = vmatpush2.bf16.msra.mxu0 0
      %2212 = vmatprep.subr.bf16.mxu0 0
      %2213 = vmatpush2.bf16.msra.mxu0 0
      %2214 = vmatprep.subr.bf16.mxu0 0
      %2215 = vmatpush2.bf16.msra.mxu0 0
      %2216 = vmatprep.subr.bf16.mxu0 0
      %2217 = vmatpush2.bf16.msra.mxu0 0
      %2218 = vmatprep.subr.bf16.mxu0 0
      %2219 = vmatpush2.bf16.msra.mxu0 0
      %2220 = vmatprep.subr.bf16.mxu0 0
      %2221 = vmatpush2.bf16.msra.mxu0 0
      %2222 = vmatprep.mubr.bf16.mxu0 0
      %2223 = vmatmul.mubr.bf16.gmra.mxu0 %v1921
      %v2224 = vpop.f32.mrf.mxu0
      %v2225 = vadd.f32 %v1968, %v2224
      %v2226 = vpop.f32.mrf.mxu0
      %v2227 = vadd.f32 %v1972, %v2226
      %v2228 = vpop.f32.mrf.mxu0
      %v2229 = vadd.f32 %v1968, %v2228
      %v2230 = vpop.f32.mrf.mxu0
      %v2231 = vadd.f32 %v1972, %v2230
      %2232 = vmatprep.mubr.bf16.mxu0 0
      %2233 = vmatmul.mubr.bf16.gmra.mxu0 %v1922
      %v2234 = vpop.f32.mrf.mxu0
      %v2235 = vadd.f32 %v1968, %v2234
      %v2236 = vpop.f32.mrf.mxu0
      %v2237 = vadd.f32 %v1972, %v2236
      %v2238 = vpop.f32.mrf.mxu0
      %v2239 = vadd.f32 %v1968, %v2238
      %v2240 = vpop.f32.mrf.mxu0
      %v2241 = vadd.f32 %v1972, %v2240
      %2242 = vdwg.mxu0
      %v2243 = vmul.f32 %v2172, 0.5
      %v2244 = vmul.f32 %v2174, 0.5
      %v2245 = vmul.f32 %v2225, 0.5
      %v2246 = vmul.f32 %v2227, 0.5
      %v2247 = vmul.f32 %v2176, 0.5
      %v2248 = vmul.f32 %v2178, 0.5
      %v2249 = vmul.f32 %v2229, 0.5
      %v2250 = vmul.f32 %v2231, 0.5
      %v2251 = vmul.f32 %v2182, 0.5
      %v2252 = vmul.f32 %v2184, 0.5
      %v2253 = vmul.f32 %v2235, 0.5
      %v2254 = vmul.f32 %v2237, 0.5
      %v2255 = vmul.f32 %v2186, 0.5
      %v2256 = vmul.f32 %v2188, 0.5
      %v2257 = vmul.f32 %v2239, 0.5
      %v2258 = vmul.f32 %v2241, 0.5
      %v2259 = vmul.f32 %v2172, 0.044715
      %v2260 = vmul.f32 %v2174, 0.044715
      %v2261 = vmul.f32 %v2225, 0.044715
      %v2262 = vmul.f32 %v2227, 0.044715
      %v2263 = vmul.f32 %v2176, 0.044715
      %v2264 = vmul.f32 %v2178, 0.044715
      %v2265 = vmul.f32 %v2229, 0.044715
      %v2266 = vmul.f32 %v2231, 0.044715
      %v2267 = vmul.f32 %v2182, 0.044715
      %v2268 = vmul.f32 %v2184, 0.044715
      %v2269 = vmul.f32 %v2235, 0.044715
      %v2270 = vmul.f32 %v2237, 0.044715
      %v2271 = vmul.f32 %v2186, 0.044715
      %v2272 = vmul.f32 %v2188, 0.044715
      %v2273 = vmul.f32 %v2239, 0.044715
      %v2274 = vmul.f32 %v2241, 0.044715
      %v2275 = vmul.f32 %v2259, %v2172
      %v2276 = vmul.f32 %v2260, %v2174
      %v2277 = vmul.f32 %v2261, %v2225
      %v2278 = vmul.f32 %v2262, %v2227
      %v2279 = vmul.f32 %v2263, %v2176
      %v2280 = vmul.f32 %v2264, %v2178
      %v2281 = vmul.f32 %v2265, %v2229
      %v2282 = vmul.f32 %v2266, %v2231
      %v2283 = vmul.f32 %v2267, %v2182
      %v2284 = vmul.f32 %v2268, %v2184
      %v2285 = vmul.f32 %v2269, %v2235
      %v2286 = vmul.f32 %v2270, %v2237
      %v2287 = vmul.f32 %v2271, %v2186
      %v2288 = vmul.f32 %v2272, %v2188
      %v2289 = vmul.f32 %v2273, %v2239
      %v2290 = vmul.f32 %v2274, %v2241
      %v2291 = vmul.f32 %v2275, %v2172
      %v2292 = vmul.f32 %v2276, %v2174
      %v2293 = vmul.f32 %v2277, %v2225
      %v2294 = vmul.f32 %v2278, %v2227
      %v2295 = vmul.f32 %v2279, %v2176
      %v2296 = vmul.f32 %v2280, %v2178
      %v2297 = vmul.f32 %v2281, %v2229
      %v2298 = vmul.f32 %v2282, %v2231
      %v2299 = vmul.f32 %v2283, %v2182
      %v2300 = vmul.f32 %v2284, %v2184
      %v2301 = vmul.f32 %v2285, %v2235
      %v2302 = vmul.f32 %v2286, %v2237
      %v2303 = vmul.f32 %v2287, %v2186
      %v2304 = vmul.f32 %v2288, %v2188
      %v2305 = vmul.f32 %v2289, %v2239
      %v2306 = vmul.f32 %v2290, %v2241
      %v2307 = vadd.f32 %v2172, %v2291
      %v2308 = vadd.f32 %v2174, %v2292
      %v2309 = vadd.f32 %v2225, %v2293
      %v2310 = vadd.f32 %v2227, %v2294
      %v2311 = vadd.f32 %v2176, %v2295
      %v2312 = vadd.f32 %v2178, %v2296
      %v2313 = vadd.f32 %v2229, %v2297
      %v2314 = vadd.f32 %v2231, %v2298
      %v2315 = vadd.f32 %v2182, %v2299
      %v2316 = vadd.f32 %v2184, %v2300
      %v2317 = vadd.f32 %v2235, %v2301
      %v2318 = vadd.f32 %v2237, %v2302
      %v2319 = vadd.f32 %v2186, %v2303
      %v2320 = vadd.f32 %v2188, %v2304
      %v2321 = vadd.f32 %v2239, %v2305
      %v2322 = vadd.f32 %v2241, %v2306
      %v2323 = vmul.f32 %v2307, 0.7978846
      %v2324 = vmul.f32 %v2308, 0.7978846
      %v2325 = vmul.f32 %v2309, 0.7978846
      %v2326 = vmul.f32 %v2310, 0.7978846
      %v2327 = vmul.f32 %v2311, 0.7978846
      %v2328 = vmul.f32 %v2312, 0.7978846
      %v2329 = vmul.f32 %v2313, 0.7978846
      %v2330 = vmul.f32 %v2314, 0.7978846
      %v2331 = vmul.f32 %v2315, 0.7978846
      %v2332 = vmul.f32 %v2316, 0.7978846
      %v2333 = vmul.f32 %v2317, 0.7978846
      %v2334 = vmul.f32 %v2318, 0.7978846
      %v2335 = vmul.f32 %v2319, 0.7978846
      %v2336 = vmul.f32 %v2320, 0.7978846
      %v2337 = vmul.f32 %v2321, 0.7978846
      %v2338 = vmul.f32 %v2322, 0.7978846
      %v2339 = vtanh.pop %v2323
      %v2340 = vtanh.pop %v2324
      %v2341 = vtanh.pop %v2325
      %v2342 = vtanh.pop %v2326
      %v2343 = vtanh.pop %v2327
      %v2344 = vtanh.pop %v2328
      %v2345 = vtanh.pop %v2329
      %v2346 = vtanh.pop %v2330
      %v2347 = vtanh.pop %v2331
      %v2348 = vtanh.pop %v2332
      %v2349 = vtanh.pop %v2333
      %v2350 = vtanh.pop %v2334
      %v2351 = vtanh.pop %v2335
      %v2352 = vtanh.pop %v2336
      %v2353 = vtanh.pop %v2337
      %v2354 = vtanh.pop %v2338
      %v2355 = vadd.f32 %v2339, 1.0
      %v2356 = vadd.f32 %v2340, 1.0
      %v2357 = vadd.f32 %v2341, 1.0
      %v2358 = vadd.f32 %v2342, 1.0
      %v2359 = vadd.f32 %v2343, 1.0
      %v2360 = vadd.f32 %v2344, 1.0
      %v2361 = vadd.f32 %v2345, 1.0
      %v2362 = vadd.f32 %v2346, 1.0
      %v2363 = vadd.f32 %v2347, 1.0
      %v2364 = vadd.f32 %v2348, 1.0
      %v2365 = vadd.f32 %v2349, 1.0
      %v2366 = vadd.f32 %v2350, 1.0
      %v2367 = vadd.f32 %v2351, 1.0
      %v2368 = vadd.f32 %v2352, 1.0
      %v2369 = vadd.f32 %v2353, 1.0
      %v2370 = vadd.f32 %v2354, 1.0
      %v2371 = vmul.f32 %v2243, %v2355
      %v2372 = vmul.f32 %v2244, %v2356
      %v2373 = vmul.f32 %v2245, %v2357
      %v2374 = vmul.f32 %v2246, %v2358
      %v2375 = vmul.f32 %v2247, %v2359
      %v2376 = vmul.f32 %v2248, %v2360
      %v2377 = vmul.f32 %v2249, %v2361
      %v2378 = vmul.f32 %v2250, %v2362
      %v2379 = vmul.f32 %v2251, %v2363
      %v2380 = vmul.f32 %v2252, %v2364
      %v2381 = vmul.f32 %v2253, %v2365
      %v2382 = vmul.f32 %v2254, %v2366
      %v2383 = vmul.f32 %v2255, %v2367
      %v2384 = vmul.f32 %v2256, %v2368
      %v2385 = vmul.f32 %v2257, %v2369
      %v2386 = vmul.f32 %v2258, %v2370
      %v2387 = vpack.c.bf16 %v2375, %v2371
      %v2388 = vpack.c.bf16 %v2376, %v2372
      %v2389 = vpack.c.bf16 %v2377, %v2373
      %v2390 = vpack.c.bf16 %v2378, %v2374
      %v2391 = vpack.c.bf16 %v2383, %v2379
      %v2392 = vpack.c.bf16 %v2384, %v2380
      %v2393 = vpack.c.bf16 %v2385, %v2381
      %v2394 = vpack.c.bf16 %v2386, %v2382
      %v2395 = vld [vmem:[%s11] sm:$0xf]
      %v2396 = vld [vmem:[%s11 + $0x4] sm:$0xf]
      %v2397 = vld [vmem:[%s11 + $0x8] sm:$0xf]
      %v2398 = vld [vmem:[%s11 + $0xc] sm:$0xf]
      %v2399 = vld [vmem:[%s11 + $0x10] sm:$0xf]
      %v2400 = vld [vmem:[%s11 + $0x14] sm:$0xf]
      %v2401 = vld [vmem:[%s11 + $0x18] sm:$0xf]
      %v2402 = vld [vmem:[%s11 + $0x1c] sm:$0xf]
      %v2403 = vld [vmem:[%s11 + $0x20] sm:$0xf]
      %v2404 = vld [vmem:[%s11 + $0x24] sm:$0xf]
      %v2405 = vld [vmem:[%s11 + $0x28] sm:$0xf]
      %v2406 = vld [vmem:[%s11 + $0x2c] sm:$0xf]
      %v2407 = vld [vmem:[%s11 + $0x30] sm:$0xf]
      %v2408 = vld [vmem:[%s11 + $0x34] sm:$0xf]
      %v2409 = vld [vmem:[%s11 + $0x38] sm:$0xf]
      %v2410 = vld [vmem:[%s11 + $0x3c] sm:$0xf]
      %v2411 = vld [vmem:[%s11 + $0x40] sm:$0xf]
      %v2412 = vld [vmem:[%s11 + $0x44] sm:$0xf]
      %v2413 = vld [vmem:[%s11 + $0x48] sm:$0xf]
      %v2414 = vld [vmem:[%s11 + $0x4c] sm:$0xf]
      %v2415 = vld [vmem:[%s11 + $0x50] sm:$0xf]
      %v2416 = vld [vmem:[%s11 + $0x54] sm:$0xf]
      %v2417 = vld [vmem:[%s11 + $0x58] sm:$0xf]
      %v2418 = vld [vmem:[%s11 + $0x5c] sm:$0xf]
      %v2419 = vld [vmem:[%s11 + $0x60] sm:$0xf]
      %v2420 = vld [vmem:[%s11 + $0x64] sm:$0xf]
      %v2421 = vld [vmem:[%s11 + $0x68] sm:$0xf]
      %v2422 = vld [vmem:[%s11 + $0x6c] sm:$0xf]
      %v2423 = vld [vmem:[%s11 + $0x70] sm:$0xf]
      %v2424 = vld [vmem:[%s11 + $0x74] sm:$0xf]
      %v2425 = vld [vmem:[%s11 + $0x78] sm:$0xf]
      %v2426 = vld [vmem:[%s11 + $0x7c] sm:$0xf]
      %v2427 = vld [vmem:[%s11 + $0x80] sm:$0xf]
      %v2428 = vld [vmem:[%s11 + $0x84] sm:$0xf]
      %v2429 = vld [vmem:[%s11 + $0x88] sm:$0xf]
      %v2430 = vld [vmem:[%s11 + $0x8c] sm:$0xf]
      %v2431 = vld [vmem:[%s11 + $0x90] sm:$0xf]
      %v2432 = vld [vmem:[%s11 + $0x94] sm:$0xf]
      %v2433 = vld [vmem:[%s11 + $0x98] sm:$0xf]
      %v2434 = vld [vmem:[%s11 + $0x9c] sm:$0xf]
      %v2435 = vld [vmem:[%s11 + $0xa0] sm:$0xf]
      %v2436 = vld [vmem:[%s11 + $0xa4] sm:$0xf]
      %v2437 = vld [vmem:[%s11 + $0xa8] sm:$0xf]
      %v2438 = vld [vmem:[%s11 + $0xac] sm:$0xf]
      %v2439 = vld [vmem:[%s11 + $0xb0] sm:$0xf]
      %v2440 = vld [vmem:[%s11 + $0xb4] sm:$0xf]
      %v2441 = vld [vmem:[%s11 + $0xb8] sm:$0xf]
      %v2442 = vld [vmem:[%s11 + $0xbc] sm:$0xf]
      %v2443 = vld [vmem:[%s11 + $0xc0] sm:$0xf]
      %v2444 = vld [vmem:[%s11 + $0xc4] sm:$0xf]
      %v2445 = vld [vmem:[%s11 + $0xc8] sm:$0xf]
      %v2446 = vld [vmem:[%s11 + $0xcc] sm:$0xf]
      %v2447 = vld [vmem:[%s11 + $0xd0] sm:$0xf]
      %v2448 = vld [vmem:[%s11 + $0xd4] sm:$0xf]
      %v2449 = vld [vmem:[%s11 + $0xd8] sm:$0xf]
      %v2450 = vld [vmem:[%s11 + $0xdc] sm:$0xf]
      %v2451 = vld [vmem:[%s11 + $0xe0] sm:$0xf]
      %v2452 = vld [vmem:[%s11 + $0xe4] sm:$0xf]
      %v2453 = vld [vmem:[%s11 + $0xe8] sm:$0xf]
      %v2454 = vld [vmem:[%s11 + $0xec] sm:$0xf]
      %v2455 = vld [vmem:[%s11 + $0xf0] sm:$0xf]
      %v2456 = vld [vmem:[%s11 + $0xf4] sm:$0xf]
      %v2457 = vld [vmem:[%s11 + $0xf8] sm:$0xf]
      %v2458 = vld [vmem:[%s11 + $0xfc] sm:$0xf]
      %v2523 = vunpack.c.l.b16 %v2395
      %v2524 = vunpack.c.l.b16 %v2396
      %v2525 = vunpack.c.l.b16 %v2397
      %v2526 = vunpack.c.l.b16 %v2398
      %v2527 = vunpack.c.l.b16 %v2399
      %v2528 = vunpack.c.l.b16 %v2400
      %v2529 = vunpack.c.l.b16 %v2401
      %v2530 = vunpack.c.l.b16 %v2402
      %v2531 = vunpack.c.l.b16 %v2403
      %v2532 = vunpack.c.l.b16 %v2404
      %v2533 = vunpack.c.l.b16 %v2405
      %v2534 = vunpack.c.l.b16 %v2406
      %v2535 = vunpack.c.l.b16 %v2407
      %v2536 = vunpack.c.l.b16 %v2408
      %v2537 = vunpack.c.l.b16 %v2409
      %v2538 = vunpack.c.l.b16 %v2410
      %v2539 = vunpack.c.l.b16 %v2411
      %v2540 = vunpack.c.l.b16 %v2412
      %v2541 = vunpack.c.l.b16 %v2413
      %v2542 = vunpack.c.l.b16 %v2414
      %v2543 = vunpack.c.l.b16 %v2415
      %v2544 = vunpack.c.l.b16 %v2416
      %v2545 = vunpack.c.l.b16 %v2417
      %v2546 = vunpack.c.l.b16 %v2418
      %v2547 = vunpack.c.l.b16 %v2419
      %v2548 = vunpack.c.l.b16 %v2420
      %v2549 = vunpack.c.l.b16 %v2421
      %v2550 = vunpack.c.l.b16 %v2422
      %v2551 = vunpack.c.l.b16 %v2423
      %v2552 = vunpack.c.l.b16 %v2424
      %v2553 = vunpack.c.l.b16 %v2425
      %v2554 = vunpack.c.l.b16 %v2426
      %v2555 = vunpack.c.l.b16 %v2427
      %v2556 = vunpack.c.l.b16 %v2428
      %v2557 = vunpack.c.l.b16 %v2429
      %v2558 = vunpack.c.l.b16 %v2430
      %v2559 = vunpack.c.l.b16 %v2431
      %v2560 = vunpack.c.l.b16 %v2432
      %v2561 = vunpack.c.l.b16 %v2433
      %v2562 = vunpack.c.l.b16 %v2434
      %v2563 = vunpack.c.l.b16 %v2435
      %v2564 = vunpack.c.l.b16 %v2436
      %v2565 = vunpack.c.l.b16 %v2437
      %v2566 = vunpack.c.l.b16 %v2438
      %v2567 = vunpack.c.l.b16 %v2439
      %v2568 = vunpack.c.l.b16 %v2440
      %v2569 = vunpack.c.l.b16 %v2441
      %v2570 = vunpack.c.l.b16 %v2442
      %v2571 = vunpack.c.l.b16 %v2443
      %v2572 = vunpack.c.l.b16 %v2444
      %v2573 = vunpack.c.l.b16 %v2445
      %v2574 = vunpack.c.l.b16 %v2446
      %v2575 = vunpack.c.l.b16 %v2447
      %v2576 = vunpack.c.l.b16 %v2448
      %v2577 = vunpack.c.l.b16 %v2449
      %v2578 = vunpack.c.l.b16 %v2450
      %v2579 = vunpack.c.l.b16 %v2451
      %v2580 = vunpack.c.l.b16 %v2452
      %v2581 = vunpack.c.l.b16 %v2453
      %v2582 = vunpack.c.l.b16 %v2454
      %v2583 = vunpack.c.l.b16 %v2455
      %v2584 = vunpack.c.l.b16 %v2456
      %v2585 = vunpack.c.l.b16 %v2457
      %v2586 = vunpack.c.l.b16 %v2458
      %v2587 = vpack.c.b16 %v2524, %v2523
      %v2588 = vpack.c.b16 %v2526, %v2525
      %v2589 = vpack.c.b16 %v2528, %v2527
      %v2590 = vpack.c.b16 %v2530, %v2529
      %v2591 = vpack.c.b16 %v2532, %v2531
      %v2592 = vpack.c.b16 %v2534, %v2533
      %v2593 = vpack.c.b16 %v2536, %v2535
      %v2594 = vpack.c.b16 %v2538, %v2537
      %v2595 = vpack.c.b16 %v2540, %v2539
      %v2596 = vpack.c.b16 %v2542, %v2541
      %v2597 = vpack.c.b16 %v2544, %v2543
      %v2598 = vpack.c.b16 %v2546, %v2545
      %v2599 = vpack.c.b16 %v2548, %v2547
      %v2600 = vpack.c.b16 %v2550, %v2549
      %v2601 = vpack.c.b16 %v2552, %v2551
      %v2602 = vpack.c.b16 %v2554, %v2553
      %v2603 = vpack.c.b16 %v2556, %v2555
      %v2604 = vpack.c.b16 %v2558, %v2557
      %v2605 = vpack.c.b16 %v2560, %v2559
      %v2606 = vpack.c.b16 %v2562, %v2561
      %v2607 = vpack.c.b16 %v2564, %v2563
      %v2608 = vpack.c.b16 %v2566, %v2565
      %v2609 = vpack.c.b16 %v2568, %v2567
      %v2610 = vpack.c.b16 %v2570, %v2569
      %v2611 = vpack.c.b16 %v2572, %v2571
      %v2612 = vpack.c.b16 %v2574, %v2573
      %v2613 = vpack.c.b16 %v2576, %v2575
      %v2614 = vpack.c.b16 %v2578, %v2577
      %v2615 = vpack.c.b16 %v2580, %v2579
      %v2616 = vpack.c.b16 %v2582, %v2581
      %v2617 = vpack.c.b16 %v2584, %v2583
      %v2618 = vpack.c.b16 %v2586, %v2585
      %2651 = vmatprep.subr.bf16.mxu0 0
      %2652 = vmatpush1.bf16.msra.mxu0 %v2594
      %2653 = vmatprep.subr.bf16.mxu0 0
      %2654 = vmatpush1.bf16.msra.mxu0 %v2593
      %2655 = vmatprep.subr.bf16.mxu0 0
      %2656 = vmatpush1.bf16.msra.mxu0 %v2592
      %2657 = vmatprep.subr.bf16.mxu0 0
      %2658 = vmatpush1.bf16.msra.mxu0 %v2591
      %2659 = vmatprep.subr.bf16.mxu0 0
      %2660 = vmatpush1.bf16.msra.mxu0 %v2590
      %2661 = vmatprep.subr.bf16.mxu0 0
      %2662 = vmatpush1.bf16.msra.mxu0 %v2589
      %2663 = vmatprep.subr.bf16.mxu0 0
      %2664 = vmatpush1.bf16.msra.mxu0 %v2588
      %2665 = vmatprep.subr.bf16.mxu0 0
      %2666 = vmatpush1.bf16.msra.mxu0 %v2587
      %2667 = vmatprep.subr.bf16.mxu0 0
      %2668 = vmatpush2.bf16.msra.mxu0 %v2602
      %2669 = vmatprep.subr.bf16.mxu0 0
      %2670 = vmatpush2.bf16.msra.mxu0 %v2601
      %2671 = vmatprep.subr.bf16.mxu0 0
      %2672 = vmatpush2.bf16.msra.mxu0 %v2600
      %2673 = vmatprep.subr.bf16.mxu0 0
      %2674 = vmatpush2.bf16.msra.mxu0 %v2599
      %2675 = vmatprep.subr.bf16.mxu0 0
      %2676 = vmatpush2.bf16.msra.mxu0 %v2598
      %2677 = vmatprep.subr.bf16.mxu0 0
      %2678 = vmatpush2.bf16.msra.mxu0 %v2597
      %2679 = vmatprep.subr.bf16.mxu0 0
      %2680 = vmatpush2.bf16.msra.mxu0 %v2596
      %2681 = vmatprep.subr.bf16.mxu0 0
      %2682 = vmatpush2.bf16.msra.mxu0 %v2595
      %2683 = vmatprep.mubr.bf16.mxu0 %v2388
      %2684 = vmatmul.mubr.bf16.gmra.mxu0 %v2387
      %v2685 = vpop.f32.mrf.mxu0
      %v2686 = vadd.f32 0.0, %v2685
      %v2687 = vpop.f32.mrf.mxu0
      %v2688 = vpop.f32.mrf.mxu0
      %v2689 = vadd.f32 0.0, %v2688
      %v2690 = vpop.f32.mrf.mxu0
      %2691 = vmatprep.mubr.bf16.mxu0 %v2392
      %2692 = vmatmul.mubr.bf16.gmra.mxu0 %v2391
      %v2693 = vpop.f32.mrf.mxu0
      %v2694 = vadd.f32 0.0, %v2693
      %v2695 = vpop.f32.mrf.mxu0
      %v2696 = vpop.f32.mrf.mxu0
      %v2697 = vadd.f32 0.0, %v2696
      %v2698 = vpop.f32.mrf.mxu0
      %2699 = vdwg.mxu0
      %2700 = vmatprep.subr.bf16.mxu0 0
      %2701 = vmatpush1.bf16.msra.mxu0 %v2610
      %2702 = vmatprep.subr.bf16.mxu0 0
      %2703 = vmatpush1.bf16.msra.mxu0 %v2609
      %2704 = vmatprep.subr.bf16.mxu0 0
      %2705 = vmatpush1.bf16.msra.mxu0 %v2608
      %2706 = vmatprep.subr.bf16.mxu0 0
      %2707 = vmatpush1.bf16.msra.mxu0 %v2607
      %2708 = vmatprep.subr.bf16.mxu0 0
      %2709 = vmatpush1.bf16.msra.mxu0 %v2606
      %2710 = vmatprep.subr.bf16.mxu0 0
      %2711 = vmatpush1.bf16.msra.mxu0 %v2605
      %2712 = vmatprep.subr.bf16.mxu0 0
      %2713 = vmatpush1.bf16.msra.mxu0 %v2604
      %2714 = vmatprep.subr.bf16.mxu0 0
      %2715 = vmatpush1.bf16.msra.mxu0 %v2603
      %2716 = vmatprep.subr.bf16.mxu0 0
      %2717 = vmatpush2.bf16.msra.mxu0 %v2618
      %2718 = vmatprep.subr.bf16.mxu0 0
      %2719 = vmatpush2.bf16.msra.mxu0 %v2617
      %2720 = vmatprep.subr.bf16.mxu0 0
      %2721 = vmatpush2.bf16.msra.mxu0 %v2616
      %2722 = vmatprep.subr.bf16.mxu0 0
      %2723 = vmatpush2.bf16.msra.mxu0 %v2615
      %2724 = vmatprep.subr.bf16.mxu0 0
      %2725 = vmatpush2.bf16.msra.mxu0 %v2614
      %2726 = vmatprep.subr.bf16.mxu0 0
      %2727 = vmatpush2.bf16.msra.mxu0 %v2613
      %2728 = vmatprep.subr.bf16.mxu0 0
      %2729 = vmatpush2.bf16.msra.mxu0 %v2612
      %2730 = vmatprep.subr.bf16.mxu0 0
      %2731 = vmatpush2.bf16.msra.mxu0 %v2611
      %2732 = vmatprep.mubr.bf16.mxu0 %v2390
      %2733 = vmatmul.mubr.bf16.gmra.mxu0 %v2389
      %v2734 = vpop.f32.mrf.mxu0
      %v2735 = vadd.f32 %v2686, %v2734
      %v2736 = vpop.f32.mrf.mxu0
      %v2737 = vpop.f32.mrf.mxu0
      %v2738 = vadd.f32 %v2689, %v2737
      %v2739 = vpop.f32.mrf.mxu0
      %2740 = vmatprep.mubr.bf16.mxu0 %v2394
      %2741 = vmatmul.mubr.bf16.gmra.mxu0 %v2393
      %v2742 = vpop.f32.mrf.mxu0
      %v2743 = vadd.f32 %v2694, %v2742
      %v2744 = vpop.f32.mrf.mxu0
      %v2745 = vpop.f32.mrf.mxu0
      %v2746 = vadd.f32 %v2697, %v2745
      %v2747 = vpop.f32.mrf.mxu0
      %2748 = vdwg.mxu0
      %v2749 = vadd.f32 %v1851, %v2735
      %v2750 = vadd.f32 %v1852, %v2738
      %v2751 = vadd.f32 %v1853, %v2743
      %v2752 = vadd.f32 %v1854, %v2746
      %v2753 = vld [vmem:[%s12] sm:$0x1]
      %v2755 = vlaneseq
      %v2756 = vshrl.u32 %v2755, 7
      %v2757 = vsub.s32 0, %v2756
      %v2758 = vrot.slane %v2753, %v2757
      %v2760 = vadd.f32 %v2749, %v2758
      %v2761 = vadd.f32 %v2750, %v2758
      %v2762 = vadd.f32 %v2751, %v2758
      %v2763 = vadd.f32 %v2752, %v2758
      %2764 = vst [vmem:[%s440] sm:$0xff] %v2760
      %2765 = vst [vmem:[%s440 + $0x8] sm:$0xff] %v2761
      %2766 = vst [vmem:[%s440 + $0x10] sm:$0xff] %v2762
      %2767 = vst [vmem:[%s440 + $0x18] sm:$0xff] %v2763
      %p2768 = scmp.lt.s32.totalorder %s24, 1
      %s2769 = scalar_select %p2768, %s24, 1
      %s2770 = smul.addr %s2769, 4
      %s2771 = smul.addr %s2770, 8
      %s2772 = scalar_lea.vmem %s13, %s2771
      // Predicated region
      $region73: #{_lambda_.3} parent=71 // pred_check
        %p2773 = pneg %p320
      $region74: #{_lambda_.3} parent=71 // pred_check_branch
        %2775 = sbr.rel (%p2773) target = $region76
      $region75: #{_lambda_.3} parent=71 // pred_region
        _
      $region76: #{_lambda_.3} parent=71 // pred_fallthru
        _
    $region72: #{_lambda_.3} parent=5 // pred_fallthru
      _
    %p2776 = scmp.le.s32.totalorder 2, %s19
    // Predicated region
    $region77: #{_lambda_.3} parent=5 // pred_check
      %p2777 = pneg %p2776
    $region78: #{_lambda_.3} parent=5 // pred_check_branch
      %2779 = sbr.rel (%p2777) target = $region80
    $region79: #{_lambda_.3} parent=5 // pred_region
      %s2780 = ssub.s32 %s19, 2
      // Predicated region
      $region81: #{_lambda_.3} parent=79 // pred_check
        %p2781 = pneg %p326
      $region82: #{_lambda_.3} parent=79 // pred_check_branch
        %2783 = sbr.rel (%p2781) target = $region84
      $region83: #{_lambda_.3} parent=79 // pred_region
        %p2784 = scmp.lt.s32.totalorder %s25, 1
        %s2785 = scalar_select %p2784, %s25, 1
        %s2786 = smul.addr %s2785, 4
        %s2787 = smul.addr %s2786, 8
        %s2788 = scalar_lea.vmem %s13, %s2787
      $region84: #{_lambda_.3} parent=79 // pred_fallthru
        _
    $region80: #{_lambda_.3} parent=5 // pred_fallthru
      _
  $region6: #{_lambda_.3} parent=0 // loop_footer
    %s23 = sadd.s32 1, %s19
  $region7: #{_lambda_.3} parent=0 // loop_footer_branch
    %18 = sbr.rel target = $region3
  $region8: #{_lambda_.3} parent=0 // loop_exit
    _

</llo_original>
